<compile_context>
chip_gen: v7x
topology: tpu7x:2x2x1
jax: 0.10.0
libtpu: 0.0.40
codegen_flags: <defaults>
</compile_context>

<pallas_src>
import functools

import jax
import jax.numpy as jnp
import numpy as np
from jax import lax
from jax.experimental import pallas as pl
from jax.experimental.pallas import tpu as pltpu


# ----------------------------------------------------------------------------
# Fused kernel: multi-layer GRU (packed-sequence semantics) + Linear(H, 1)
# ----------------------------------------------------------------------------
def _discriminator_kernel(x_ref, len_ref, wih_ref, whh_ref, gbias_ref,
                          bhhn_ref, lw_ref, lb_ref, out_ref, seq_scr,
                          *, padding_value):
    """
    x_ref    : (S*B, H)   time-major flattened input (row = s*B + b)
    len_ref  : (B, 1)     int32 valid lengths
    wih_ref  : (L, H, 3H) pre-transposed weight_ih, gate order (r, z, n)
    whh_ref  : (L, H, 3H) pre-transposed weight_hh
    gbias_ref: (L, 1, 3H) [b_ih_r + b_hh_r, b_ih_z + b_hh_z, b_ih_n]
    bhhn_ref : (L, 1, H)  b_hh_n (must stay inside r * (...))
    lw_ref   : (H, 1)     linear weight (transposed)
    lb_ref   : (1, 1)     linear bias
    out_ref  : (S*B, 1)   logits, time-major flat
    seq_scr  : (S*B, H)   f32 VMEM inter-layer sequence buffer
    """
    SB, H = x_ref.shape
    B = len_ref.shape[0]
    S = SB // B
    L = wih_ref.shape[0]

    lens = len_ref[...]                                    # (B, 1) int32

    for l in range(L):
        src = x_ref[...] if l == 0 else seq_scr[...]       # (S*B, H)

        # Hoisted input projection: one MXU matmul per layer (no serial dep),
        # with the r/z biases already folded into gbias.
        gx_all = jnp.dot(src, wih_ref[l],
                         preferred_element_type=jnp.float32) + gbias_ref[l]

        whh = whh_ref[l]                                   # (H, 3H), hoisted
        bhn = jnp.broadcast_to(bhhn_ref[l], (B, H))        # hoisted broadcast

        # Fully-unrolled recurrence: only h @ W_hh is on the serial path.
        h = jnp.zeros((B, H), jnp.float32)
        for s in range(S):
            gx = gx_all[s * B:(s + 1) * B, :]              # static, aligned
            gh = jnp.dot(h, whh, preferred_element_type=jnp.float32)

            r = jax.nn.sigmoid(gx[:, 0 * H:1 * H] + gh[:, 0 * H:1 * H])
            z = jax.nn.sigmoid(gx[:, 1 * H:2 * H] + gh[:, 1 * H:2 * H])
            n = jnp.tanh(gx[:, 2 * H:3 * H] + r * (gh[:, 2 * H:3 * H] + bhn))
            h_new = (1.0 - z) * n + z * h

            valid = lens > s                               # (B, 1) bool
            h = jnp.where(valid, h_new, h)                 # packed: no update
            y_s = jnp.where(valid, h, padding_value)       # pad_packed fill
            seq_scr[pl.ds(s * B, B), :] = y_s              # 8-sublane aligned

    # Final Linear in time-major layout (row-independent); transpose of the
    # tiny logits happens outside the kernel.
    out_ref[...] = jnp.dot(seq_scr[...], lw_ref[...],
                           preferred_element_type=jnp.float32) + lb_ref[...]


# ----------------------------------------------------------------------------
# Wrapper
# ----------------------------------------------------------------------------
def discriminator_forward(x, t, params, *, padding_value, max_seq):
    """Pallas version of Discriminator.forward(H, t) -> logits (B, S, 1)."""
    B, S, H = x.shape
    assert S == max_seq
    assert H == params["linear_w_t"].shape[0]

    # Tiny one-time weight prep: stack layers, pre-fold r/z biases.
    wih_all = jnp.stack([lyr["wih_t"] for lyr in params["gru"]])       # (L,H,3H)
    whh_all = jnp.stack([lyr["whh_t"] for lyr in params["gru"]])       # (L,H,3H)
    gbias_all = jnp.stack([
        jnp.concatenate([lyr["bih"][:, :2 * H] + lyr["bhh"][:, :2 * H],
                         lyr["bih"][:, 2 * H:]], axis=-1)
        for lyr in params["gru"]])                                     # (L,1,3H)
    bhhn_all = jnp.stack([lyr["bhh"][:, 2 * H:]
                          for lyr in params["gru"]])                   # (L,1,H)

    x_tm = jnp.transpose(x.astype(jnp.float32), (1, 0, 2)).reshape(S * B, H)
    lens = t.astype(jnp.int32).reshape(B, 1)

    vmem = pl.BlockSpec(memory_space=pltpu.MemorySpace.VMEM)
    kern = functools.partial(_discriminator_kernel,
                             padding_value=padding_value)

    out_flat = pl.pallas_call(
        kern,
        out_shape=jax.ShapeDtypeStruct((S * B, 1), jnp.float32),
        in_specs=[vmem] * 8,
        out_specs=vmem,
        scratch_shapes=[pltpu.VMEM((S * B, H), jnp.float32)],
        compiler_params=pltpu.CompilerParams(
            vmem_limit_bytes=32 * 1024 * 1024),
    )(x_tm, lens, wih_all, whh_all, gbias_all, bhhn_all,
      params["linear_w_t"], params["linear_b"])

    # (S*B, 1) time-major -> (B, S, 1) batch-first (64 floats; trivial).
    return out_flat.reshape(S, B).transpose(1, 0)[:, :, None]


# ----------------------------------------------------------------------------
# Parameter init (matches shapes / init scheme of Discriminator.reset())
# ----------------------------------------------------------------------------
def _xavier_uniform(key, shape):
    fan_out, fan_in = shape
    bound = float(np.sqrt(6.0 / (fan_in + fan_out)))
    return jax.random.uniform(key, shape, jnp.float32, -bound, bound)


def init_params(key, hidden_dim, num_layers):
    gru_layers = []
    for _ in range(num_layers):
        key, k1, k2 = jax.random.split(key, 3)
        w_ih = _xavier_uniform(k1, (3 * hidden_dim, hidden_dim))   # xavier
        w_hh = _xavier_uniform(k2, (3 * hidden_dim, hidden_dim))   # xavier
        gru_layers.append({
            "wih_t": w_ih.T,                                       # (H, 3H)
            "whh_t": w_hh.T,                                       # (H, 3H)
            "bih": jnp.ones((1, 3 * hidden_dim), jnp.float32),     # fill_(1)
            "bhh": jnp.zeros((1, 3 * hidden_dim), jnp.float32),    # fill_(0)
        })
    key, kl = jax.random.split(key)
    w_lin = _xavier_uniform(kl, (1, hidden_dim))                   # Linear(H,1)
    return {
        "gru": gru_layers,
        "linear_w_t": w_lin.T,                                     # (H, 1)
        "linear_b": jnp.zeros((1, 1), jnp.float32),                # fill_(0)
    }


# ----------------------------------------------------------------------------
# Pure-JAX reference (packed GRU semantics) for correctness checking
# ----------------------------------------------------------------------------
def reference_forward(x, t, params, *, padding_value, max_seq):
    B, S, H = x.shape
    lens = t.astype(jnp.int32)

    h_seq = x.astype(jnp.float32)
    for layer in params["gru"]:
        wih_t, whh_t = layer["wih_t"], layer["whh_t"]
        bih, bhh = layer["bih"], layer["bhh"]

        def step(h, inputs):
            x_s, s = inputs
            gx = x_s @ wih_t + bih
            gh = h @ whh_t + bhh
            r = jax.nn.sigmoid(gx[:, :H] + gh[:, :H])
            z = jax.nn.sigmoid(gx[:, H:2 * H] + gh[:, H:2 * H])
            n = jnp.tanh(gx[:, 2 * H:] + r * gh[:, 2 * H:])
            h_new = (1.0 - z) * n + z * h
            valid = (lens > s)[:, None]
            h_upd = jnp.where(valid, h_new, h)
            y = jnp.where(valid, h_upd, padding_value)
            return h_upd, y

        _, ys = lax.scan(step, jnp.zeros((B, H), jnp.float32),
                         (jnp.transpose(h_seq, (1, 0, 2)), jnp.arange(S)))
        h_seq = jnp.transpose(ys, (1, 0, 2))

    logits = h_seq @ params["linear_w_t"] + params["linear_b"]     # (B, S, 1)
    return logits


# ----------------------------------------------------------------------------
if __name__ == "__main__":
    HIDDEN_DIM = 32
    NUM_LAYERS = 2
    PADDING_VALUE = 0.0
    MAX_SEQ = 8
    BATCH = 8

    key = jax.random.PRNGKey(0)
    key, kx, kp = jax.random.split(key, 3)

    x = jax.random.normal(kx, (BATCH, MAX_SEQ, HIDDEN_DIM), jnp.float32)
    t = jnp.array([8, 5, 3, 8, 1, 6, 7, 2], dtype=jnp.int32)   # valid lengths
    params = init_params(kp, HIDDEN_DIM, NUM_LAYERS)

    out = discriminator_forward(x, t, params,
                                padding_value=PADDING_VALUE, max_seq=MAX_SEQ)
    out = jax.block_until_ready(out)

    ref = reference_forward(x, t, params,
                            padding_value=PADDING_VALUE, max_seq=MAX_SEQ)
    np.testing.assert_allclose(np.asarray(out), np.asarray(ref),
                               rtol=1e-5, atol=1e-5)
    assert out.shape == (BATCH, MAX_SEQ, 1)

    print("KERNEL_OK")
</pallas_src>

<mosaic_0001>
module attributes {stable_mosaic.version = 11 : i64} {
  func.func @_discriminator_kernel(%arg0: memref<64x32xf32, #tpu.memory_space<vmem>>, %arg1: memref<8x1xi32, #tpu.memory_space<vmem>>, %arg2: memref<2x32x96xf32, #tpu.memory_space<vmem>>, %arg3: memref<2x32x96xf32, #tpu.memory_space<vmem>>, %arg4: memref<2x1x96xf32, #tpu.memory_space<vmem>>, %arg5: memref<2x1x32xf32, #tpu.memory_space<vmem>>, %arg6: memref<32x1xf32, #tpu.memory_space<vmem>>, %arg7: memref<1x1xf32, #tpu.memory_space<vmem>>, %arg8: memref<64x1xf32, #tpu.memory_space<vmem>>, %arg9: memref<64x32xf32, #tpu.memory_space<vmem>>) attributes {dimension_semantics = [], scalar_prefetch = 0 : i64, scratch_operands = 1 : i64, tpu.core_type = #tpu.core_type<tc>} {
    %c0 = arith.constant 0 : index
    %c0_0 = arith.constant 0 : index
    %0 = vector.load %arg1[%c0, %c0_0] : memref<8x1xi32, #tpu.memory_space<vmem>>, vector<8x1xi32>
    %c0_1 = arith.constant 0 : index
    %c0_2 = arith.constant 0 : index
    %1 = vector.load %arg0[%c0_1, %c0_2] : memref<64x32xf32, #tpu.memory_space<vmem>>, vector<64x32xf32>
    %c0_3 = arith.constant 0 : index
    %c0_4 = arith.constant 0 : index
    %c0_5 = arith.constant 0 : index
    %2 = vector.load %arg2[%c0_3, %c0_4, %c0_5] : memref<2x32x96xf32, #tpu.memory_space<vmem>>, vector<1x32x96xf32>
    %3 = vector.shape_cast %2 : vector<1x32x96xf32> to vector<32x96xf32>
    %cst = arith.constant dense<0.000000e+00> : vector<64x96xf32>
    %4 = tpu.matmul %1, %3, %cst {dimension_numbers = #tpu.dot_dimension_numbers<[1], [0], [0], [1], [0, 0, 1, 1], [], []>} : vector<64x32xf32>, vector<32x96xf32>, vector<64x96xf32> -> vector<64x96xf32>
    %c0_6 = arith.constant 0 : index
    %c0_7 = arith.constant 0 : index
    %c0_8 = arith.constant 0 : index
    %5 = vector.load %arg4[%c0_6, %c0_7, %c0_8] : memref<2x1x96xf32, #tpu.memory_space<vmem>>, vector<1x1x96xf32>
    %6 = vector.shape_cast %5 : vector<1x1x96xf32> to vector<1x96xf32>
    %7 = vector.broadcast %6 : vector<1x96xf32> to vector<64x96xf32>
    %8 = arith.addf %4, %7 : vector<64x96xf32>
    %c0_9 = arith.constant 0 : index
    %c0_10 = arith.constant 0 : index
    %c0_11 = arith.constant 0 : index
    %9 = vector.load %arg3[%c0_9, %c0_10, %c0_11] : memref<2x32x96xf32, #tpu.memory_space<vmem>>, vector<1x32x96xf32>
    %10 = vector.shape_cast %9 : vector<1x32x96xf32> to vector<32x96xf32>
    %c0_12 = arith.constant 0 : index
    %c0_13 = arith.constant 0 : index
    %c0_14 = arith.constant 0 : index
    %11 = vector.load %arg5[%c0_12, %c0_13, %c0_14] : memref<2x1x32xf32, #tpu.memory_space<vmem>>, vector<1x1x32xf32>
    %12 = vector.shape_cast %11 : vector<1x1x32xf32> to vector<1x32xf32>
    %13 = vector.shape_cast %12 : vector<1x32xf32> to vector<1x32xf32>
    %14 = vector.broadcast %13 : vector<1x32xf32> to vector<8x32xf32>
    %cst_15 = arith.constant 0.000000e+00 : f32
    %15 = vector.broadcast %cst_15 : f32 to vector<8x32xf32>
    %16 = vector.extract_strided_slice %8 {offsets = [0, 0], sizes = [8, 96], strides = [1, 1]} : vector<64x96xf32> to vector<8x96xf32>
    %cst_16 = arith.constant dense<0.000000e+00> : vector<8x96xf32>
    %17 = tpu.matmul %15, %10, %cst_16 {dimension_numbers = #tpu.dot_dimension_numbers<[1], [0], [0], [1], [0, 0, 1, 1], [], []>} : vector<8x32xf32>, vector<32x96xf32>, vector<8x96xf32> -> vector<8x96xf32>
    %18 = vector.extract_strided_slice %16 {offsets = [0, 0], sizes = [8, 32], strides = [1, 1]} : vector<8x96xf32> to vector<8x32xf32>
    %19 = vector.extract_strided_slice %17 {offsets = [0, 0], sizes = [8, 32], strides = [1, 1]} : vector<8x96xf32> to vector<8x32xf32>
    %20 = arith.addf %18, %19 : vector<8x32xf32>
    %21 = arith.negf %20 : vector<8x32xf32>
    %22 = math.exp %21 : vector<8x32xf32>
    %cst_17 = arith.constant 1.000000e+00 : f32
    %23 = vector.broadcast %cst_17 : f32 to vector<8x32xf32>
    %24 = arith.addf %23, %22 : vector<8x32xf32>
    %25 = arith.divf %23, %24 : vector<8x32xf32>
    %26 = vector.extract_strided_slice %16 {offsets = [0, 32], sizes = [8, 32], strides = [1, 1]} : vector<8x96xf32> to vector<8x32xf32>
    %27 = vector.extract_strided_slice %17 {offsets = [0, 32], sizes = [8, 32], strides = [1, 1]} : vector<8x96xf32> to vector<8x32xf32>
    %28 = arith.addf %26, %27 : vector<8x32xf32>
    %29 = arith.negf %28 : vector<8x32xf32>
    %30 = math.exp %29 : vector<8x32xf32>
    %cst_18 = arith.constant 1.000000e+00 : f32
    %31 = vector.broadcast %cst_18 : f32 to vector<8x32xf32>
    %32 = arith.addf %31, %30 : vector<8x32xf32>
    %33 = arith.divf %31, %32 : vector<8x32xf32>
    %34 = vector.extract_strided_slice %16 {offsets = [0, 64], sizes = [8, 32], strides = [1, 1]} : vector<8x96xf32> to vector<8x32xf32>
    %35 = vector.extract_strided_slice %17 {offsets = [0, 64], sizes = [8, 32], strides = [1, 1]} : vector<8x96xf32> to vector<8x32xf32>
    %36 = arith.addf %35, %14 : vector<8x32xf32>
    %37 = arith.mulf %25, %36 : vector<8x32xf32>
    %38 = arith.addf %34, %37 : vector<8x32xf32>
    %39 = math.tanh %38 : vector<8x32xf32>
    %cst_19 = arith.constant 1.000000e+00 : f32
    %40 = vector.broadcast %cst_19 : f32 to vector<8x32xf32>
    %41 = arith.subf %40, %33 : vector<8x32xf32>
    %42 = arith.mulf %41, %39 : vector<8x32xf32>
    %43 = arith.mulf %33, %15 : vector<8x32xf32>
    %44 = arith.addf %42, %43 : vector<8x32xf32>
    %c0_i32 = arith.constant 0 : i32
    %45 = vector.broadcast %c0_i32 : i32 to vector<8x1xi32>
    %46 = arith.cmpi sgt, %0, %45 : vector<8x1xi32>
    %47 = vector.shape_cast %46 : vector<8x1xi1> to vector<8x1xi1>
    %48 = vector.broadcast %47 : vector<8x1xi1> to vector<8x32xi1>
    %49 = arith.select %48, %44, %15 : vector<8x32xi1>, vector<8x32xf32>
    %cst_20 = arith.constant 0.000000e+00 : f32
    %50 = vector.shape_cast %46 : vector<8x1xi1> to vector<8x1xi1>
    %51 = vector.broadcast %50 : vector<8x1xi1> to vector<8x32xi1>
    %52 = vector.broadcast %cst_20 : f32 to vector<8x32xf32>
    %53 = arith.select %51, %49, %52 : vector<8x32xi1>, vector<8x32xf32>
    %c0_21 = arith.constant 0 : index
    %c0_22 = arith.constant 0 : index
    %54 = vector.load %arg9[%c0_21, %c0_22] : memref<64x32xf32, #tpu.memory_space<vmem>>, vector<8x32xf32>
    tpu.vector_store %arg9[%c0_21, %c0_22], %53 {strides = array<i32>} : memref<64x32xf32, #tpu.memory_space<vmem>>, vector<8x32xf32>,
    %55 = vector.extract_strided_slice %8 {offsets = [8, 0], sizes = [8, 96], strides = [1, 1]} : vector<64x96xf32> to vector<8x96xf32>
    %cst_23 = arith.constant dense<0.000000e+00> : vector<8x96xf32>
    %56 = tpu.matmul %49, %10, %cst_23 {dimension_numbers = #tpu.dot_dimension_numbers<[1], [0], [0], [1], [0, 0, 1, 1], [], []>} : vector<8x32xf32>, vector<32x96xf32>, vector<8x96xf32> -> vector<8x96xf32>
    %57 = vector.extract_strided_slice %55 {offsets = [0, 0], sizes = [8, 32], strides = [1, 1]} : vector<8x96xf32> to vector<8x32xf32>
    %58 = vector.extract_strided_slice %56 {offsets = [0, 0], sizes = [8, 32], strides = [1, 1]} : vector<8x96xf32> to vector<8x32xf32>
    %59 = arith.addf %57, %58 : vector<8x32xf32>
    %60 = arith.negf %59 : vector<8x32xf32>
    %61 = math.exp %60 : vector<8x32xf32>
    %cst_24 = arith.constant 1.000000e+00 : f32
    %62 = vector.broadcast %cst_24 : f32 to vector<8x32xf32>
    %63 = arith.addf %62, %61 : vector<8x32xf32>
    %64 = arith.divf %62, %63 : vector<8x32xf32>
    %65 = vector.extract_strided_slice %55 {offsets = [0, 32], sizes = [8, 32], strides = [1, 1]} : vector<8x96xf32> to vector<8x32xf32>
    %66 = vector.extract_strided_slice %56 {offsets = [0, 32], sizes = [8, 32], strides = [1, 1]} : vector<8x96xf32> to vector<8x32xf32>
    %67 = arith.addf %65, %66 : vector<8x32xf32>
    %68 = arith.negf %67 : vector<8x32xf32>
    %69 = math.exp %68 : vector<8x32xf32>
    %cst_25 = arith.constant 1.000000e+00 : f32
    %70 = vector.broadcast %cst_25 : f32 to vector<8x32xf32>
    %71 = arith.addf %70, %69 : vector<8x32xf32>
    %72 = arith.divf %70, %71 : vector<8x32xf32>
    %73 = vector.extract_strided_slice %55 {offsets = [0, 64], sizes = [8, 32], strides = [1, 1]} : vector<8x96xf32> to vector<8x32xf32>
    %74 = vector.extract_strided_slice %56 {offsets = [0, 64], sizes = [8, 32], strides = [1, 1]} : vector<8x96xf32> to vector<8x32xf32>
    %75 = arith.addf %74, %14 : vector<8x32xf32>
    %76 = arith.mulf %64, %75 : vector<8x32xf32>
    %77 = arith.addf %73, %76 : vector<8x32xf32>
    %78 = math.tanh %77 : vector<8x32xf32>
    %cst_26 = arith.constant 1.000000e+00 : f32
    %79 = vector.broadcast %cst_26 : f32 to vector<8x32xf32>
    %80 = arith.subf %79, %72 : vector<8x32xf32>
    %81 = arith.mulf %80, %78 : vector<8x32xf32>
    %82 = arith.mulf %72, %49 : vector<8x32xf32>
    %83 = arith.addf %81, %82 : vector<8x32xf32>
    %c1_i32 = arith.constant 1 : i32
    %84 = vector.broadcast %c1_i32 : i32 to vector<8x1xi32>
    %85 = arith.cmpi sgt, %0, %84 : vector<8x1xi32>
    %86 = vector.shape_cast %85 : vector<8x1xi1> to vector<8x1xi1>
    %87 = vector.broadcast %86 : vector<8x1xi1> to vector<8x32xi1>
    %88 = arith.select %87, %83, %49 : vector<8x32xi1>, vector<8x32xf32>
    %cst_27 = arith.constant 0.000000e+00 : f32
    %89 = vector.shape_cast %85 : vector<8x1xi1> to vector<8x1xi1>
    %90 = vector.broadcast %89 : vector<8x1xi1> to vector<8x32xi1>
    %91 = vector.broadcast %cst_27 : f32 to vector<8x32xf32>
    %92 = arith.select %90, %88, %91 : vector<8x32xi1>, vector<8x32xf32>
    %c8 = arith.constant 8 : index
    %c0_28 = arith.constant 0 : index
    %93 = vector.load %arg9[%c8, %c0_28] : memref<64x32xf32, #tpu.memory_space<vmem>>, vector<8x32xf32>
    tpu.vector_store %arg9[%c8, %c0_28], %92 {strides = array<i32>} : memref<64x32xf32, #tpu.memory_space<vmem>>, vector<8x32xf32>,
    %94 = vector.extract_strided_slice %8 {offsets = [16, 0], sizes = [8, 96], strides = [1, 1]} : vector<64x96xf32> to vector<8x96xf32>
    %cst_29 = arith.constant dense<0.000000e+00> : vector<8x96xf32>
    %95 = tpu.matmul %88, %10, %cst_29 {dimension_numbers = #tpu.dot_dimension_numbers<[1], [0], [0], [1], [0, 0, 1, 1], [], []>} : vector<8x32xf32>, vector<32x96xf32>, vector<8x96xf32> -> vector<8x96xf32>
    %96 = vector.extract_strided_slice %94 {offsets = [0, 0], sizes = [8, 32], strides = [1, 1]} : vector<8x96xf32> to vector<8x32xf32>
    %97 = vector.extract_strided_slice %95 {offsets = [0, 0], sizes = [8, 32], strides = [1, 1]} : vector<8x96xf32> to vector<8x32xf32>
    %98 = arith.addf %96, %97 : vector<8x32xf32>
    %99 = arith.negf %98 : vector<8x32xf32>
    %100 = math.exp %99 : vector<8x32xf32>
    %cst_30 = arith.constant 1.000000e+00 : f32
    %101 = vector.broadcast %cst_30 : f32 to vector<8x32xf32>
    %102 = arith.addf %101, %100 : vector<8x32xf32>
    %103 = arith.divf %101, %102 : vector<8x32xf32>
    %104 = vector.extract_strided_slice %94 {offsets = [0, 32], sizes = [8, 32], strides = [1, 1]} : vector<8x96xf32> to vector<8x32xf32>
    %105 = vector.extract_strided_slice %95 {offsets = [0, 32], sizes = [8, 32], strides = [1, 1]} : vector<8x96xf32> to vector<8x32xf32>
    %106 = arith.addf %104, %105 : vector<8x32xf32>
    %107 = arith.negf %106 : vector<8x32xf32>
    %108 = math.exp %107 : vector<8x32xf32>
    %cst_31 = arith.constant 1.000000e+00 : f32
    %109 = vector.broadcast %cst_31 : f32 to vector<8x32xf32>
    %110 = arith.addf %109, %108 : vector<8x32xf32>
    %111 = arith.divf %109, %110 : vector<8x32xf32>
    %112 = vector.extract_strided_slice %94 {offsets = [0, 64], sizes = [8, 32], strides = [1, 1]} : vector<8x96xf32> to vector<8x32xf32>
    %113 = vector.extract_strided_slice %95 {offsets = [0, 64], sizes = [8, 32], strides = [1, 1]} : vector<8x96xf32> to vector<8x32xf32>
    %114 = arith.addf %113, %14 : vector<8x32xf32>
    %115 = arith.mulf %103, %114 : vector<8x32xf32>
    %116 = arith.addf %112, %115 : vector<8x32xf32>
    %117 = math.tanh %116 : vector<8x32xf32>
    %cst_32 = arith.constant 1.000000e+00 : f32
    %118 = vector.broadcast %cst_32 : f32 to vector<8x32xf32>
    %119 = arith.subf %118, %111 : vector<8x32xf32>
    %120 = arith.mulf %119, %117 : vector<8x32xf32>
    %121 = arith.mulf %111, %88 : vector<8x32xf32>
    %122 = arith.addf %120, %121 : vector<8x32xf32>
    %c2_i32 = arith.constant 2 : i32
    %123 = vector.broadcast %c2_i32 : i32 to vector<8x1xi32>
    %124 = arith.cmpi sgt, %0, %123 : vector<8x1xi32>
    %125 = vector.shape_cast %124 : vector<8x1xi1> to vector<8x1xi1>
    %126 = vector.broadcast %125 : vector<8x1xi1> to vector<8x32xi1>
    %127 = arith.select %126, %122, %88 : vector<8x32xi1>, vector<8x32xf32>
    %cst_33 = arith.constant 0.000000e+00 : f32
    %128 = vector.shape_cast %124 : vector<8x1xi1> to vector<8x1xi1>
    %129 = vector.broadcast %128 : vector<8x1xi1> to vector<8x32xi1>
    %130 = vector.broadcast %cst_33 : f32 to vector<8x32xf32>
    %131 = arith.select %129, %127, %130 : vector<8x32xi1>, vector<8x32xf32>
    %c16 = arith.constant 16 : index
    %c0_34 = arith.constant 0 : index
    %132 = vector.load %arg9[%c16, %c0_34] : memref<64x32xf32, #tpu.memory_space<vmem>>, vector<8x32xf32>
    tpu.vector_store %arg9[%c16, %c0_34], %131 {strides = array<i32>} : memref<64x32xf32, #tpu.memory_space<vmem>>, vector<8x32xf32>,
    %133 = vector.extract_strided_slice %8 {offsets = [24, 0], sizes = [8, 96], strides = [1, 1]} : vector<64x96xf32> to vector<8x96xf32>
    %cst_35 = arith.constant dense<0.000000e+00> : vector<8x96xf32>
    %134 = tpu.matmul %127, %10, %cst_35 {dimension_numbers = #tpu.dot_dimension_numbers<[1], [0], [0], [1], [0, 0, 1, 1], [], []>} : vector<8x32xf32>, vector<32x96xf32>, vector<8x96xf32> -> vector<8x96xf32>
    %135 = vector.extract_strided_slice %133 {offsets = [0, 0], sizes = [8, 32], strides = [1, 1]} : vector<8x96xf32> to vector<8x32xf32>
    %136 = vector.extract_strided_slice %134 {offsets = [0, 0], sizes = [8, 32], strides = [1, 1]} : vector<8x96xf32> to vector<8x32xf32>
    %137 = arith.addf %135, %136 : vector<8x32xf32>
    %138 = arith.negf %137 : vector<8x32xf32>
    %139 = math.exp %138 : vector<8x32xf32>
    %cst_36 = arith.constant 1.000000e+00 : f32
    %140 = vector.broadcast %cst_36 : f32 to vector<8x32xf32>
    %141 = arith.addf %140, %139 : vector<8x32xf32>
    %142 = arith.divf %140, %141 : vector<8x32xf32>
    %143 = vector.extract_strided_slice %133 {offsets = [0, 32], sizes = [8, 32], strides = [1, 1]} : vector<8x96xf32> to vector<8x32xf32>
    %144 = vector.extract_strided_slice %134 {offsets = [0, 32], sizes = [8, 32], strides = [1, 1]} : vector<8x96xf32> to vector<8x32xf32>
    %145 = arith.addf %143, %144 : vector<8x32xf32>
    %146 = arith.negf %145 : vector<8x32xf32>
    %147 = math.exp %146 : vector<8x32xf32>
    %cst_37 = arith.constant 1.000000e+00 : f32
    %148 = vector.broadcast %cst_37 : f32 to vector<8x32xf32>
    %149 = arith.addf %148, %147 : vector<8x32xf32>
    %150 = arith.divf %148, %149 : vector<8x32xf32>
    %151 = vector.extract_strided_slice %133 {offsets = [0, 64], sizes = [8, 32], strides = [1, 1]} : vector<8x96xf32> to vector<8x32xf32>
    %152 = vector.extract_strided_slice %134 {offsets = [0, 64], sizes = [8, 32], strides = [1, 1]} : vector<8x96xf32> to vector<8x32xf32>
    %153 = arith.addf %152, %14 : vector<8x32xf32>
    %154 = arith.mulf %142, %153 : vector<8x32xf32>
    %155 = arith.addf %151, %154 : vector<8x32xf32>
    %156 = math.tanh %155 : vector<8x32xf32>
    %cst_38 = arith.constant 1.000000e+00 : f32
    %157 = vector.broadcast %cst_38 : f32 to vector<8x32xf32>
    %158 = arith.subf %157, %150 : vector<8x32xf32>
    %159 = arith.mulf %158, %156 : vector<8x32xf32>
    %160 = arith.mulf %150, %127 : vector<8x32xf32>
    %161 = arith.addf %159, %160 : vector<8x32xf32>
    %c3_i32 = arith.constant 3 : i32
    %162 = vector.broadcast %c3_i32 : i32 to vector<8x1xi32>
    %163 = arith.cmpi sgt, %0, %162 : vector<8x1xi32>
    %164 = vector.shape_cast %163 : vector<8x1xi1> to vector<8x1xi1>
    %165 = vector.broadcast %164 : vector<8x1xi1> to vector<8x32xi1>
    %166 = arith.select %165, %161, %127 : vector<8x32xi1>, vector<8x32xf32>
    %cst_39 = arith.constant 0.000000e+00 : f32
    %167 = vector.shape_cast %163 : vector<8x1xi1> to vector<8x1xi1>
    %168 = vector.broadcast %167 : vector<8x1xi1> to vector<8x32xi1>
    %169 = vector.broadcast %cst_39 : f32 to vector<8x32xf32>
    %170 = arith.select %168, %166, %169 : vector<8x32xi1>, vector<8x32xf32>
    %c24 = arith.constant 24 : index
    %c0_40 = arith.constant 0 : index
    %171 = vector.load %arg9[%c24, %c0_40] : memref<64x32xf32, #tpu.memory_space<vmem>>, vector<8x32xf32>
    tpu.vector_store %arg9[%c24, %c0_40], %170 {strides = array<i32>} : memref<64x32xf32, #tpu.memory_space<vmem>>, vector<8x32xf32>,
    %172 = vector.extract_strided_slice %8 {offsets = [32, 0], sizes = [8, 96], strides = [1, 1]} : vector<64x96xf32> to vector<8x96xf32>
    %cst_41 = arith.constant dense<0.000000e+00> : vector<8x96xf32>
    %173 = tpu.matmul %166, %10, %cst_41 {dimension_numbers = #tpu.dot_dimension_numbers<[1], [0], [0], [1], [0, 0, 1, 1], [], []>} : vector<8x32xf32>, vector<32x96xf32>, vector<8x96xf32> -> vector<8x96xf32>
    %174 = vector.extract_strided_slice %172 {offsets = [0, 0], sizes = [8, 32], strides = [1, 1]} : vector<8x96xf32> to vector<8x32xf32>
    %175 = vector.extract_strided_slice %173 {offsets = [0, 0], sizes = [8, 32], strides = [1, 1]} : vector<8x96xf32> to vector<8x32xf32>
    %176 = arith.addf %174, %175 : vector<8x32xf32>
    %177 = arith.negf %176 : vector<8x32xf32>
    %178 = math.exp %177 : vector<8x32xf32>
    %cst_42 = arith.constant 1.000000e+00 : f32
    %179 = vector.broadcast %cst_42 : f32 to vector<8x32xf32>
    %180 = arith.addf %179, %178 : vector<8x32xf32>
    %181 = arith.divf %179, %180 : vector<8x32xf32>
    %182 = vector.extract_strided_slice %172 {offsets = [0, 32], sizes = [8, 32], strides = [1, 1]} : vector<8x96xf32> to vector<8x32xf32>
    %183 = vector.extract_strided_slice %173 {offsets = [0, 32], sizes = [8, 32], strides = [1, 1]} : vector<8x96xf32> to vector<8x32xf32>
    %184 = arith.addf %182, %183 : vector<8x32xf32>
    %185 = arith.negf %184 : vector<8x32xf32>
    %186 = math.exp %185 : vector<8x32xf32>
    %cst_43 = arith.constant 1.000000e+00 : f32
    %187 = vector.broadcast %cst_43 : f32 to vector<8x32xf32>
    %188 = arith.addf %187, %186 : vector<8x32xf32>
    %189 = arith.divf %187, %188 : vector<8x32xf32>
    %190 = vector.extract_strided_slice %172 {offsets = [0, 64], sizes = [8, 32], strides = [1, 1]} : vector<8x96xf32> to vector<8x32xf32>
    %191 = vector.extract_strided_slice %173 {offsets = [0, 64], sizes = [8, 32], strides = [1, 1]} : vector<8x96xf32> to vector<8x32xf32>
    %192 = arith.addf %191, %14 : vector<8x32xf32>
    %193 = arith.mulf %181, %192 : vector<8x32xf32>
    %194 = arith.addf %190, %193 : vector<8x32xf32>
    %195 = math.tanh %194 : vector<8x32xf32>
    %cst_44 = arith.constant 1.000000e+00 : f32
    %196 = vector.broadcast %cst_44 : f32 to vector<8x32xf32>
    %197 = arith.subf %196, %189 : vector<8x32xf32>
    %198 = arith.mulf %197, %195 : vector<8x32xf32>
    %199 = arith.mulf %189, %166 : vector<8x32xf32>
    %200 = arith.addf %198, %199 : vector<8x32xf32>
    %c4_i32 = arith.constant 4 : i32
    %201 = vector.broadcast %c4_i32 : i32 to vector<8x1xi32>
    %202 = arith.cmpi sgt, %0, %201 : vector<8x1xi32>
    %203 = vector.shape_cast %202 : vector<8x1xi1> to vector<8x1xi1>
    %204 = vector.broadcast %203 : vector<8x1xi1> to vector<8x32xi1>
    %205 = arith.select %204, %200, %166 : vector<8x32xi1>, vector<8x32xf32>
    %cst_45 = arith.constant 0.000000e+00 : f32
    %206 = vector.shape_cast %202 : vector<8x1xi1> to vector<8x1xi1>
    %207 = vector.broadcast %206 : vector<8x1xi1> to vector<8x32xi1>
    %208 = vector.broadcast %cst_45 : f32 to vector<8x32xf32>
    %209 = arith.select %207, %205, %208 : vector<8x32xi1>, vector<8x32xf32>
    %c32 = arith.constant 32 : index
    %c0_46 = arith.constant 0 : index
    %210 = vector.load %arg9[%c32, %c0_46] : memref<64x32xf32, #tpu.memory_space<vmem>>, vector<8x32xf32>
    tpu.vector_store %arg9[%c32, %c0_46], %209 {strides = array<i32>} : memref<64x32xf32, #tpu.memory_space<vmem>>, vector<8x32xf32>,
    %211 = vector.extract_strided_slice %8 {offsets = [40, 0], sizes = [8, 96], strides = [1, 1]} : vector<64x96xf32> to vector<8x96xf32>
    %cst_47 = arith.constant dense<0.000000e+00> : vector<8x96xf32>
    %212 = tpu.matmul %205, %10, %cst_47 {dimension_numbers = #tpu.dot_dimension_numbers<[1], [0], [0], [1], [0, 0, 1, 1], [], []>} : vector<8x32xf32>, vector<32x96xf32>, vector<8x96xf32> -> vector<8x96xf32>
    %213 = vector.extract_strided_slice %211 {offsets = [0, 0], sizes = [8, 32], strides = [1, 1]} : vector<8x96xf32> to vector<8x32xf32>
    %214 = vector.extract_strided_slice %212 {offsets = [0, 0], sizes = [8, 32], strides = [1, 1]} : vector<8x96xf32> to vector<8x32xf32>
    %215 = arith.addf %213, %214 : vector<8x32xf32>
    %216 = arith.negf %215 : vector<8x32xf32>
    %217 = math.exp %216 : vector<8x32xf32>
    %cst_48 = arith.constant 1.000000e+00 : f32
    %218 = vector.broadcast %cst_48 : f32 to vector<8x32xf32>
    %219 = arith.addf %218, %217 : vector<8x32xf32>
    %220 = arith.divf %218, %219 : vector<8x32xf32>
    %221 = vector.extract_strided_slice %211 {offsets = [0, 32], sizes = [8, 32], strides = [1, 1]} : vector<8x96xf32> to vector<8x32xf32>
    %222 = vector.extract_strided_slice %212 {offsets = [0, 32], sizes = [8, 32], strides = [1, 1]} : vector<8x96xf32> to vector<8x32xf32>
    %223 = arith.addf %221, %222 : vector<8x32xf32>
    %224 = arith.negf %223 : vector<8x32xf32>
    %225 = math.exp %224 : vector<8x32xf32>
    %cst_49 = arith.constant 1.000000e+00 : f32
    %226 = vector.broadcast %cst_49 : f32 to vector<8x32xf32>
    %227 = arith.addf %226, %225 : vector<8x32xf32>
    %228 = arith.divf %226, %227 : vector<8x32xf32>
    %229 = vector.extract_strided_slice %211 {offsets = [0, 64], sizes = [8, 32], strides = [1, 1]} : vector<8x96xf32> to vector<8x32xf32>
    %230 = vector.extract_strided_slice %212 {offsets = [0, 64], sizes = [8, 32], strides = [1, 1]} : vector<8x96xf32> to vector<8x32xf32>
    %231 = arith.addf %230, %14 : vector<8x32xf32>
    %232 = arith.mulf %220, %231 : vector<8x32xf32>
    %233 = arith.addf %229, %232 : vector<8x32xf32>
    %234 = math.tanh %233 : vector<8x32xf32>
    %cst_50 = arith.constant 1.000000e+00 : f32
    %235 = vector.broadcast %cst_50 : f32 to vector<8x32xf32>
    %236 = arith.subf %235, %228 : vector<8x32xf32>
    %237 = arith.mulf %236, %234 : vector<8x32xf32>
    %238 = arith.mulf %228, %205 : vector<8x32xf32>
    %239 = arith.addf %237, %238 : vector<8x32xf32>
    %c5_i32 = arith.constant 5 : i32
    %240 = vector.broadcast %c5_i32 : i32 to vector<8x1xi32>
    %241 = arith.cmpi sgt, %0, %240 : vector<8x1xi32>
    %242 = vector.shape_cast %241 : vector<8x1xi1> to vector<8x1xi1>
    %243 = vector.broadcast %242 : vector<8x1xi1> to vector<8x32xi1>
    %244 = arith.select %243, %239, %205 : vector<8x32xi1>, vector<8x32xf32>
    %cst_51 = arith.constant 0.000000e+00 : f32
    %245 = vector.shape_cast %241 : vector<8x1xi1> to vector<8x1xi1>
    %246 = vector.broadcast %245 : vector<8x1xi1> to vector<8x32xi1>
    %247 = vector.broadcast %cst_51 : f32 to vector<8x32xf32>
    %248 = arith.select %246, %244, %247 : vector<8x32xi1>, vector<8x32xf32>
    %c40 = arith.constant 40 : index
    %c0_52 = arith.constant 0 : index
    %249 = vector.load %arg9[%c40, %c0_52] : memref<64x32xf32, #tpu.memory_space<vmem>>, vector<8x32xf32>
    tpu.vector_store %arg9[%c40, %c0_52], %248 {strides = array<i32>} : memref<64x32xf32, #tpu.memory_space<vmem>>, vector<8x32xf32>,
    %250 = vector.extract_strided_slice %8 {offsets = [48, 0], sizes = [8, 96], strides = [1, 1]} : vector<64x96xf32> to vector<8x96xf32>
    %cst_53 = arith.constant dense<0.000000e+00> : vector<8x96xf32>
    %251 = tpu.matmul %244, %10, %cst_53 {dimension_numbers = #tpu.dot_dimension_numbers<[1], [0], [0], [1], [0, 0, 1, 1], [], []>} : vector<8x32xf32>, vector<32x96xf32>, vector<8x96xf32> -> vector<8x96xf32>
    %252 = vector.extract_strided_slice %250 {offsets = [0, 0], sizes = [8, 32], strides = [1, 1]} : vector<8x96xf32> to vector<8x32xf32>
    %253 = vector.extract_strided_slice %251 {offsets = [0, 0], sizes = [8, 32], strides = [1, 1]} : vector<8x96xf32> to vector<8x32xf32>
    %254 = arith.addf %252, %253 : vector<8x32xf32>
    %255 = arith.negf %254 : vector<8x32xf32>
    %256 = math.exp %255 : vector<8x32xf32>
    %cst_54 = arith.constant 1.000000e+00 : f32
    %257 = vector.broadcast %cst_54 : f32 to vector<8x32xf32>
    %258 = arith.addf %257, %256 : vector<8x32xf32>
    %259 = arith.divf %257, %258 : vector<8x32xf32>
    %260 = vector.extract_strided_slice %250 {offsets = [0, 32], sizes = [8, 32], strides = [1, 1]} : vector<8x96xf32> to vector<8x32xf32>
    %261 = vector.extract_strided_slice %251 {offsets = [0, 32], sizes = [8, 32], strides = [1, 1]} : vector<8x96xf32> to vector<8x32xf32>
    %262 = arith.addf %260, %261 : vector<8x32xf32>
    %263 = arith.negf %262 : vector<8x32xf32>
    %264 = math.exp %263 : vector<8x32xf32>
    %cst_55 = arith.constant 1.000000e+00 : f32
    %265 = vector.broadcast %cst_55 : f32 to vector<8x32xf32>
    %266 = arith.addf %265, %264 : vector<8x32xf32>
    %267 = arith.divf %265, %266 : vector<8x32xf32>
    %268 = vector.extract_strided_slice %250 {offsets = [0, 64], sizes = [8, 32], strides = [1, 1]} : vector<8x96xf32> to vector<8x32xf32>
    %269 = vector.extract_strided_slice %251 {offsets = [0, 64], sizes = [8, 32], strides = [1, 1]} : vector<8x96xf32> to vector<8x32xf32>
    %270 = arith.addf %269, %14 : vector<8x32xf32>
    %271 = arith.mulf %259, %270 : vector<8x32xf32>
    %272 = arith.addf %268, %271 : vector<8x32xf32>
    %273 = math.tanh %272 : vector<8x32xf32>
    %cst_56 = arith.constant 1.000000e+00 : f32
    %274 = vector.broadcast %cst_56 : f32 to vector<8x32xf32>
    %275 = arith.subf %274, %267 : vector<8x32xf32>
    %276 = arith.mulf %275, %273 : vector<8x32xf32>
    %277 = arith.mulf %267, %244 : vector<8x32xf32>
    %278 = arith.addf %276, %277 : vector<8x32xf32>
    %c6_i32 = arith.constant 6 : i32
    %279 = vector.broadcast %c6_i32 : i32 to vector<8x1xi32>
    %280 = arith.cmpi sgt, %0, %279 : vector<8x1xi32>
    %281 = vector.shape_cast %280 : vector<8x1xi1> to vector<8x1xi1>
    %282 = vector.broadcast %281 : vector<8x1xi1> to vector<8x32xi1>
    %283 = arith.select %282, %278, %244 : vector<8x32xi1>, vector<8x32xf32>
    %cst_57 = arith.constant 0.000000e+00 : f32
    %284 = vector.shape_cast %280 : vector<8x1xi1> to vector<8x1xi1>
    %285 = vector.broadcast %284 : vector<8x1xi1> to vector<8x32xi1>
    %286 = vector.broadcast %cst_57 : f32 to vector<8x32xf32>
    %287 = arith.select %285, %283, %286 : vector<8x32xi1>, vector<8x32xf32>
    %c48 = arith.constant 48 : index
    %c0_58 = arith.constant 0 : index
    %288 = vector.load %arg9[%c48, %c0_58] : memref<64x32xf32, #tpu.memory_space<vmem>>, vector<8x32xf32>
    tpu.vector_store %arg9[%c48, %c0_58], %287 {strides = array<i32>} : memref<64x32xf32, #tpu.memory_space<vmem>>, vector<8x32xf32>,
    %289 = vector.extract_strided_slice %8 {offsets = [56, 0], sizes = [8, 96], strides = [1, 1]} : vector<64x96xf32> to vector<8x96xf32>
    %cst_59 = arith.constant dense<0.000000e+00> : vector<8x96xf32>
    %290 = tpu.matmul %283, %10, %cst_59 {dimension_numbers = #tpu.dot_dimension_numbers<[1], [0], [0], [1], [0, 0, 1, 1], [], []>} : vector<8x32xf32>, vector<32x96xf32>, vector<8x96xf32> -> vector<8x96xf32>
    %291 = vector.extract_strided_slice %289 {offsets = [0, 0], sizes = [8, 32], strides = [1, 1]} : vector<8x96xf32> to vector<8x32xf32>
    %292 = vector.extract_strided_slice %290 {offsets = [0, 0], sizes = [8, 32], strides = [1, 1]} : vector<8x96xf32> to vector<8x32xf32>
    %293 = arith.addf %291, %292 : vector<8x32xf32>
    %294 = arith.negf %293 : vector<8x32xf32>
    %295 = math.exp %294 : vector<8x32xf32>
    %cst_60 = arith.constant 1.000000e+00 : f32
    %296 = vector.broadcast %cst_60 : f32 to vector<8x32xf32>
    %297 = arith.addf %296, %295 : vector<8x32xf32>
    %298 = arith.divf %296, %297 : vector<8x32xf32>
    %299 = vector.extract_strided_slice %289 {offsets = [0, 32], sizes = [8, 32], strides = [1, 1]} : vector<8x96xf32> to vector<8x32xf32>
    %300 = vector.extract_strided_slice %290 {offsets = [0, 32], sizes = [8, 32], strides = [1, 1]} : vector<8x96xf32> to vector<8x32xf32>
    %301 = arith.addf %299, %300 : vector<8x32xf32>
    %302 = arith.negf %301 : vector<8x32xf32>
    %303 = math.exp %302 : vector<8x32xf32>
    %cst_61 = arith.constant 1.000000e+00 : f32
    %304 = vector.broadcast %cst_61 : f32 to vector<8x32xf32>
    %305 = arith.addf %304, %303 : vector<8x32xf32>
    %306 = arith.divf %304, %305 : vector<8x32xf32>
    %307 = vector.extract_strided_slice %289 {offsets = [0, 64], sizes = [8, 32], strides = [1, 1]} : vector<8x96xf32> to vector<8x32xf32>
    %308 = vector.extract_strided_slice %290 {offsets = [0, 64], sizes = [8, 32], strides = [1, 1]} : vector<8x96xf32> to vector<8x32xf32>
    %309 = arith.addf %308, %14 : vector<8x32xf32>
    %310 = arith.mulf %298, %309 : vector<8x32xf32>
    %311 = arith.addf %307, %310 : vector<8x32xf32>
    %312 = math.tanh %311 : vector<8x32xf32>
    %cst_62 = arith.constant 1.000000e+00 : f32
    %313 = vector.broadcast %cst_62 : f32 to vector<8x32xf32>
    %314 = arith.subf %313, %306 : vector<8x32xf32>
    %315 = arith.mulf %314, %312 : vector<8x32xf32>
    %316 = arith.mulf %306, %283 : vector<8x32xf32>
    %317 = arith.addf %315, %316 : vector<8x32xf32>
    %c7_i32 = arith.constant 7 : i32
    %318 = vector.broadcast %c7_i32 : i32 to vector<8x1xi32>
    %319 = arith.cmpi sgt, %0, %318 : vector<8x1xi32>
    %320 = vector.shape_cast %319 : vector<8x1xi1> to vector<8x1xi1>
    %321 = vector.broadcast %320 : vector<8x1xi1> to vector<8x32xi1>
    %322 = arith.select %321, %317, %283 : vector<8x32xi1>, vector<8x32xf32>
    %cst_63 = arith.constant 0.000000e+00 : f32
    %323 = vector.shape_cast %319 : vector<8x1xi1> to vector<8x1xi1>
    %324 = vector.broadcast %323 : vector<8x1xi1> to vector<8x32xi1>
    %325 = vector.broadcast %cst_63 : f32 to vector<8x32xf32>
    %326 = arith.select %324, %322, %325 : vector<8x32xi1>, vector<8x32xf32>
    %c56 = arith.constant 56 : index
    %c0_64 = arith.constant 0 : index
    %327 = vector.load %arg9[%c56, %c0_64] : memref<64x32xf32, #tpu.memory_space<vmem>>, vector<8x32xf32>
    tpu.vector_store %arg9[%c56, %c0_64], %326 {strides = array<i32>} : memref<64x32xf32, #tpu.memory_space<vmem>>, vector<8x32xf32>,
    %c0_65 = arith.constant 0 : index
    %c0_66 = arith.constant 0 : index
    %328 = vector.load %arg9[%c0_65, %c0_66] : memref<64x32xf32, #tpu.memory_space<vmem>>, vector<64x32xf32>
    %c1 = arith.constant 1 : index
    %c0_67 = arith.constant 0 : index
    %c0_68 = arith.constant 0 : index
    %329 = vector.load %arg2[%c1, %c0_67, %c0_68] : memref<2x32x96xf32, #tpu.memory_space<vmem>>, vector<1x32x96xf32>
    %330 = vector.shape_cast %329 : vector<1x32x96xf32> to vector<32x96xf32>
    %cst_69 = arith.constant dense<0.000000e+00> : vector<64x96xf32>
    %331 = tpu.matmul %328, %330, %cst_69 {dimension_numbers = #tpu.dot_dimension_numbers<[1], [0], [0], [1], [0, 0, 1, 1], [], []>} : vector<64x32xf32>, vector<32x96xf32>, vector<64x96xf32> -> vector<64x96xf32>
    %c1_70 = arith.constant 1 : index
    %c0_71 = arith.constant 0 : index
    %c0_72 = arith.constant 0 : index
    %332 = vector.load %arg4[%c1_70, %c0_71, %c0_72] : memref<2x1x96xf32, #tpu.memory_space<vmem>>, vector<1x1x96xf32>
    %333 = vector.shape_cast %332 : vector<1x1x96xf32> to vector<1x96xf32>
    %334 = vector.broadcast %333 : vector<1x96xf32> to vector<64x96xf32>
    %335 = arith.addf %331, %334 : vector<64x96xf32>
    %c1_73 = arith.constant 1 : index
    %c0_74 = arith.constant 0 : index
    %c0_75 = arith.constant 0 : index
    %336 = vector.load %arg3[%c1_73, %c0_74, %c0_75] : memref<2x32x96xf32, #tpu.memory_space<vmem>>, vector<1x32x96xf32>
    %337 = vector.shape_cast %336 : vector<1x32x96xf32> to vector<32x96xf32>
    %c1_76 = arith.constant 1 : index
    %c0_77 = arith.constant 0 : index
    %c0_78 = arith.constant 0 : index
    %338 = vector.load %arg5[%c1_76, %c0_77, %c0_78] : memref<2x1x32xf32, #tpu.memory_space<vmem>>, vector<1x1x32xf32>
    %339 = vector.shape_cast %338 : vector<1x1x32xf32> to vector<1x32xf32>
    %340 = vector.shape_cast %339 : vector<1x32xf32> to vector<1x32xf32>
    %341 = vector.broadcast %340 : vector<1x32xf32> to vector<8x32xf32>
    %cst_79 = arith.constant 0.000000e+00 : f32
    %342 = vector.broadcast %cst_79 : f32 to vector<8x32xf32>
    %343 = vector.extract_strided_slice %335 {offsets = [0, 0], sizes = [8, 96], strides = [1, 1]} : vector<64x96xf32> to vector<8x96xf32>
    %cst_80 = arith.constant dense<0.000000e+00> : vector<8x96xf32>
    %344 = tpu.matmul %342, %337, %cst_80 {dimension_numbers = #tpu.dot_dimension_numbers<[1], [0], [0], [1], [0, 0, 1, 1], [], []>} : vector<8x32xf32>, vector<32x96xf32>, vector<8x96xf32> -> vector<8x96xf32>
    %345 = vector.extract_strided_slice %343 {offsets = [0, 0], sizes = [8, 32], strides = [1, 1]} : vector<8x96xf32> to vector<8x32xf32>
    %346 = vector.extract_strided_slice %344 {offsets = [0, 0], sizes = [8, 32], strides = [1, 1]} : vector<8x96xf32> to vector<8x32xf32>
    %347 = arith.addf %345, %346 : vector<8x32xf32>
    %348 = arith.negf %347 : vector<8x32xf32>
    %349 = math.exp %348 : vector<8x32xf32>
    %cst_81 = arith.constant 1.000000e+00 : f32
    %350 = vector.broadcast %cst_81 : f32 to vector<8x32xf32>
    %351 = arith.addf %350, %349 : vector<8x32xf32>
    %352 = arith.divf %350, %351 : vector<8x32xf32>
    %353 = vector.extract_strided_slice %343 {offsets = [0, 32], sizes = [8, 32], strides = [1, 1]} : vector<8x96xf32> to vector<8x32xf32>
    %354 = vector.extract_strided_slice %344 {offsets = [0, 32], sizes = [8, 32], strides = [1, 1]} : vector<8x96xf32> to vector<8x32xf32>
    %355 = arith.addf %353, %354 : vector<8x32xf32>
    %356 = arith.negf %355 : vector<8x32xf32>
    %357 = math.exp %356 : vector<8x32xf32>
    %cst_82 = arith.constant 1.000000e+00 : f32
    %358 = vector.broadcast %cst_82 : f32 to vector<8x32xf32>
    %359 = arith.addf %358, %357 : vector<8x32xf32>
    %360 = arith.divf %358, %359 : vector<8x32xf32>
    %361 = vector.extract_strided_slice %343 {offsets = [0, 64], sizes = [8, 32], strides = [1, 1]} : vector<8x96xf32> to vector<8x32xf32>
    %362 = vector.extract_strided_slice %344 {offsets = [0, 64], sizes = [8, 32], strides = [1, 1]} : vector<8x96xf32> to vector<8x32xf32>
    %363 = arith.addf %362, %341 : vector<8x32xf32>
    %364 = arith.mulf %352, %363 : vector<8x32xf32>
    %365 = arith.addf %361, %364 : vector<8x32xf32>
    %366 = math.tanh %365 : vector<8x32xf32>
    %cst_83 = arith.constant 1.000000e+00 : f32
    %367 = vector.broadcast %cst_83 : f32 to vector<8x32xf32>
    %368 = arith.subf %367, %360 : vector<8x32xf32>
    %369 = arith.mulf %368, %366 : vector<8x32xf32>
    %370 = arith.mulf %360, %342 : vector<8x32xf32>
    %371 = arith.addf %369, %370 : vector<8x32xf32>
    %c0_i32_84 = arith.constant 0 : i32
    %372 = vector.broadcast %c0_i32_84 : i32 to vector<8x1xi32>
    %373 = arith.cmpi sgt, %0, %372 : vector<8x1xi32>
    %374 = vector.shape_cast %373 : vector<8x1xi1> to vector<8x1xi1>
    %375 = vector.broadcast %374 : vector<8x1xi1> to vector<8x32xi1>
    %376 = arith.select %375, %371, %342 : vector<8x32xi1>, vector<8x32xf32>
    %cst_85 = arith.constant 0.000000e+00 : f32
    %377 = vector.shape_cast %373 : vector<8x1xi1> to vector<8x1xi1>
    %378 = vector.broadcast %377 : vector<8x1xi1> to vector<8x32xi1>
    %379 = vector.broadcast %cst_85 : f32 to vector<8x32xf32>
    %380 = arith.select %378, %376, %379 : vector<8x32xi1>, vector<8x32xf32>
    %c0_86 = arith.constant 0 : index
    %c0_87 = arith.constant 0 : index
    %381 = vector.load %arg9[%c0_86, %c0_87] : memref<64x32xf32, #tpu.memory_space<vmem>>, vector<8x32xf32>
    tpu.vector_store %arg9[%c0_86, %c0_87], %380 {strides = array<i32>} : memref<64x32xf32, #tpu.memory_space<vmem>>, vector<8x32xf32>,
    %382 = vector.extract_strided_slice %335 {offsets = [8, 0], sizes = [8, 96], strides = [1, 1]} : vector<64x96xf32> to vector<8x96xf32>
    %cst_88 = arith.constant dense<0.000000e+00> : vector<8x96xf32>
    %383 = tpu.matmul %376, %337, %cst_88 {dimension_numbers = #tpu.dot_dimension_numbers<[1], [0], [0], [1], [0, 0, 1, 1], [], []>} : vector<8x32xf32>, vector<32x96xf32>, vector<8x96xf32> -> vector<8x96xf32>
    %384 = vector.extract_strided_slice %382 {offsets = [0, 0], sizes = [8, 32], strides = [1, 1]} : vector<8x96xf32> to vector<8x32xf32>
    %385 = vector.extract_strided_slice %383 {offsets = [0, 0], sizes = [8, 32], strides = [1, 1]} : vector<8x96xf32> to vector<8x32xf32>
    %386 = arith.addf %384, %385 : vector<8x32xf32>
    %387 = arith.negf %386 : vector<8x32xf32>
    %388 = math.exp %387 : vector<8x32xf32>
    %cst_89 = arith.constant 1.000000e+00 : f32
    %389 = vector.broadcast %cst_89 : f32 to vector<8x32xf32>
    %390 = arith.addf %389, %388 : vector<8x32xf32>
    %391 = arith.divf %389, %390 : vector<8x32xf32>
    %392 = vector.extract_strided_slice %382 {offsets = [0, 32], sizes = [8, 32], strides = [1, 1]} : vector<8x96xf32> to vector<8x32xf32>
    %393 = vector.extract_strided_slice %383 {offsets = [0, 32], sizes = [8, 32], strides = [1, 1]} : vector<8x96xf32> to vector<8x32xf32>
    %394 = arith.addf %392, %393 : vector<8x32xf32>
    %395 = arith.negf %394 : vector<8x32xf32>
    %396 = math.exp %395 : vector<8x32xf32>
    %cst_90 = arith.constant 1.000000e+00 : f32
    %397 = vector.broadcast %cst_90 : f32 to vector<8x32xf32>
    %398 = arith.addf %397, %396 : vector<8x32xf32>
    %399 = arith.divf %397, %398 : vector<8x32xf32>
    %400 = vector.extract_strided_slice %382 {offsets = [0, 64], sizes = [8, 32], strides = [1, 1]} : vector<8x96xf32> to vector<8x32xf32>
    %401 = vector.extract_strided_slice %383 {offsets = [0, 64], sizes = [8, 32], strides = [1, 1]} : vector<8x96xf32> to vector<8x32xf32>
    %402 = arith.addf %401, %341 : vector<8x32xf32>
    %403 = arith.mulf %391, %402 : vector<8x32xf32>
    %404 = arith.addf %400, %403 : vector<8x32xf32>
    %405 = math.tanh %404 : vector<8x32xf32>
    %cst_91 = arith.constant 1.000000e+00 : f32
    %406 = vector.broadcast %cst_91 : f32 to vector<8x32xf32>
    %407 = arith.subf %406, %399 : vector<8x32xf32>
    %408 = arith.mulf %407, %405 : vector<8x32xf32>
    %409 = arith.mulf %399, %376 : vector<8x32xf32>
    %410 = arith.addf %408, %409 : vector<8x32xf32>
    %c1_i32_92 = arith.constant 1 : i32
    %411 = vector.broadcast %c1_i32_92 : i32 to vector<8x1xi32>
    %412 = arith.cmpi sgt, %0, %411 : vector<8x1xi32>
    %413 = vector.shape_cast %412 : vector<8x1xi1> to vector<8x1xi1>
    %414 = vector.broadcast %413 : vector<8x1xi1> to vector<8x32xi1>
    %415 = arith.select %414, %410, %376 : vector<8x32xi1>, vector<8x32xf32>
    %cst_93 = arith.constant 0.000000e+00 : f32
    %416 = vector.shape_cast %412 : vector<8x1xi1> to vector<8x1xi1>
    %417 = vector.broadcast %416 : vector<8x1xi1> to vector<8x32xi1>
    %418 = vector.broadcast %cst_93 : f32 to vector<8x32xf32>
    %419 = arith.select %417, %415, %418 : vector<8x32xi1>, vector<8x32xf32>
    %c8_94 = arith.constant 8 : index
    %c0_95 = arith.constant 0 : index
    %420 = vector.load %arg9[%c8_94, %c0_95] : memref<64x32xf32, #tpu.memory_space<vmem>>, vector<8x32xf32>
    tpu.vector_store %arg9[%c8_94, %c0_95], %419 {strides = array<i32>} : memref<64x32xf32, #tpu.memory_space<vmem>>, vector<8x32xf32>,
    %421 = vector.extract_strided_slice %335 {offsets = [16, 0], sizes = [8, 96], strides = [1, 1]} : vector<64x96xf32> to vector<8x96xf32>
    %cst_96 = arith.constant dense<0.000000e+00> : vector<8x96xf32>
    %422 = tpu.matmul %415, %337, %cst_96 {dimension_numbers = #tpu.dot_dimension_numbers<[1], [0], [0], [1], [0, 0, 1, 1], [], []>} : vector<8x32xf32>, vector<32x96xf32>, vector<8x96xf32> -> vector<8x96xf32>
    %423 = vector.extract_strided_slice %421 {offsets = [0, 0], sizes = [8, 32], strides = [1, 1]} : vector<8x96xf32> to vector<8x32xf32>
    %424 = vector.extract_strided_slice %422 {offsets = [0, 0], sizes = [8, 32], strides = [1, 1]} : vector<8x96xf32> to vector<8x32xf32>
    %425 = arith.addf %423, %424 : vector<8x32xf32>
    %426 = arith.negf %425 : vector<8x32xf32>
    %427 = math.exp %426 : vector<8x32xf32>
    %cst_97 = arith.constant 1.000000e+00 : f32
    %428 = vector.broadcast %cst_97 : f32 to vector<8x32xf32>
    %429 = arith.addf %428, %427 : vector<8x32xf32>
    %430 = arith.divf %428, %429 : vector<8x32xf32>
    %431 = vector.extract_strided_slice %421 {offsets = [0, 32], sizes = [8, 32], strides = [1, 1]} : vector<8x96xf32> to vector<8x32xf32>
    %432 = vector.extract_strided_slice %422 {offsets = [0, 32], sizes = [8, 32], strides = [1, 1]} : vector<8x96xf32> to vector<8x32xf32>
    %433 = arith.addf %431, %432 : vector<8x32xf32>
    %434 = arith.negf %433 : vector<8x32xf32>
    %435 = math.exp %434 : vector<8x32xf32>
    %cst_98 = arith.constant 1.000000e+00 : f32
    %436 = vector.broadcast %cst_98 : f32 to vector<8x32xf32>
    %437 = arith.addf %436, %435 : vector<8x32xf32>
    %438 = arith.divf %436, %437 : vector<8x32xf32>
    %439 = vector.extract_strided_slice %421 {offsets = [0, 64], sizes = [8, 32], strides = [1, 1]} : vector<8x96xf32> to vector<8x32xf32>
    %440 = vector.extract_strided_slice %422 {offsets = [0, 64], sizes = [8, 32], strides = [1, 1]} : vector<8x96xf32> to vector<8x32xf32>
    %441 = arith.addf %440, %341 : vector<8x32xf32>
    %442 = arith.mulf %430, %441 : vector<8x32xf32>
    %443 = arith.addf %439, %442 : vector<8x32xf32>
    %444 = math.tanh %443 : vector<8x32xf32>
    %cst_99 = arith.constant 1.000000e+00 : f32
    %445 = vector.broadcast %cst_99 : f32 to vector<8x32xf32>
    %446 = arith.subf %445, %438 : vector<8x32xf32>
    %447 = arith.mulf %446, %444 : vector<8x32xf32>
    %448 = arith.mulf %438, %415 : vector<8x32xf32>
    %449 = arith.addf %447, %448 : vector<8x32xf32>
    %c2_i32_100 = arith.constant 2 : i32
    %450 = vector.broadcast %c2_i32_100 : i32 to vector<8x1xi32>
    %451 = arith.cmpi sgt, %0, %450 : vector<8x1xi32>
    %452 = vector.shape_cast %451 : vector<8x1xi1> to vector<8x1xi1>
    %453 = vector.broadcast %452 : vector<8x1xi1> to vector<8x32xi1>
    %454 = arith.select %453, %449, %415 : vector<8x32xi1>, vector<8x32xf32>
    %cst_101 = arith.constant 0.000000e+00 : f32
    %455 = vector.shape_cast %451 : vector<8x1xi1> to vector<8x1xi1>
    %456 = vector.broadcast %455 : vector<8x1xi1> to vector<8x32xi1>
    %457 = vector.broadcast %cst_101 : f32 to vector<8x32xf32>
    %458 = arith.select %456, %454, %457 : vector<8x32xi1>, vector<8x32xf32>
    %c16_102 = arith.constant 16 : index
    %c0_103 = arith.constant 0 : index
    %459 = vector.load %arg9[%c16_102, %c0_103] : memref<64x32xf32, #tpu.memory_space<vmem>>, vector<8x32xf32>
    tpu.vector_store %arg9[%c16_102, %c0_103], %458 {strides = array<i32>} : memref<64x32xf32, #tpu.memory_space<vmem>>, vector<8x32xf32>,
    %460 = vector.extract_strided_slice %335 {offsets = [24, 0], sizes = [8, 96], strides = [1, 1]} : vector<64x96xf32> to vector<8x96xf32>
    %cst_104 = arith.constant dense<0.000000e+00> : vector<8x96xf32>
    %461 = tpu.matmul %454, %337, %cst_104 {dimension_numbers = #tpu.dot_dimension_numbers<[1], [0], [0], [1], [0, 0, 1, 1], [], []>} : vector<8x32xf32>, vector<32x96xf32>, vector<8x96xf32> -> vector<8x96xf32>
    %462 = vector.extract_strided_slice %460 {offsets = [0, 0], sizes = [8, 32], strides = [1, 1]} : vector<8x96xf32> to vector<8x32xf32>
    %463 = vector.extract_strided_slice %461 {offsets = [0, 0], sizes = [8, 32], strides = [1, 1]} : vector<8x96xf32> to vector<8x32xf32>
    %464 = arith.addf %462, %463 : vector<8x32xf32>
    %465 = arith.negf %464 : vector<8x32xf32>
    %466 = math.exp %465 : vector<8x32xf32>
    %cst_105 = arith.constant 1.000000e+00 : f32
    %467 = vector.broadcast %cst_105 : f32 to vector<8x32xf32>
    %468 = arith.addf %467, %466 : vector<8x32xf32>
    %469 = arith.divf %467, %468 : vector<8x32xf32>
    %470 = vector.extract_strided_slice %460 {offsets = [0, 32], sizes = [8, 32], strides = [1, 1]} : vector<8x96xf32> to vector<8x32xf32>
    %471 = vector.extract_strided_slice %461 {offsets = [0, 32], sizes = [8, 32], strides = [1, 1]} : vector<8x96xf32> to vector<8x32xf32>
    %472 = arith.addf %470, %471 : vector<8x32xf32>
    %473 = arith.negf %472 : vector<8x32xf32>
    %474 = math.exp %473 : vector<8x32xf32>
    %cst_106 = arith.constant 1.000000e+00 : f32
    %475 = vector.broadcast %cst_106 : f32 to vector<8x32xf32>
    %476 = arith.addf %475, %474 : vector<8x32xf32>
    %477 = arith.divf %475, %476 : vector<8x32xf32>
    %478 = vector.extract_strided_slice %460 {offsets = [0, 64], sizes = [8, 32], strides = [1, 1]} : vector<8x96xf32> to vector<8x32xf32>
    %479 = vector.extract_strided_slice %461 {offsets = [0, 64], sizes = [8, 32], strides = [1, 1]} : vector<8x96xf32> to vector<8x32xf32>
    %480 = arith.addf %479, %341 : vector<8x32xf32>
    %481 = arith.mulf %469, %480 : vector<8x32xf32>
    %482 = arith.addf %478, %481 : vector<8x32xf32>
    %483 = math.tanh %482 : vector<8x32xf32>
    %cst_107 = arith.constant 1.000000e+00 : f32
    %484 = vector.broadcast %cst_107 : f32 to vector<8x32xf32>
    %485 = arith.subf %484, %477 : vector<8x32xf32>
    %486 = arith.mulf %485, %483 : vector<8x32xf32>
    %487 = arith.mulf %477, %454 : vector<8x32xf32>
    %488 = arith.addf %486, %487 : vector<8x32xf32>
    %c3_i32_108 = arith.constant 3 : i32
    %489 = vector.broadcast %c3_i32_108 : i32 to vector<8x1xi32>
    %490 = arith.cmpi sgt, %0, %489 : vector<8x1xi32>
    %491 = vector.shape_cast %490 : vector<8x1xi1> to vector<8x1xi1>
    %492 = vector.broadcast %491 : vector<8x1xi1> to vector<8x32xi1>
    %493 = arith.select %492, %488, %454 : vector<8x32xi1>, vector<8x32xf32>
    %cst_109 = arith.constant 0.000000e+00 : f32
    %494 = vector.shape_cast %490 : vector<8x1xi1> to vector<8x1xi1>
    %495 = vector.broadcast %494 : vector<8x1xi1> to vector<8x32xi1>
    %496 = vector.broadcast %cst_109 : f32 to vector<8x32xf32>
    %497 = arith.select %495, %493, %496 : vector<8x32xi1>, vector<8x32xf32>
    %c24_110 = arith.constant 24 : index
    %c0_111 = arith.constant 0 : index
    %498 = vector.load %arg9[%c24_110, %c0_111] : memref<64x32xf32, #tpu.memory_space<vmem>>, vector<8x32xf32>
    tpu.vector_store %arg9[%c24_110, %c0_111], %497 {strides = array<i32>} : memref<64x32xf32, #tpu.memory_space<vmem>>, vector<8x32xf32>,
    %499 = vector.extract_strided_slice %335 {offsets = [32, 0], sizes = [8, 96], strides = [1, 1]} : vector<64x96xf32> to vector<8x96xf32>
    %cst_112 = arith.constant dense<0.000000e+00> : vector<8x96xf32>
    %500 = tpu.matmul %493, %337, %cst_112 {dimension_numbers = #tpu.dot_dimension_numbers<[1], [0], [0], [1], [0, 0, 1, 1], [], []>} : vector<8x32xf32>, vector<32x96xf32>, vector<8x96xf32> -> vector<8x96xf32>
    %501 = vector.extract_strided_slice %499 {offsets = [0, 0], sizes = [8, 32], strides = [1, 1]} : vector<8x96xf32> to vector<8x32xf32>
    %502 = vector.extract_strided_slice %500 {offsets = [0, 0], sizes = [8, 32], strides = [1, 1]} : vector<8x96xf32> to vector<8x32xf32>
    %503 = arith.addf %501, %502 : vector<8x32xf32>
    %504 = arith.negf %503 : vector<8x32xf32>
    %505 = math.exp %504 : vector<8x32xf32>
    %cst_113 = arith.constant 1.000000e+00 : f32
    %506 = vector.broadcast %cst_113 : f32 to vector<8x32xf32>
    %507 = arith.addf %506, %505 : vector<8x32xf32>
    %508 = arith.divf %506, %507 : vector<8x32xf32>
    %509 = vector.extract_strided_slice %499 {offsets = [0, 32], sizes = [8, 32], strides = [1, 1]} : vector<8x96xf32> to vector<8x32xf32>
    %510 = vector.extract_strided_slice %500 {offsets = [0, 32], sizes = [8, 32], strides = [1, 1]} : vector<8x96xf32> to vector<8x32xf32>
    %511 = arith.addf %509, %510 : vector<8x32xf32>
    %512 = arith.negf %511 : vector<8x32xf32>
    %513 = math.exp %512 : vector<8x32xf32>
    %cst_114 = arith.constant 1.000000e+00 : f32
    %514 = vector.broadcast %cst_114 : f32 to vector<8x32xf32>
    %515 = arith.addf %514, %513 : vector<8x32xf32>
    %516 = arith.divf %514, %515 : vector<8x32xf32>
    %517 = vector.extract_strided_slice %499 {offsets = [0, 64], sizes = [8, 32], strides = [1, 1]} : vector<8x96xf32> to vector<8x32xf32>
    %518 = vector.extract_strided_slice %500 {offsets = [0, 64], sizes = [8, 32], strides = [1, 1]} : vector<8x96xf32> to vector<8x32xf32>
    %519 = arith.addf %518, %341 : vector<8x32xf32>
    %520 = arith.mulf %508, %519 : vector<8x32xf32>
    %521 = arith.addf %517, %520 : vector<8x32xf32>
    %522 = math.tanh %521 : vector<8x32xf32>
    %cst_115 = arith.constant 1.000000e+00 : f32
    %523 = vector.broadcast %cst_115 : f32 to vector<8x32xf32>
    %524 = arith.subf %523, %516 : vector<8x32xf32>
    %525 = arith.mulf %524, %522 : vector<8x32xf32>
    %526 = arith.mulf %516, %493 : vector<8x32xf32>
    %527 = arith.addf %525, %526 : vector<8x32xf32>
    %c4_i32_116 = arith.constant 4 : i32
    %528 = vector.broadcast %c4_i32_116 : i32 to vector<8x1xi32>
    %529 = arith.cmpi sgt, %0, %528 : vector<8x1xi32>
    %530 = vector.shape_cast %529 : vector<8x1xi1> to vector<8x1xi1>
    %531 = vector.broadcast %530 : vector<8x1xi1> to vector<8x32xi1>
    %532 = arith.select %531, %527, %493 : vector<8x32xi1>, vector<8x32xf32>
    %cst_117 = arith.constant 0.000000e+00 : f32
    %533 = vector.shape_cast %529 : vector<8x1xi1> to vector<8x1xi1>
    %534 = vector.broadcast %533 : vector<8x1xi1> to vector<8x32xi1>
    %535 = vector.broadcast %cst_117 : f32 to vector<8x32xf32>
    %536 = arith.select %534, %532, %535 : vector<8x32xi1>, vector<8x32xf32>
    %c32_118 = arith.constant 32 : index
    %c0_119 = arith.constant 0 : index
    %537 = vector.load %arg9[%c32_118, %c0_119] : memref<64x32xf32, #tpu.memory_space<vmem>>, vector<8x32xf32>
    tpu.vector_store %arg9[%c32_118, %c0_119], %536 {strides = array<i32>} : memref<64x32xf32, #tpu.memory_space<vmem>>, vector<8x32xf32>,
    %538 = vector.extract_strided_slice %335 {offsets = [40, 0], sizes = [8, 96], strides = [1, 1]} : vector<64x96xf32> to vector<8x96xf32>
    %cst_120 = arith.constant dense<0.000000e+00> : vector<8x96xf32>
    %539 = tpu.matmul %532, %337, %cst_120 {dimension_numbers = #tpu.dot_dimension_numbers<[1], [0], [0], [1], [0, 0, 1, 1], [], []>} : vector<8x32xf32>, vector<32x96xf32>, vector<8x96xf32> -> vector<8x96xf32>
    %540 = vector.extract_strided_slice %538 {offsets = [0, 0], sizes = [8, 32], strides = [1, 1]} : vector<8x96xf32> to vector<8x32xf32>
    %541 = vector.extract_strided_slice %539 {offsets = [0, 0], sizes = [8, 32], strides = [1, 1]} : vector<8x96xf32> to vector<8x32xf32>
    %542 = arith.addf %540, %541 : vector<8x32xf32>
    %543 = arith.negf %542 : vector<8x32xf32>
    %544 = math.exp %543 : vector<8x32xf32>
    %cst_121 = arith.constant 1.000000e+00 : f32
    %545 = vector.broadcast %cst_121 : f32 to vector<8x32xf32>
    %546 = arith.addf %545, %544 : vector<8x32xf32>
    %547 = arith.divf %545, %546 : vector<8x32xf32>
    %548 = vector.extract_strided_slice %538 {offsets = [0, 32], sizes = [8, 32], strides = [1, 1]} : vector<8x96xf32> to vector<8x32xf32>
    %549 = vector.extract_strided_slice %539 {offsets = [0, 32], sizes = [8, 32], strides = [1, 1]} : vector<8x96xf32> to vector<8x32xf32>
    %550 = arith.addf %548, %549 : vector<8x32xf32>
    %551 = arith.negf %550 : vector<8x32xf32>
    %552 = math.exp %551 : vector<8x32xf32>
    %cst_122 = arith.constant 1.000000e+00 : f32
    %553 = vector.broadcast %cst_122 : f32 to vector<8x32xf32>
    %554 = arith.addf %553, %552 : vector<8x32xf32>
    %555 = arith.divf %553, %554 : vector<8x32xf32>
    %556 = vector.extract_strided_slice %538 {offsets = [0, 64], sizes = [8, 32], strides = [1, 1]} : vector<8x96xf32> to vector<8x32xf32>
    %557 = vector.extract_strided_slice %539 {offsets = [0, 64], sizes = [8, 32], strides = [1, 1]} : vector<8x96xf32> to vector<8x32xf32>
    %558 = arith.addf %557, %341 : vector<8x32xf32>
    %559 = arith.mulf %547, %558 : vector<8x32xf32>
    %560 = arith.addf %556, %559 : vector<8x32xf32>
    %561 = math.tanh %560 : vector<8x32xf32>
    %cst_123 = arith.constant 1.000000e+00 : f32
    %562 = vector.broadcast %cst_123 : f32 to vector<8x32xf32>
    %563 = arith.subf %562, %555 : vector<8x32xf32>
    %564 = arith.mulf %563, %561 : vector<8x32xf32>
    %565 = arith.mulf %555, %532 : vector<8x32xf32>
    %566 = arith.addf %564, %565 : vector<8x32xf32>
    %c5_i32_124 = arith.constant 5 : i32
    %567 = vector.broadcast %c5_i32_124 : i32 to vector<8x1xi32>
    %568 = arith.cmpi sgt, %0, %567 : vector<8x1xi32>
    %569 = vector.shape_cast %568 : vector<8x1xi1> to vector<8x1xi1>
    %570 = vector.broadcast %569 : vector<8x1xi1> to vector<8x32xi1>
    %571 = arith.select %570, %566, %532 : vector<8x32xi1>, vector<8x32xf32>
    %cst_125 = arith.constant 0.000000e+00 : f32
    %572 = vector.shape_cast %568 : vector<8x1xi1> to vector<8x1xi1>
    %573 = vector.broadcast %572 : vector<8x1xi1> to vector<8x32xi1>
    %574 = vector.broadcast %cst_125 : f32 to vector<8x32xf32>
    %575 = arith.select %573, %571, %574 : vector<8x32xi1>, vector<8x32xf32>
    %c40_126 = arith.constant 40 : index
    %c0_127 = arith.constant 0 : index
    %576 = vector.load %arg9[%c40_126, %c0_127] : memref<64x32xf32, #tpu.memory_space<vmem>>, vector<8x32xf32>
    tpu.vector_store %arg9[%c40_126, %c0_127], %575 {strides = array<i32>} : memref<64x32xf32, #tpu.memory_space<vmem>>, vector<8x32xf32>,
    %577 = vector.extract_strided_slice %335 {offsets = [48, 0], sizes = [8, 96], strides = [1, 1]} : vector<64x96xf32> to vector<8x96xf32>
    %cst_128 = arith.constant dense<0.000000e+00> : vector<8x96xf32>
    %578 = tpu.matmul %571, %337, %cst_128 {dimension_numbers = #tpu.dot_dimension_numbers<[1], [0], [0], [1], [0, 0, 1, 1], [], []>} : vector<8x32xf32>, vector<32x96xf32>, vector<8x96xf32> -> vector<8x96xf32>
    %579 = vector.extract_strided_slice %577 {offsets = [0, 0], sizes = [8, 32], strides = [1, 1]} : vector<8x96xf32> to vector<8x32xf32>
    %580 = vector.extract_strided_slice %578 {offsets = [0, 0], sizes = [8, 32], strides = [1, 1]} : vector<8x96xf32> to vector<8x32xf32>
    %581 = arith.addf %579, %580 : vector<8x32xf32>
    %582 = arith.negf %581 : vector<8x32xf32>
    %583 = math.exp %582 : vector<8x32xf32>
    %cst_129 = arith.constant 1.000000e+00 : f32
    %584 = vector.broadcast %cst_129 : f32 to vector<8x32xf32>
    %585 = arith.addf %584, %583 : vector<8x32xf32>
    %586 = arith.divf %584, %585 : vector<8x32xf32>
    %587 = vector.extract_strided_slice %577 {offsets = [0, 32], sizes = [8, 32], strides = [1, 1]} : vector<8x96xf32> to vector<8x32xf32>
    %588 = vector.extract_strided_slice %578 {offsets = [0, 32], sizes = [8, 32], strides = [1, 1]} : vector<8x96xf32> to vector<8x32xf32>
    %589 = arith.addf %587, %588 : vector<8x32xf32>
    %590 = arith.negf %589 : vector<8x32xf32>
    %591 = math.exp %590 : vector<8x32xf32>
    %cst_130 = arith.constant 1.000000e+00 : f32
    %592 = vector.broadcast %cst_130 : f32 to vector<8x32xf32>
    %593 = arith.addf %592, %591 : vector<8x32xf32>
    %594 = arith.divf %592, %593 : vector<8x32xf32>
    %595 = vector.extract_strided_slice %577 {offsets = [0, 64], sizes = [8, 32], strides = [1, 1]} : vector<8x96xf32> to vector<8x32xf32>
    %596 = vector.extract_strided_slice %578 {offsets = [0, 64], sizes = [8, 32], strides = [1, 1]} : vector<8x96xf32> to vector<8x32xf32>
    %597 = arith.addf %596, %341 : vector<8x32xf32>
    %598 = arith.mulf %586, %597 : vector<8x32xf32>
    %599 = arith.addf %595, %598 : vector<8x32xf32>
    %600 = math.tanh %599 : vector<8x32xf32>
    %cst_131 = arith.constant 1.000000e+00 : f32
    %601 = vector.broadcast %cst_131 : f32 to vector<8x32xf32>
    %602 = arith.subf %601, %594 : vector<8x32xf32>
    %603 = arith.mulf %602, %600 : vector<8x32xf32>
    %604 = arith.mulf %594, %571 : vector<8x32xf32>
    %605 = arith.addf %603, %604 : vector<8x32xf32>
    %c6_i32_132 = arith.constant 6 : i32
    %606 = vector.broadcast %c6_i32_132 : i32 to vector<8x1xi32>
    %607 = arith.cmpi sgt, %0, %606 : vector<8x1xi32>
    %608 = vector.shape_cast %607 : vector<8x1xi1> to vector<8x1xi1>
    %609 = vector.broadcast %608 : vector<8x1xi1> to vector<8x32xi1>
    %610 = arith.select %609, %605, %571 : vector<8x32xi1>, vector<8x32xf32>
    %cst_133 = arith.constant 0.000000e+00 : f32
    %611 = vector.shape_cast %607 : vector<8x1xi1> to vector<8x1xi1>
    %612 = vector.broadcast %611 : vector<8x1xi1> to vector<8x32xi1>
    %613 = vector.broadcast %cst_133 : f32 to vector<8x32xf32>
    %614 = arith.select %612, %610, %613 : vector<8x32xi1>, vector<8x32xf32>
    %c48_134 = arith.constant 48 : index
    %c0_135 = arith.constant 0 : index
    %615 = vector.load %arg9[%c48_134, %c0_135] : memref<64x32xf32, #tpu.memory_space<vmem>>, vector<8x32xf32>
    tpu.vector_store %arg9[%c48_134, %c0_135], %614 {strides = array<i32>} : memref<64x32xf32, #tpu.memory_space<vmem>>, vector<8x32xf32>,
    %616 = vector.extract_strided_slice %335 {offsets = [56, 0], sizes = [8, 96], strides = [1, 1]} : vector<64x96xf32> to vector<8x96xf32>
    %cst_136 = arith.constant dense<0.000000e+00> : vector<8x96xf32>
    %617 = tpu.matmul %610, %337, %cst_136 {dimension_numbers = #tpu.dot_dimension_numbers<[1], [0], [0], [1], [0, 0, 1, 1], [], []>} : vector<8x32xf32>, vector<32x96xf32>, vector<8x96xf32> -> vector<8x96xf32>
    %618 = vector.extract_strided_slice %616 {offsets = [0, 0], sizes = [8, 32], strides = [1, 1]} : vector<8x96xf32> to vector<8x32xf32>
    %619 = vector.extract_strided_slice %617 {offsets = [0, 0], sizes = [8, 32], strides = [1, 1]} : vector<8x96xf32> to vector<8x32xf32>
    %620 = arith.addf %618, %619 : vector<8x32xf32>
    %621 = arith.negf %620 : vector<8x32xf32>
    %622 = math.exp %621 : vector<8x32xf32>
    %cst_137 = arith.constant 1.000000e+00 : f32
    %623 = vector.broadcast %cst_137 : f32 to vector<8x32xf32>
    %624 = arith.addf %623, %622 : vector<8x32xf32>
    %625 = arith.divf %623, %624 : vector<8x32xf32>
    %626 = vector.extract_strided_slice %616 {offsets = [0, 32], sizes = [8, 32], strides = [1, 1]} : vector<8x96xf32> to vector<8x32xf32>
    %627 = vector.extract_strided_slice %617 {offsets = [0, 32], sizes = [8, 32], strides = [1, 1]} : vector<8x96xf32> to vector<8x32xf32>
    %628 = arith.addf %626, %627 : vector<8x32xf32>
    %629 = arith.negf %628 : vector<8x32xf32>
    %630 = math.exp %629 : vector<8x32xf32>
    %cst_138 = arith.constant 1.000000e+00 : f32
    %631 = vector.broadcast %cst_138 : f32 to vector<8x32xf32>
    %632 = arith.addf %631, %630 : vector<8x32xf32>
    %633 = arith.divf %631, %632 : vector<8x32xf32>
    %634 = vector.extract_strided_slice %616 {offsets = [0, 64], sizes = [8, 32], strides = [1, 1]} : vector<8x96xf32> to vector<8x32xf32>
    %635 = vector.extract_strided_slice %617 {offsets = [0, 64], sizes = [8, 32], strides = [1, 1]} : vector<8x96xf32> to vector<8x32xf32>
    %636 = arith.addf %635, %341 : vector<8x32xf32>
    %637 = arith.mulf %625, %636 : vector<8x32xf32>
    %638 = arith.addf %634, %637 : vector<8x32xf32>
    %639 = math.tanh %638 : vector<8x32xf32>
    %cst_139 = arith.constant 1.000000e+00 : f32
    %640 = vector.broadcast %cst_139 : f32 to vector<8x32xf32>
    %641 = arith.subf %640, %633 : vector<8x32xf32>
    %642 = arith.mulf %641, %639 : vector<8x32xf32>
    %643 = arith.mulf %633, %610 : vector<8x32xf32>
    %644 = arith.addf %642, %643 : vector<8x32xf32>
    %c7_i32_140 = arith.constant 7 : i32
    %645 = vector.broadcast %c7_i32_140 : i32 to vector<8x1xi32>
    %646 = arith.cmpi sgt, %0, %645 : vector<8x1xi32>
    %647 = vector.shape_cast %646 : vector<8x1xi1> to vector<8x1xi1>
    %648 = vector.broadcast %647 : vector<8x1xi1> to vector<8x32xi1>
    %649 = arith.select %648, %644, %610 : vector<8x32xi1>, vector<8x32xf32>
    %cst_141 = arith.constant 0.000000e+00 : f32
    %650 = vector.shape_cast %646 : vector<8x1xi1> to vector<8x1xi1>
    %651 = vector.broadcast %650 : vector<8x1xi1> to vector<8x32xi1>
    %652 = vector.broadcast %cst_141 : f32 to vector<8x32xf32>
    %653 = arith.select %651, %649, %652 : vector<8x32xi1>, vector<8x32xf32>
    %c56_142 = arith.constant 56 : index
    %c0_143 = arith.constant 0 : index
    %654 = vector.load %arg9[%c56_142, %c0_143] : memref<64x32xf32, #tpu.memory_space<vmem>>, vector<8x32xf32>
    tpu.vector_store %arg9[%c56_142, %c0_143], %653 {strides = array<i32>} : memref<64x32xf32, #tpu.memory_space<vmem>>, vector<8x32xf32>,
    %c0_144 = arith.constant 0 : index
    %c0_145 = arith.constant 0 : index
    %655 = vector.load %arg9[%c0_144, %c0_145] : memref<64x32xf32, #tpu.memory_space<vmem>>, vector<64x32xf32>
    %c0_146 = arith.constant 0 : index
    %c0_147 = arith.constant 0 : index
    %656 = vector.load %arg6[%c0_146, %c0_147] : memref<32x1xf32, #tpu.memory_space<vmem>>, vector<32x1xf32>
    %cst_148 = arith.constant dense<0.000000e+00> : vector<64x1xf32>
    %657 = tpu.matmul %655, %656, %cst_148 {dimension_numbers = #tpu.dot_dimension_numbers<[1], [0], [0], [1], [0, 0, 1, 1], [], []>} : vector<64x32xf32>, vector<32x1xf32>, vector<64x1xf32> -> vector<64x1xf32>
    %c0_149 = arith.constant 0 : index
    %c0_150 = arith.constant 0 : index
    %658 = vector.load %arg7[%c0_149, %c0_150] : memref<1x1xf32, #tpu.memory_space<vmem>>, vector<1x1xf32>
    %659 = vector.broadcast %658 : vector<1x1xf32> to vector<64x1xf32>
    %660 = arith.addf %657, %659 : vector<64x1xf32>
    %c0_151 = arith.constant 0 : index
    %c0_152 = arith.constant 0 : index
    %661 = vector.load %arg8[%c0_151, %c0_152] : memref<64x1xf32, #tpu.memory_space<vmem>>, vector<64x1xf32>
    tpu.vector_store %arg8[%c0_151, %c0_152], %660 {strides = array<i32>} : memref<64x1xf32, #tpu.memory_space<vmem>>, vector<64x1xf32>,
    return
  }
}

</mosaic_0001>

<llo_original>
// kernel: tpu_custom_call.1
$region0: #{tpu_custom_call.1}
  #allocation0 [shape = 'u32[]', space=smem, size = 0x4, offset = 0x4, fixed_abs, tag = 'smem constant byte address 0x4 - core index']
  #allocation1 [shape = 'u32[144,128]{1,0:T(1,128)}', space=vmem, size = 0x12000, scoped, tag = 'internal scratch']
  #allocation2 [shape = 'f32[64,32]{1,0:T(8,128)}', space=vmem, size = 0x8000, scoped, tag = 'scratch operand']
  #allocation3 [shape = 'f32[1,1]{1,0:T(1,128)S(1)}', space=vmem, size = 0x200, scoped, tag = 'scoped memory for tpu_custom_call.1']
  %s0 = inlined_call_operand.vmem [shape: f32[64,32], index: 0, kind: input, shape index: {}]
  %s1 = inlined_call_operand.vmem [shape: s32[8,1], index: 1, kind: input, shape index: {}]
  %s2 = inlined_call_operand.vmem [shape: f32[2,32,96], index: 2, kind: input, shape index: {}]
  %s3 = inlined_call_operand.vmem [shape: f32[2,32,96], index: 3, kind: input, shape index: {}]
  %s4 = inlined_call_operand.vmem [shape: f32[2,1,96], index: 4, kind: input, shape index: {}]
  %s5 = inlined_call_operand.vmem [shape: f32[2,1,32], index: 5, kind: input, shape index: {}]
  %s6 = inlined_call_operand.vmem [shape: f32[32,1], index: 6, kind: input, shape index: {}]
  %s7 = inlined_call_operand.<no memory space> [shape: f32[1,1], index: 7, kind: input, shape index: {}]
  %s8 = inlined_call_operand.vmem [shape: f32[64,1], index: 8, kind: output, shape index: {}]
  %s9 = sld [smem:[#allocation0]]
  $region42: #{tpu_custom_call.1} parent=0
    _
  %s11 = ssub.s32 1, %s9
  %s12 = scalar_select 0, %s11, %s9
  %v13 = vstv %s7
  %14 = vst [vmem:[#allocation3] sm:$0x1] %v13
  // Predicated region
  $region2: #{tpu_custom_call.1} parent=0 // pred_check
    _
  $region3: #{tpu_custom_call.1} parent=0 // pred_check_branch
    %16 = sbr.rel (0) target = $region5
  $region4: #{tpu_custom_call.1} parent=0 // pred_region
    _
  $region5: #{tpu_custom_call.1} parent=0 // pred_fallthru
    _
  // Predicated region
  $region6: #{tpu_custom_call.1} parent=0 // pred_check
    _
  $region7: #{tpu_custom_call.1} parent=0 // pred_check_branch
    %18 = sbr.rel (0) target = $region9
  $region8: #{tpu_custom_call.1} parent=0 // pred_region
    _
  $region9: #{tpu_custom_call.1} parent=0 // pred_fallthru
    _
  // Predicated region
  $region10: #{tpu_custom_call.1} parent=0 // pred_check
    _
  $region11: #{tpu_custom_call.1} parent=0 // pred_check_branch
    %20 = sbr.rel (0) target = $region13
  $region12: #{tpu_custom_call.1} parent=0 // pred_region
    _
  $region13: #{tpu_custom_call.1} parent=0 // pred_fallthru
    _
  // Predicated region
  $region14: #{tpu_custom_call.1} parent=0 // pred_check
    _
  $region15: #{tpu_custom_call.1} parent=0 // pred_check_branch
    %22 = sbr.rel (0) target = $region17
  $region16: #{tpu_custom_call.1} parent=0 // pred_region
    _
  $region17: #{tpu_custom_call.1} parent=0 // pred_fallthru
    _
  // Predicated region
  $region18: #{tpu_custom_call.1} parent=0 // pred_check
    _
  $region19: #{tpu_custom_call.1} parent=0 // pred_check_branch
    %24 = sbr.rel (0) target = $region21
  $region20: #{tpu_custom_call.1} parent=0 // pred_region
    _
  $region21: #{tpu_custom_call.1} parent=0 // pred_fallthru
    _
  // Predicated region
  $region22: #{tpu_custom_call.1} parent=0 // pred_check
    _
  $region23: #{tpu_custom_call.1} parent=0 // pred_check_branch
    %26 = sbr.rel (0) target = $region25
  $region24: #{tpu_custom_call.1} parent=0 // pred_region
    _
  $region25: #{tpu_custom_call.1} parent=0 // pred_fallthru
    _
  // Predicated region
  $region26: #{tpu_custom_call.1} parent=0 // pred_check
    _
  $region27: #{tpu_custom_call.1} parent=0 // pred_check_branch
    %28 = sbr.rel (0) target = $region29
  $region28: #{tpu_custom_call.1} parent=0 // pred_region
    _
  $region29: #{tpu_custom_call.1} parent=0 // pred_fallthru
    _
  // Predicated region
  $region30: #{tpu_custom_call.1} parent=0 // pred_check
    _
  $region31: #{tpu_custom_call.1} parent=0 // pred_check_branch
    %30 = sbr.rel (0) target = $region33
  $region32: #{tpu_custom_call.1} parent=0 // pred_region
    _
  $region33: #{tpu_custom_call.1} parent=0 // pred_fallthru
    _
  %v31 = vld [vmem:[%s1] sm:$0xff]
  %v32 = vld [vmem:[%s0] sm:$0xff]
  %v33 = vld [vmem:[%s0 + $0x8] sm:$0xff]
  %v34 = vld [vmem:[%s0 + $0x10] sm:$0xff]
  %v35 = vld [vmem:[%s0 + $0x18] sm:$0xff]
  %v36 = vld [vmem:[%s0 + $0x20] sm:$0xff]
  %v37 = vld [vmem:[%s0 + $0x28] sm:$0xff]
  %v38 = vld [vmem:[%s0 + $0x30] sm:$0xff]
  %v39 = vld [vmem:[%s0 + $0x38] sm:$0xff]
  %v40 = vld [vmem:[%s2] sm:$0xff]
  %v41 = vld [vmem:[%s2 + $0x8] sm:$0xff]
  %v42 = vld [vmem:[%s2 + $0x10] sm:$0xff]
  %v43 = vld [vmem:[%s2 + $0x18] sm:$0xff]
  %v44 = vld [vmem:[%s4] sm:$0x1]
  %v46 = vlaneseq
  %v47 = vshrl.u32 %v46, 7
  %v48 = vsub.s32 0, %v47
  %v49 = vrot.slane %v44, %v48
  %vm51 = vcmask 261120
  %v53 = vsel %vm51, %v32, 0
  %v56 = vsel %vm51, %v33, 0
  %v59 = vsel %vm51, %v34, 0
  %v62 = vsel %vm51, %v35, 0
  %v65 = vsel %vm51, %v36, 0
  %v68 = vsel %vm51, %v37, 0
  %v71 = vsel %vm51, %v38, 0
  %v74 = vsel %vm51, %v39, 0
  %76 = vmatprep.subr.mxu0 0.0
  %77 = vmatpush1.msra.mxu0 %v40
  %78 = vmatprep.subr.mxu0 0.0
  %79 = vmatpush1.msra.mxu0 %v41
  %80 = vmatprep.subr.mxu0 0.0
  %81 = vmatpush1.msra.mxu0 %v42
  %82 = vmatprep.subr.mxu0 0.0
  %83 = vmatpush1.msra.mxu0 %v43
  %84 = vmatprep.subr.mxu0 0.0
  %85 = vmatpush1.msra.mxu0 0.0
  %86 = vmatprep.subr.mxu0 0.0
  %87 = vmatpush1.msra.mxu0 0.0
  %88 = vmatprep.subr.mxu0 0.0
  %89 = vmatpush1.msra.mxu0 0.0
  %90 = vmatprep.subr.mxu0 0.0
  %91 = vmatpush1.msra.mxu0 0.0
  %92 = vmatprep.subr.mxu0 0.0
  %93 = vmatpush1.msra.mxu0 0.0
  %94 = vmatprep.subr.mxu0 0.0
  %95 = vmatpush1.msra.mxu0 0.0
  %96 = vmatprep.subr.mxu0 0.0
  %97 = vmatpush1.msra.mxu0 0.0
  %98 = vmatprep.subr.mxu0 0.0
  %99 = vmatpush1.msra.mxu0 0.0
  %100 = vmatprep.subr.mxu0 0.0
  %101 = vmatpush1.msra.mxu0 0.0
  %102 = vmatprep.subr.mxu0 0.0
  %103 = vmatpush1.msra.mxu0 0.0
  %104 = vmatprep.subr.mxu0 0.0
  %105 = vmatpush1.msra.mxu0 0.0
  %106 = vmatprep.subr.mxu0 0.0
  %107 = vmatpush1.msra.mxu0 0.0
  %108 = vmatprep.subr.mxu0 0.0
  %109 = vmatpush1.msra.mxu0 0.0
  %110 = vmatprep.subr.mxu0 0.0
  %111 = vmatpush1.msra.mxu0 0.0
  %112 = vmatprep.subr.mxu0 0.0
  %113 = vmatpush1.msra.mxu0 0.0
  %114 = vmatprep.subr.mxu0 0.0
  %115 = vmatpush1.msra.mxu0 0.0
  %116 = vmatprep.subr.mxu0 0.0
  %117 = vmatpush1.msra.mxu0 0.0
  %118 = vmatprep.subr.mxu0 0.0
  %119 = vmatpush1.msra.mxu0 0.0
  %120 = vmatprep.subr.mxu0 0.0
  %121 = vmatpush1.msra.mxu0 0.0
  %122 = vmatprep.subr.mxu0 0.0
  %123 = vmatpush1.msra.mxu0 0.0
  %124 = vmatprep.subr.mxu0 0.0
  %125 = vmatpush1.msra.mxu0 0.0
  %126 = vmatprep.subr.mxu0 0.0
  %127 = vmatpush1.msra.mxu0 0.0
  %128 = vmatprep.subr.mxu0 0.0
  %129 = vmatpush1.msra.mxu0 0.0
  %130 = vmatprep.subr.mxu0 0.0
  %131 = vmatpush1.msra.mxu0 0.0
  %132 = vmatprep.subr.mxu0 0.0
  %133 = vmatpush1.msra.mxu0 0.0
  %134 = vmatprep.subr.mxu0 0.0
  %135 = vmatpush1.msra.mxu0 0.0
  %136 = vmatprep.subr.mxu0 0.0
  %137 = vmatpush1.msra.mxu0 0.0
  %138 = vmatprep.subr.mxu0 0.0
  %139 = vmatpush1.msra.mxu0 0.0
  %140 = vmatprep.mubr.f32.mxu0 0.0
  %141 = vmatmul.mubr.f32.gmra.mrb[0].mxu0 %v53
  %v142 = vpop.f32.mrb[0].mxu0
  %v143 = vadd.f32 %v49, %v142
  %v144 = vpop.f32.mrb[0].mxu0
  %145 = vmatprep.mubr.f32.mxu0 0.0
  %146 = vmatmul.mubr.f32.gmra.mrb[0].mxu0 %v56
  %v147 = vpop.f32.mrb[0].mxu0
  %v148 = vadd.f32 %v49, %v147
  %v149 = vpop.f32.mrb[0].mxu0
  %150 = vmatprep.mubr.f32.mxu0 0.0
  %151 = vmatmul.mubr.f32.gmra.mrb[0].mxu0 %v59
  %v152 = vpop.f32.mrb[0].mxu0
  %v153 = vadd.f32 %v49, %v152
  %v154 = vpop.f32.mrb[0].mxu0
  %155 = vmatprep.mubr.f32.mxu0 0.0
  %156 = vmatmul.mubr.f32.gmra.mrb[0].mxu0 %v62
  %v157 = vpop.f32.mrb[0].mxu0
  %v158 = vadd.f32 %v49, %v157
  %v159 = vpop.f32.mrb[0].mxu0
  %160 = vmatprep.mubr.f32.mxu0 0.0
  %161 = vmatmul.mubr.f32.gmra.mrb[0].mxu0 %v65
  %v162 = vpop.f32.mrb[0].mxu0
  %v163 = vadd.f32 %v49, %v162
  %v164 = vpop.f32.mrb[0].mxu0
  %165 = vmatprep.mubr.f32.mxu0 0.0
  %166 = vmatmul.mubr.f32.gmra.mrb[0].mxu0 %v68
  %v167 = vpop.f32.mrb[0].mxu0
  %v168 = vadd.f32 %v49, %v167
  %v169 = vpop.f32.mrb[0].mxu0
  %170 = vmatprep.mubr.f32.mxu0 0.0
  %171 = vmatmul.mubr.f32.gmra.mrb[0].mxu0 %v71
  %v172 = vpop.f32.mrb[0].mxu0
  %v173 = vadd.f32 %v49, %v172
  %v174 = vpop.f32.mrb[0].mxu0
  %175 = vmatprep.mubr.f32.mxu0 0.0
  %176 = vmatmul.mubr.f32.gmra.mrb[0].mxu0 %v74
  %v177 = vpop.f32.mrb[0].mxu0
  %v178 = vadd.f32 %v49, %v177
  %v179 = vpop.f32.mrb[0].mxu0
  %180 = vdwg.mxu0
  %v181 = vld [vmem:[%s3] sm:$0xff]
  %v182 = vld [vmem:[%s3 + $0x8] sm:$0xff]
  %v183 = vld [vmem:[%s3 + $0x10] sm:$0xff]
  %v184 = vld [vmem:[%s3 + $0x18] sm:$0xff]
  %v185 = vld [vmem:[%s5] sm:$0x1]
  %v187 = vlaneseq
  %v188 = vshrl.u32 %v187, 7
  %v189 = vsub.s32 0, %v188
  %v190 = vrot.slane %v185, %v189
  %v192 = vsel %vm51, 0.0, 0
  %194 = vmatprep.subr.mxu0 0.0
  %195 = vmatpush1.msra.mxu0 %v181
  %196 = vmatprep.subr.mxu0 0.0
  %197 = vmatpush1.msra.mxu0 %v182
  %198 = vmatprep.subr.mxu0 0.0
  %199 = vmatpush1.msra.mxu0 %v183
  %200 = vmatprep.subr.mxu0 0.0
  %201 = vmatpush1.msra.mxu0 %v184
  %202 = vmatprep.subr.mxu0 0.0
  %203 = vmatpush1.msra.mxu0 0.0
  %204 = vmatprep.subr.mxu0 0.0
  %205 = vmatpush1.msra.mxu0 0.0
  %206 = vmatprep.subr.mxu0 0.0
  %207 = vmatpush1.msra.mxu0 0.0
  %208 = vmatprep.subr.mxu0 0.0
  %209 = vmatpush1.msra.mxu0 0.0
  %210 = vmatprep.subr.mxu0 0.0
  %211 = vmatpush1.msra.mxu0 0.0
  %212 = vmatprep.subr.mxu0 0.0
  %213 = vmatpush1.msra.mxu0 0.0
  %214 = vmatprep.subr.mxu0 0.0
  %215 = vmatpush1.msra.mxu0 0.0
  %216 = vmatprep.subr.mxu0 0.0
  %217 = vmatpush1.msra.mxu0 0.0
  %218 = vmatprep.subr.mxu0 0.0
  %219 = vmatpush1.msra.mxu0 0.0
  %220 = vmatprep.subr.mxu0 0.0
  %221 = vmatpush1.msra.mxu0 0.0
  %222 = vmatprep.subr.mxu0 0.0
  %223 = vmatpush1.msra.mxu0 0.0
  %224 = vmatprep.subr.mxu0 0.0
  %225 = vmatpush1.msra.mxu0 0.0
  %226 = vmatprep.subr.mxu0 0.0
  %227 = vmatpush1.msra.mxu0 0.0
  %228 = vmatprep.subr.mxu0 0.0
  %229 = vmatpush1.msra.mxu0 0.0
  %230 = vmatprep.subr.mxu0 0.0
  %231 = vmatpush1.msra.mxu0 0.0
  %232 = vmatprep.subr.mxu0 0.0
  %233 = vmatpush1.msra.mxu0 0.0
  %234 = vmatprep.subr.mxu0 0.0
  %235 = vmatpush1.msra.mxu0 0.0
  %236 = vmatprep.subr.mxu0 0.0
  %237 = vmatpush1.msra.mxu0 0.0
  %238 = vmatprep.subr.mxu0 0.0
  %239 = vmatpush1.msra.mxu0 0.0
  %240 = vmatprep.subr.mxu0 0.0
  %241 = vmatpush1.msra.mxu0 0.0
  %242 = vmatprep.subr.mxu0 0.0
  %243 = vmatpush1.msra.mxu0 0.0
  %244 = vmatprep.subr.mxu0 0.0
  %245 = vmatpush1.msra.mxu0 0.0
  %246 = vmatprep.subr.mxu0 0.0
  %247 = vmatpush1.msra.mxu0 0.0
  %248 = vmatprep.subr.mxu0 0.0
  %249 = vmatpush1.msra.mxu0 0.0
  %250 = vmatprep.subr.mxu0 0.0
  %251 = vmatpush1.msra.mxu0 0.0
  %252 = vmatprep.subr.mxu0 0.0
  %253 = vmatpush1.msra.mxu0 0.0
  %254 = vmatprep.subr.mxu0 0.0
  %255 = vmatpush1.msra.mxu0 0.0
  %256 = vmatprep.subr.mxu0 0.0
  %257 = vmatpush1.msra.mxu0 0.0
  %258 = vmatprep.mubr.f32.mxu0 0.0
  %259 = vmatmul.mubr.f32.gmra.mrb[0].mxu0 %v192
  %v260 = vpop.f32.mrb[0].mxu0
  %v261 = vadd.f32 0.0, %v260
  %v262 = vpop.f32.mrb[0].mxu0
  %263 = vdwg.mxu0
  %v264 = vadd.f32 %v143, %v261
  %v265 = vxor.u32 %v264, 2147483648
  %v266 = vmul.f32 %v265, 1.442695
  %v267 = vpow.pop %v266
  %v268 = vadd.f32 %v267, 1.0
  %v269 = vrcp.pop %v268
  %v270 = vmul.f32 1.0, %v269
  %271 = vrot.lane.b32.xlu0 %v190, 64
  %v272 = vpop.permute.xlu0 %271
  %v274 = vadd.f32 %v261, %v272
  %276 = vrot.lane.b32.xlu0 %v274, 64
  %v277 = vpop.permute.xlu0 %276
  %v279 = vmul.f32 %v270, %v277
  %281 = vrot.lane.b32.xlu0 %v279, 64
  %v282 = vpop.permute.xlu0 %281
  %v284 = vadd.f32 %v143, %v282
  %v285 = vtanh.pop %v284
  %v286 = vsub.f32 1.0, %v270
  %288 = vrot.lane.b32.xlu0 %v285, 96
  %v289 = vpop.permute.xlu0 %288
  %v291 = vmul.f32 %v286, %v289
  %v292 = vmul.f32 %v270, 0.0
  %v293 = vadd.f32 %v291, %v292
  %vm294 = vcmp.gt.s32.totalorder %v31, 0
  %v295 = vsel %vm294, 1, 0
  %296 = vset.pattern.permute.xlu0 0
  %297 = vperm.xlu0 %296, %v295
  %v298 = vpop.permute.xlu0 %297
  %vm299 = vcmp.eq.s32.totalorder %v298, 1
  %v300 = vsel %vm299, %v293, 0.0
  %302 = vrot.lane.b32.xlu0 %v300, 96
  %v303 = vpop.permute.xlu0 %302
  %305 = vst.msk [vmem:[#allocation2] sm:$0xff] %vm51, %v303
  %v306 = vsel %vm51, %v303, 0
  %308 = vmatprep.subr.mxu0 0.0
  %309 = vmatpush1.msra.mxu0 %v181
  %310 = vmatprep.subr.mxu0 0.0
  %311 = vmatpush1.msra.mxu0 %v182
  %312 = vmatprep.subr.mxu0 0.0
  %313 = vmatpush1.msra.mxu0 %v183
  %314 = vmatprep.subr.mxu0 0.0
  %315 = vmatpush1.msra.mxu0 %v184
  %316 = vmatprep.subr.mxu0 0.0
  %317 = vmatpush1.msra.mxu0 0.0
  %318 = vmatprep.subr.mxu0 0.0
  %319 = vmatpush1.msra.mxu0 0.0
  %320 = vmatprep.subr.mxu0 0.0
  %321 = vmatpush1.msra.mxu0 0.0
  %322 = vmatprep.subr.mxu0 0.0
  %323 = vmatpush1.msra.mxu0 0.0
  %324 = vmatprep.subr.mxu0 0.0
  %325 = vmatpush1.msra.mxu0 0.0
  %326 = vmatprep.subr.mxu0 0.0
  %327 = vmatpush1.msra.mxu0 0.0
  %328 = vmatprep.subr.mxu0 0.0
  %329 = vmatpush1.msra.mxu0 0.0
  %330 = vmatprep.subr.mxu0 0.0
  %331 = vmatpush1.msra.mxu0 0.0
  %332 = vmatprep.subr.mxu0 0.0
  %333 = vmatpush1.msra.mxu0 0.0
  %334 = vmatprep.subr.mxu0 0.0
  %335 = vmatpush1.msra.mxu0 0.0
  %336 = vmatprep.subr.mxu0 0.0
  %337 = vmatpush1.msra.mxu0 0.0
  %338 = vmatprep.subr.mxu0 0.0
  %339 = vmatpush1.msra.mxu0 0.0
  %340 = vmatprep.subr.mxu0 0.0
  %341 = vmatpush1.msra.mxu0 0.0
  %342 = vmatprep.subr.mxu0 0.0
  %343 = vmatpush1.msra.mxu0 0.0
  %344 = vmatprep.subr.mxu0 0.0
  %345 = vmatpush1.msra.mxu0 0.0
  %346 = vmatprep.subr.mxu0 0.0
  %347 = vmatpush1.msra.mxu0 0.0
  %348 = vmatprep.subr.mxu0 0.0
  %349 = vmatpush1.msra.mxu0 0.0
  %350 = vmatprep.subr.mxu0 0.0
  %351 = vmatpush1.msra.mxu0 0.0
  %352 = vmatprep.subr.mxu0 0.0
  %353 = vmatpush1.msra.mxu0 0.0
  %354 = vmatprep.subr.mxu0 0.0
  %355 = vmatpush1.msra.mxu0 0.0
  %356 = vmatprep.subr.mxu0 0.0
  %357 = vmatpush1.msra.mxu0 0.0
  %358 = vmatprep.subr.mxu0 0.0
  %359 = vmatpush1.msra.mxu0 0.0
  %360 = vmatprep.subr.mxu0 0.0
  %361 = vmatpush1.msra.mxu0 0.0
  %362 = vmatprep.subr.mxu0 0.0
  %363 = vmatpush1.msra.mxu0 0.0
  %364 = vmatprep.subr.mxu0 0.0
  %365 = vmatpush1.msra.mxu0 0.0
  %366 = vmatprep.subr.mxu0 0.0
  %367 = vmatpush1.msra.mxu0 0.0
  %368 = vmatprep.subr.mxu0 0.0
  %369 = vmatpush1.msra.mxu0 0.0
  %370 = vmatprep.subr.mxu0 0.0
  %371 = vmatpush1.msra.mxu0 0.0
  %372 = vmatprep.mubr.f32.mxu0 0.0
  %373 = vmatmul.mubr.f32.gmra.mrb[0].mxu0 %v306
  %v374 = vpop.f32.mrb[0].mxu0
  %v375 = vadd.f32 0.0, %v374
  %v376 = vpop.f32.mrb[0].mxu0
  %377 = vdwg.mxu0
  %v378 = vadd.f32 %v148, %v375
  %v379 = vxor.u32 %v378, 2147483648
  %v380 = vmul.f32 %v379, 1.442695
  %v381 = vpow.pop %v380
  %v382 = vadd.f32 %v381, 1.0
  %v383 = vrcp.pop %v382
  %v384 = vmul.f32 1.0, %v383
  %v385 = vadd.f32 %v375, %v272
  %387 = vrot.lane.b32.xlu0 %v385, 64
  %v388 = vpop.permute.xlu0 %387
  %v390 = vmul.f32 %v384, %v388
  %392 = vrot.lane.b32.xlu0 %v390, 64
  %v393 = vpop.permute.xlu0 %392
  %v395 = vadd.f32 %v148, %v393
  %v396 = vtanh.pop %v395
  %v397 = vsub.f32 1.0, %v384
  %399 = vrot.lane.b32.xlu0 %v396, 96
  %v400 = vpop.permute.xlu0 %399
  %v402 = vmul.f32 %v397, %v400
  %v403 = vmul.f32 %v384, %v300
  %v404 = vadd.f32 %v402, %v403
  %vm405 = vcmp.gt.s32.totalorder %v31, 1
  %v406 = vsel %vm405, 1, 0
  %407 = vset.pattern.permute.xlu0 0
  %408 = vperm.xlu0 %407, %v406
  %v409 = vpop.permute.xlu0 %408
  %vm410 = vcmp.eq.s32.totalorder %v409, 1
  %v411 = vsel %vm410, %v404, %v300
  %v412 = vsel %vm410, %v404, 0.0
  %414 = vrot.lane.b32.xlu0 %v412, 96
  %v415 = vpop.permute.xlu0 %414
  %417 = vst.msk [vmem:[#allocation2 + $0x8] sm:$0xff] %vm51, %v415
  %419 = vrot.lane.b32.xlu0 %v411, 96
  %v420 = vpop.permute.xlu0 %419
  %v421 = vsel %vm51, %v420, 0
  %423 = vmatprep.subr.mxu0 0.0
  %424 = vmatpush1.msra.mxu0 %v181
  %425 = vmatprep.subr.mxu0 0.0
  %426 = vmatpush1.msra.mxu0 %v182
  %427 = vmatprep.subr.mxu0 0.0
  %428 = vmatpush1.msra.mxu0 %v183
  %429 = vmatprep.subr.mxu0 0.0
  %430 = vmatpush1.msra.mxu0 %v184
  %431 = vmatprep.subr.mxu0 0.0
  %432 = vmatpush1.msra.mxu0 0.0
  %433 = vmatprep.subr.mxu0 0.0
  %434 = vmatpush1.msra.mxu0 0.0
  %435 = vmatprep.subr.mxu0 0.0
  %436 = vmatpush1.msra.mxu0 0.0
  %437 = vmatprep.subr.mxu0 0.0
  %438 = vmatpush1.msra.mxu0 0.0
  %439 = vmatprep.subr.mxu0 0.0
  %440 = vmatpush1.msra.mxu0 0.0
  %441 = vmatprep.subr.mxu0 0.0
  %442 = vmatpush1.msra.mxu0 0.0
  %443 = vmatprep.subr.mxu0 0.0
  %444 = vmatpush1.msra.mxu0 0.0
  %445 = vmatprep.subr.mxu0 0.0
  %446 = vmatpush1.msra.mxu0 0.0
  %447 = vmatprep.subr.mxu0 0.0
  %448 = vmatpush1.msra.mxu0 0.0
  %449 = vmatprep.subr.mxu0 0.0
  %450 = vmatpush1.msra.mxu0 0.0
  %451 = vmatprep.subr.mxu0 0.0
  %452 = vmatpush1.msra.mxu0 0.0
  %453 = vmatprep.subr.mxu0 0.0
  %454 = vmatpush1.msra.mxu0 0.0
  %455 = vmatprep.subr.mxu0 0.0
  %456 = vmatpush1.msra.mxu0 0.0
  %457 = vmatprep.subr.mxu0 0.0
  %458 = vmatpush1.msra.mxu0 0.0
  %459 = vmatprep.subr.mxu0 0.0
  %460 = vmatpush1.msra.mxu0 0.0
  %461 = vmatprep.subr.mxu0 0.0
  %462 = vmatpush1.msra.mxu0 0.0
  %463 = vmatprep.subr.mxu0 0.0
  %464 = vmatpush1.msra.mxu0 0.0
  %465 = vmatprep.subr.mxu0 0.0
  %466 = vmatpush1.msra.mxu0 0.0
  %467 = vmatprep.subr.mxu0 0.0
  %468 = vmatpush1.msra.mxu0 0.0
  %469 = vmatprep.subr.mxu0 0.0
  %470 = vmatpush1.msra.mxu0 0.0
  %471 = vmatprep.subr.mxu0 0.0
  %472 = vmatpush1.msra.mxu0 0.0
  %473 = vmatprep.subr.mxu0 0.0
  %474 = vmatpush1.msra.mxu0 0.0
  %475 = vmatprep.subr.mxu0 0.0
  %476 = vmatpush1.msra.mxu0 0.0
  %477 = vmatprep.subr.mxu0 0.0
  %478 = vmatpush1.msra.mxu0 0.0
  %479 = vmatprep.subr.mxu0 0.0
  %480 = vmatpush1.msra.mxu0 0.0
  %481 = vmatprep.subr.mxu0 0.0
  %482 = vmatpush1.msra.mxu0 0.0
  %483 = vmatprep.subr.mxu0 0.0
  %484 = vmatpush1.msra.mxu0 0.0
  %485 = vmatprep.subr.mxu0 0.0
  %486 = vmatpush1.msra.mxu0 0.0
  %487 = vmatprep.mubr.f32.mxu0 0.0
  %488 = vmatmul.mubr.f32.gmra.mrb[0].mxu0 %v421
  %v489 = vpop.f32.mrb[0].mxu0
  %v490 = vadd.f32 0.0, %v489
  %v491 = vpop.f32.mrb[0].mxu0
  %492 = vdwg.mxu0
  %v493 = vadd.f32 %v153, %v490
  %v494 = vxor.u32 %v493, 2147483648
  %v495 = vmul.f32 %v494, 1.442695
  %v496 = vpow.pop %v495
  %v497 = vadd.f32 %v496, 1.0
  %v498 = vrcp.pop %v497
  %v499 = vmul.f32 1.0, %v498
  %v500 = vadd.f32 %v490, %v272
  %502 = vrot.lane.b32.xlu0 %v500, 64
  %v503 = vpop.permute.xlu0 %502
  %v505 = vmul.f32 %v499, %v503
  %507 = vrot.lane.b32.xlu0 %v505, 64
  %v508 = vpop.permute.xlu0 %507
  %v510 = vadd.f32 %v153, %v508
  %v511 = vtanh.pop %v510
  %v512 = vsub.f32 1.0, %v499
  %514 = vrot.lane.b32.xlu0 %v511, 96
  %v515 = vpop.permute.xlu0 %514
  %v517 = vmul.f32 %v512, %v515
  %v518 = vmul.f32 %v499, %v411
  %v519 = vadd.f32 %v517, %v518
  %vm520 = vcmp.gt.s32.totalorder %v31, 2
  %v521 = vsel %vm520, 1, 0
  %522 = vset.pattern.permute.xlu0 0
  %523 = vperm.xlu0 %522, %v521
  %v524 = vpop.permute.xlu0 %523
  %vm525 = vcmp.eq.s32.totalorder %v524, 1
  %v526 = vsel %vm525, %v519, %v411
  %v527 = vsel %vm525, %v519, 0.0
  %529 = vrot.lane.b32.xlu0 %v527, 96
  %v530 = vpop.permute.xlu0 %529
  %532 = vst.msk [vmem:[#allocation2 + $0x10] sm:$0xff] %vm51, %v530
  %534 = vrot.lane.b32.xlu0 %v526, 96
  %v535 = vpop.permute.xlu0 %534
  %v536 = vsel %vm51, %v535, 0
  %538 = vmatprep.subr.mxu0 0.0
  %539 = vmatpush1.msra.mxu0 %v181
  %540 = vmatprep.subr.mxu0 0.0
  %541 = vmatpush1.msra.mxu0 %v182
  %542 = vmatprep.subr.mxu0 0.0
  %543 = vmatpush1.msra.mxu0 %v183
  %544 = vmatprep.subr.mxu0 0.0
  %545 = vmatpush1.msra.mxu0 %v184
  %546 = vmatprep.subr.mxu0 0.0
  %547 = vmatpush1.msra.mxu0 0.0
  %548 = vmatprep.subr.mxu0 0.0
  %549 = vmatpush1.msra.mxu0 0.0
  %550 = vmatprep.subr.mxu0 0.0
  %551 = vmatpush1.msra.mxu0 0.0
  %552 = vmatprep.subr.mxu0 0.0
  %553 = vmatpush1.msra.mxu0 0.0
  %554 = vmatprep.subr.mxu0 0.0
  %555 = vmatpush1.msra.mxu0 0.0
  %556 = vmatprep.subr.mxu0 0.0
  %557 = vmatpush1.msra.mxu0 0.0
  %558 = vmatprep.subr.mxu0 0.0
  %559 = vmatpush1.msra.mxu0 0.0
  %560 = vmatprep.subr.mxu0 0.0
  %561 = vmatpush1.msra.mxu0 0.0
  %562 = vmatprep.subr.mxu0 0.0
  %563 = vmatpush1.msra.mxu0 0.0
  %564 = vmatprep.subr.mxu0 0.0
  %565 = vmatpush1.msra.mxu0 0.0
  %566 = vmatprep.subr.mxu0 0.0
  %567 = vmatpush1.msra.mxu0 0.0
  %568 = vmatprep.subr.mxu0 0.0
  %569 = vmatpush1.msra.mxu0 0.0
  %570 = vmatprep.subr.mxu0 0.0
  %571 = vmatpush1.msra.mxu0 0.0
  %572 = vmatprep.subr.mxu0 0.0
  %573 = vmatpush1.msra.mxu0 0.0
  %574 = vmatprep.subr.mxu0 0.0
  %575 = vmatpush1.msra.mxu0 0.0
  %576 = vmatprep.subr.mxu0 0.0
  %577 = vmatpush1.msra.mxu0 0.0
  %578 = vmatprep.subr.mxu0 0.0
  %579 = vmatpush1.msra.mxu0 0.0
  %580 = vmatprep.subr.mxu0 0.0
  %581 = vmatpush1.msra.mxu0 0.0
  %582 = vmatprep.subr.mxu0 0.0
  %583 = vmatpush1.msra.mxu0 0.0
  %584 = vmatprep.subr.mxu0 0.0
  %585 = vmatpush1.msra.mxu0 0.0
  %586 = vmatprep.subr.mxu0 0.0
  %587 = vmatpush1.msra.mxu0 0.0
  %588 = vmatprep.subr.mxu0 0.0
  %589 = vmatpush1.msra.mxu0 0.0
  %590 = vmatprep.subr.mxu0 0.0
  %591 = vmatpush1.msra.mxu0 0.0
  %592 = vmatprep.subr.mxu0 0.0
  %593 = vmatpush1.msra.mxu0 0.0
  %594 = vmatprep.subr.mxu0 0.0
  %595 = vmatpush1.msra.mxu0 0.0
  %596 = vmatprep.subr.mxu0 0.0
  %597 = vmatpush1.msra.mxu0 0.0
  %598 = vmatprep.subr.mxu0 0.0
  %599 = vmatpush1.msra.mxu0 0.0
  %600 = vmatprep.subr.mxu0 0.0
  %601 = vmatpush1.msra.mxu0 0.0
  %602 = vmatprep.mubr.f32.mxu0 0.0
  %603 = vmatmul.mubr.f32.gmra.mrb[0].mxu0 %v536
  %v604 = vpop.f32.mrb[0].mxu0
  %v605 = vadd.f32 0.0, %v604
  %v606 = vpop.f32.mrb[0].mxu0
  %607 = vdwg.mxu0
  %v608 = vadd.f32 %v158, %v605
  %v609 = vxor.u32 %v608, 2147483648
  %v610 = vmul.f32 %v609, 1.442695
  %v611 = vpow.pop %v610
  %v612 = vadd.f32 %v611, 1.0
  %v613 = vrcp.pop %v612
  %v614 = vmul.f32 1.0, %v613
  %v615 = vadd.f32 %v605, %v272
  %617 = vrot.lane.b32.xlu0 %v615, 64
  %v618 = vpop.permute.xlu0 %617
  %v620 = vmul.f32 %v614, %v618
  %622 = vrot.lane.b32.xlu0 %v620, 64
  %v623 = vpop.permute.xlu0 %622
  %v625 = vadd.f32 %v158, %v623
  %v626 = vtanh.pop %v625
  %v627 = vsub.f32 1.0, %v614
  %629 = vrot.lane.b32.xlu0 %v626, 96
  %v630 = vpop.permute.xlu0 %629
  %v632 = vmul.f32 %v627, %v630
  %v633 = vmul.f32 %v614, %v526
  %v634 = vadd.f32 %v632, %v633
  %vm635 = vcmp.gt.s32.totalorder %v31, 3
  %v636 = vsel %vm635, 1, 0
  %637 = vset.pattern.permute.xlu0 0
  %638 = vperm.xlu0 %637, %v636
  %v639 = vpop.permute.xlu0 %638
  %vm640 = vcmp.eq.s32.totalorder %v639, 1
  %v641 = vsel %vm640, %v634, %v526
  %v642 = vsel %vm640, %v634, 0.0
  %644 = vrot.lane.b32.xlu0 %v642, 96
  %v645 = vpop.permute.xlu0 %644
  %647 = vst.msk [vmem:[#allocation2 + $0x18] sm:$0xff] %vm51, %v645
  %649 = vrot.lane.b32.xlu0 %v641, 96
  %v650 = vpop.permute.xlu0 %649
  %v651 = vsel %vm51, %v650, 0
  %653 = vmatprep.subr.mxu0 0.0
  %654 = vmatpush1.msra.mxu0 %v181
  %655 = vmatprep.subr.mxu0 0.0
  %656 = vmatpush1.msra.mxu0 %v182
  %657 = vmatprep.subr.mxu0 0.0
  %658 = vmatpush1.msra.mxu0 %v183
  %659 = vmatprep.subr.mxu0 0.0
  %660 = vmatpush1.msra.mxu0 %v184
  %661 = vmatprep.subr.mxu0 0.0
  %662 = vmatpush1.msra.mxu0 0.0
  %663 = vmatprep.subr.mxu0 0.0
  %664 = vmatpush1.msra.mxu0 0.0
  %665 = vmatprep.subr.mxu0 0.0
  %666 = vmatpush1.msra.mxu0 0.0
  %667 = vmatprep.subr.mxu0 0.0
  %668 = vmatpush1.msra.mxu0 0.0
  %669 = vmatprep.subr.mxu0 0.0
  %670 = vmatpush1.msra.mxu0 0.0
  %671 = vmatprep.subr.mxu0 0.0
  %672 = vmatpush1.msra.mxu0 0.0
  %673 = vmatprep.subr.mxu0 0.0
  %674 = vmatpush1.msra.mxu0 0.0
  %675 = vmatprep.subr.mxu0 0.0
  %676 = vmatpush1.msra.mxu0 0.0
  %677 = vmatprep.subr.mxu0 0.0
  %678 = vmatpush1.msra.mxu0 0.0
  %679 = vmatprep.subr.mxu0 0.0
  %680 = vmatpush1.msra.mxu0 0.0
  %681 = vmatprep.subr.mxu0 0.0
  %682 = vmatpush1.msra.mxu0 0.0
  %683 = vmatprep.subr.mxu0 0.0
  %684 = vmatpush1.msra.mxu0 0.0
  %685 = vmatprep.subr.mxu0 0.0
  %686 = vmatpush1.msra.mxu0 0.0
  %687 = vmatprep.subr.mxu0 0.0
  %688 = vmatpush1.msra.mxu0 0.0
  %689 = vmatprep.subr.mxu0 0.0
  %690 = vmatpush1.msra.mxu0 0.0
  %691 = vmatprep.subr.mxu0 0.0
  %692 = vmatpush1.msra.mxu0 0.0
  %693 = vmatprep.subr.mxu0 0.0
  %694 = vmatpush1.msra.mxu0 0.0
  %695 = vmatprep.subr.mxu0 0.0
  %696 = vmatpush1.msra.mxu0 0.0
  %697 = vmatprep.subr.mxu0 0.0
  %698 = vmatpush1.msra.mxu0 0.0
  %699 = vmatprep.subr.mxu0 0.0
  %700 = vmatpush1.msra.mxu0 0.0
  %701 = vmatprep.subr.mxu0 0.0
  %702 = vmatpush1.msra.mxu0 0.0
  %703 = vmatprep.subr.mxu0 0.0
  %704 = vmatpush1.msra.mxu0 0.0
  %705 = vmatprep.subr.mxu0 0.0
  %706 = vmatpush1.msra.mxu0 0.0
  %707 = vmatprep.subr.mxu0 0.0
  %708 = vmatpush1.msra.mxu0 0.0
  %709 = vmatprep.subr.mxu0 0.0
  %710 = vmatpush1.msra.mxu0 0.0
  %711 = vmatprep.subr.mxu0 0.0
  %712 = vmatpush1.msra.mxu0 0.0
  %713 = vmatprep.subr.mxu0 0.0
  %714 = vmatpush1.msra.mxu0 0.0
  %715 = vmatprep.subr.mxu0 0.0
  %716 = vmatpush1.msra.mxu0 0.0
  %717 = vmatprep.mubr.f32.mxu0 0.0
  %718 = vmatmul.mubr.f32.gmra.mrb[0].mxu0 %v651
  %v719 = vpop.f32.mrb[0].mxu0
  %v720 = vadd.f32 0.0, %v719
  %v721 = vpop.f32.mrb[0].mxu0
  %722 = vdwg.mxu0
  %v723 = vadd.f32 %v163, %v720
  %v724 = vxor.u32 %v723, 2147483648
  %v725 = vmul.f32 %v724, 1.442695
  %v726 = vpow.pop %v725
  %v727 = vadd.f32 %v726, 1.0
  %v728 = vrcp.pop %v727
  %v729 = vmul.f32 1.0, %v728
  %v730 = vadd.f32 %v720, %v272
  %732 = vrot.lane.b32.xlu0 %v730, 64
  %v733 = vpop.permute.xlu0 %732
  %v735 = vmul.f32 %v729, %v733
  %737 = vrot.lane.b32.xlu0 %v735, 64
  %v738 = vpop.permute.xlu0 %737
  %v740 = vadd.f32 %v163, %v738
  %v741 = vtanh.pop %v740
  %v742 = vsub.f32 1.0, %v729
  %744 = vrot.lane.b32.xlu0 %v741, 96
  %v745 = vpop.permute.xlu0 %744
  %v747 = vmul.f32 %v742, %v745
  %v748 = vmul.f32 %v729, %v641
  %v749 = vadd.f32 %v747, %v748
  %vm750 = vcmp.gt.s32.totalorder %v31, 4
  %v751 = vsel %vm750, 1, 0
  %752 = vset.pattern.permute.xlu0 0
  %753 = vperm.xlu0 %752, %v751
  %v754 = vpop.permute.xlu0 %753
  %vm755 = vcmp.eq.s32.totalorder %v754, 1
  %v756 = vsel %vm755, %v749, %v641
  %v757 = vsel %vm755, %v749, 0.0
  %759 = vrot.lane.b32.xlu0 %v757, 96
  %v760 = vpop.permute.xlu0 %759
  %762 = vst.msk [vmem:[#allocation2 + $0x20] sm:$0xff] %vm51, %v760
  %764 = vrot.lane.b32.xlu0 %v756, 96
  %v765 = vpop.permute.xlu0 %764
  %v766 = vsel %vm51, %v765, 0
  %768 = vmatprep.subr.mxu0 0.0
  %769 = vmatpush1.msra.mxu0 %v181
  %770 = vmatprep.subr.mxu0 0.0
  %771 = vmatpush1.msra.mxu0 %v182
  %772 = vmatprep.subr.mxu0 0.0
  %773 = vmatpush1.msra.mxu0 %v183
  %774 = vmatprep.subr.mxu0 0.0
  %775 = vmatpush1.msra.mxu0 %v184
  %776 = vmatprep.subr.mxu0 0.0
  %777 = vmatpush1.msra.mxu0 0.0
  %778 = vmatprep.subr.mxu0 0.0
  %779 = vmatpush1.msra.mxu0 0.0
  %780 = vmatprep.subr.mxu0 0.0
  %781 = vmatpush1.msra.mxu0 0.0
  %782 = vmatprep.subr.mxu0 0.0
  %783 = vmatpush1.msra.mxu0 0.0
  %784 = vmatprep.subr.mxu0 0.0
  %785 = vmatpush1.msra.mxu0 0.0
  %786 = vmatprep.subr.mxu0 0.0
  %787 = vmatpush1.msra.mxu0 0.0
  %788 = vmatprep.subr.mxu0 0.0
  %789 = vmatpush1.msra.mxu0 0.0
  %790 = vmatprep.subr.mxu0 0.0
  %791 = vmatpush1.msra.mxu0 0.0
  %792 = vmatprep.subr.mxu0 0.0
  %793 = vmatpush1.msra.mxu0 0.0
  %794 = vmatprep.subr.mxu0 0.0
  %795 = vmatpush1.msra.mxu0 0.0
  %796 = vmatprep.subr.mxu0 0.0
  %797 = vmatpush1.msra.mxu0 0.0
  %798 = vmatprep.subr.mxu0 0.0
  %799 = vmatpush1.msra.mxu0 0.0
  %800 = vmatprep.subr.mxu0 0.0
  %801 = vmatpush1.msra.mxu0 0.0
  %802 = vmatprep.subr.mxu0 0.0
  %803 = vmatpush1.msra.mxu0 0.0
  %804 = vmatprep.subr.mxu0 0.0
  %805 = vmatpush1.msra.mxu0 0.0
  %806 = vmatprep.subr.mxu0 0.0
  %807 = vmatpush1.msra.mxu0 0.0
  %808 = vmatprep.subr.mxu0 0.0
  %809 = vmatpush1.msra.mxu0 0.0
  %810 = vmatprep.subr.mxu0 0.0
  %811 = vmatpush1.msra.mxu0 0.0
  %812 = vmatprep.subr.mxu0 0.0
  %813 = vmatpush1.msra.mxu0 0.0
  %814 = vmatprep.subr.mxu0 0.0
  %815 = vmatpush1.msra.mxu0 0.0
  %816 = vmatprep.subr.mxu0 0.0
  %817 = vmatpush1.msra.mxu0 0.0
  %818 = vmatprep.subr.mxu0 0.0
  %819 = vmatpush1.msra.mxu0 0.0
  %820 = vmatprep.subr.mxu0 0.0
  %821 = vmatpush1.msra.mxu0 0.0
  %822 = vmatprep.subr.mxu0 0.0
  %823 = vmatpush1.msra.mxu0 0.0
  %824 = vmatprep.subr.mxu0 0.0
  %825 = vmatpush1.msra.mxu0 0.0
  %826 = vmatprep.subr.mxu0 0.0
  %827 = vmatpush1.msra.mxu0 0.0
  %828 = vmatprep.subr.mxu0 0.0
  %829 = vmatpush1.msra.mxu0 0.0
  %830 = vmatprep.subr.mxu0 0.0
  %831 = vmatpush1.msra.mxu0 0.0
  %832 = vmatprep.mubr.f32.mxu0 0.0
  %833 = vmatmul.mubr.f32.gmra.mrb[0].mxu0 %v766
  %v834 = vpop.f32.mrb[0].mxu0
  %v835 = vadd.f32 0.0, %v834
  %v836 = vpop.f32.mrb[0].mxu0
  %837 = vdwg.mxu0
  %v838 = vadd.f32 %v168, %v835
  %v839 = vxor.u32 %v838, 2147483648
  %v840 = vmul.f32 %v839, 1.442695
  %v841 = vpow.pop %v840
  %v842 = vadd.f32 %v841, 1.0
  %v843 = vrcp.pop %v842
  %v844 = vmul.f32 1.0, %v843
  %v845 = vadd.f32 %v835, %v272
  %847 = vrot.lane.b32.xlu0 %v845, 64
  %v848 = vpop.permute.xlu0 %847
  %v850 = vmul.f32 %v844, %v848
  %852 = vrot.lane.b32.xlu0 %v850, 64
  %v853 = vpop.permute.xlu0 %852
  %v855 = vadd.f32 %v168, %v853
  %v856 = vtanh.pop %v855
  %v857 = vsub.f32 1.0, %v844
  %859 = vrot.lane.b32.xlu0 %v856, 96
  %v860 = vpop.permute.xlu0 %859
  %v862 = vmul.f32 %v857, %v860
  %v863 = vmul.f32 %v844, %v756
  %v864 = vadd.f32 %v862, %v863
  %vm865 = vcmp.gt.s32.totalorder %v31, 5
  %v866 = vsel %vm865, 1, 0
  %867 = vset.pattern.permute.xlu0 0
  %868 = vperm.xlu0 %867, %v866
  %v869 = vpop.permute.xlu0 %868
  %vm870 = vcmp.eq.s32.totalorder %v869, 1
  %v871 = vsel %vm870, %v864, %v756
  %v872 = vsel %vm870, %v864, 0.0
  %874 = vrot.lane.b32.xlu0 %v872, 96
  %v875 = vpop.permute.xlu0 %874
  %877 = vst.msk [vmem:[#allocation2 + $0x28] sm:$0xff] %vm51, %v875
  %879 = vrot.lane.b32.xlu0 %v871, 96
  %v880 = vpop.permute.xlu0 %879
  %v881 = vsel %vm51, %v880, 0
  %883 = vmatprep.subr.mxu0 0.0
  %884 = vmatpush1.msra.mxu0 %v181
  %885 = vmatprep.subr.mxu0 0.0
  %886 = vmatpush1.msra.mxu0 %v182
  %887 = vmatprep.subr.mxu0 0.0
  %888 = vmatpush1.msra.mxu0 %v183
  %889 = vmatprep.subr.mxu0 0.0
  %890 = vmatpush1.msra.mxu0 %v184
  %891 = vmatprep.subr.mxu0 0.0
  %892 = vmatpush1.msra.mxu0 0.0
  %893 = vmatprep.subr.mxu0 0.0
  %894 = vmatpush1.msra.mxu0 0.0
  %895 = vmatprep.subr.mxu0 0.0
  %896 = vmatpush1.msra.mxu0 0.0
  %897 = vmatprep.subr.mxu0 0.0
  %898 = vmatpush1.msra.mxu0 0.0
  %899 = vmatprep.subr.mxu0 0.0
  %900 = vmatpush1.msra.mxu0 0.0
  %901 = vmatprep.subr.mxu0 0.0
  %902 = vmatpush1.msra.mxu0 0.0
  %903 = vmatprep.subr.mxu0 0.0
  %904 = vmatpush1.msra.mxu0 0.0
  %905 = vmatprep.subr.mxu0 0.0
  %906 = vmatpush1.msra.mxu0 0.0
  %907 = vmatprep.subr.mxu0 0.0
  %908 = vmatpush1.msra.mxu0 0.0
  %909 = vmatprep.subr.mxu0 0.0
  %910 = vmatpush1.msra.mxu0 0.0
  %911 = vmatprep.subr.mxu0 0.0
  %912 = vmatpush1.msra.mxu0 0.0
  %913 = vmatprep.subr.mxu0 0.0
  %914 = vmatpush1.msra.mxu0 0.0
  %915 = vmatprep.subr.mxu0 0.0
  %916 = vmatpush1.msra.mxu0 0.0
  %917 = vmatprep.subr.mxu0 0.0
  %918 = vmatpush1.msra.mxu0 0.0
  %919 = vmatprep.subr.mxu0 0.0
  %920 = vmatpush1.msra.mxu0 0.0
  %921 = vmatprep.subr.mxu0 0.0
  %922 = vmatpush1.msra.mxu0 0.0
  %923 = vmatprep.subr.mxu0 0.0
  %924 = vmatpush1.msra.mxu0 0.0
  %925 = vmatprep.subr.mxu0 0.0
  %926 = vmatpush1.msra.mxu0 0.0
  %927 = vmatprep.subr.mxu0 0.0
  %928 = vmatpush1.msra.mxu0 0.0
  %929 = vmatprep.subr.mxu0 0.0
  %930 = vmatpush1.msra.mxu0 0.0
  %931 = vmatprep.subr.mxu0 0.0
  %932 = vmatpush1.msra.mxu0 0.0
  %933 = vmatprep.subr.mxu0 0.0
  %934 = vmatpush1.msra.mxu0 0.0
  %935 = vmatprep.subr.mxu0 0.0
  %936 = vmatpush1.msra.mxu0 0.0
  %937 = vmatprep.subr.mxu0 0.0
  %938 = vmatpush1.msra.mxu0 0.0
  %939 = vmatprep.subr.mxu0 0.0
  %940 = vmatpush1.msra.mxu0 0.0
  %941 = vmatprep.subr.mxu0 0.0
  %942 = vmatpush1.msra.mxu0 0.0
  %943 = vmatprep.subr.mxu0 0.0
  %944 = vmatpush1.msra.mxu0 0.0
  %945 = vmatprep.subr.mxu0 0.0
  %946 = vmatpush1.msra.mxu0 0.0
  %947 = vmatprep.mubr.f32.mxu0 0.0
  %948 = vmatmul.mubr.f32.gmra.mrb[0].mxu0 %v881
  %v949 = vpop.f32.mrb[0].mxu0
  %v950 = vadd.f32 0.0, %v949
  %v951 = vpop.f32.mrb[0].mxu0
  %952 = vdwg.mxu0
  %v953 = vadd.f32 %v173, %v950
  %v954 = vxor.u32 %v953, 2147483648
  %v955 = vmul.f32 %v954, 1.442695
  %v956 = vpow.pop %v955
  %v957 = vadd.f32 %v956, 1.0
  %v958 = vrcp.pop %v957
  %v959 = vmul.f32 1.0, %v958
  %v960 = vadd.f32 %v950, %v272
  %962 = vrot.lane.b32.xlu0 %v960, 64
  %v963 = vpop.permute.xlu0 %962
  %v965 = vmul.f32 %v959, %v963
  %967 = vrot.lane.b32.xlu0 %v965, 64
  %v968 = vpop.permute.xlu0 %967
  %v970 = vadd.f32 %v173, %v968
  %v971 = vtanh.pop %v970
  %v972 = vsub.f32 1.0, %v959
  %974 = vrot.lane.b32.xlu0 %v971, 96
  %v975 = vpop.permute.xlu0 %974
  %v977 = vmul.f32 %v972, %v975
  %v978 = vmul.f32 %v959, %v871
  %v979 = vadd.f32 %v977, %v978
  %vm980 = vcmp.gt.s32.totalorder %v31, 6
  %v981 = vsel %vm980, 1, 0
  %982 = vset.pattern.permute.xlu0 0
  %983 = vperm.xlu0 %982, %v981
  %v984 = vpop.permute.xlu0 %983
  %vm985 = vcmp.eq.s32.totalorder %v984, 1
  %v986 = vsel %vm985, %v979, %v871
  %v987 = vsel %vm985, %v979, 0.0
  %989 = vrot.lane.b32.xlu0 %v987, 96
  %v990 = vpop.permute.xlu0 %989
  %992 = vst.msk [vmem:[#allocation2 + $0x30] sm:$0xff] %vm51, %v990
  %994 = vrot.lane.b32.xlu0 %v986, 96
  %v995 = vpop.permute.xlu0 %994
  %v996 = vsel %vm51, %v995, 0
  %998 = vmatprep.subr.mxu0 0.0
  %999 = vmatpush1.msra.mxu0 %v181
  %1000 = vmatprep.subr.mxu0 0.0
  %1001 = vmatpush1.msra.mxu0 %v182
  %1002 = vmatprep.subr.mxu0 0.0
  %1003 = vmatpush1.msra.mxu0 %v183
  %1004 = vmatprep.subr.mxu0 0.0
  %1005 = vmatpush1.msra.mxu0 %v184
  %1006 = vmatprep.subr.mxu0 0.0
  %1007 = vmatpush1.msra.mxu0 0.0
  %1008 = vmatprep.subr.mxu0 0.0
  %1009 = vmatpush1.msra.mxu0 0.0
  %1010 = vmatprep.subr.mxu0 0.0
  %1011 = vmatpush1.msra.mxu0 0.0
  %1012 = vmatprep.subr.mxu0 0.0
  %1013 = vmatpush1.msra.mxu0 0.0
  %1014 = vmatprep.subr.mxu0 0.0
  %1015 = vmatpush1.msra.mxu0 0.0
  %1016 = vmatprep.subr.mxu0 0.0
  %1017 = vmatpush1.msra.mxu0 0.0
  %1018 = vmatprep.subr.mxu0 0.0
  %1019 = vmatpush1.msra.mxu0 0.0
  %1020 = vmatprep.subr.mxu0 0.0
  %1021 = vmatpush1.msra.mxu0 0.0
  %1022 = vmatprep.subr.mxu0 0.0
  %1023 = vmatpush1.msra.mxu0 0.0
  %1024 = vmatprep.subr.mxu0 0.0
  %1025 = vmatpush1.msra.mxu0 0.0
  %1026 = vmatprep.subr.mxu0 0.0
  %1027 = vmatpush1.msra.mxu0 0.0
  %1028 = vmatprep.subr.mxu0 0.0
  %1029 = vmatpush1.msra.mxu0 0.0
  %1030 = vmatprep.subr.mxu0 0.0
  %1031 = vmatpush1.msra.mxu0 0.0
  %1032 = vmatprep.subr.mxu0 0.0
  %1033 = vmatpush1.msra.mxu0 0.0
  %1034 = vmatprep.subr.mxu0 0.0
  %1035 = vmatpush1.msra.mxu0 0.0
  %1036 = vmatprep.subr.mxu0 0.0
  %1037 = vmatpush1.msra.mxu0 0.0
  %1038 = vmatprep.subr.mxu0 0.0
  %1039 = vmatpush1.msra.mxu0 0.0
  %1040 = vmatprep.subr.mxu0 0.0
  %1041 = vmatpush1.msra.mxu0 0.0
  %1042 = vmatprep.subr.mxu0 0.0
  %1043 = vmatpush1.msra.mxu0 0.0
  %1044 = vmatprep.subr.mxu0 0.0
  %1045 = vmatpush1.msra.mxu0 0.0
  %1046 = vmatprep.subr.mxu0 0.0
  %1047 = vmatpush1.msra.mxu0 0.0
  %1048 = vmatprep.subr.mxu0 0.0
  %1049 = vmatpush1.msra.mxu0 0.0
  %1050 = vmatprep.subr.mxu0 0.0
  %1051 = vmatpush1.msra.mxu0 0.0
  %1052 = vmatprep.subr.mxu0 0.0
  %1053 = vmatpush1.msra.mxu0 0.0
  %1054 = vmatprep.subr.mxu0 0.0
  %1055 = vmatpush1.msra.mxu0 0.0
  %1056 = vmatprep.subr.mxu0 0.0
  %1057 = vmatpush1.msra.mxu0 0.0
  %1058 = vmatprep.subr.mxu0 0.0
  %1059 = vmatpush1.msra.mxu0 0.0
  %1060 = vmatprep.subr.mxu0 0.0
  %1061 = vmatpush1.msra.mxu0 0.0
  %1062 = vmatprep.mubr.f32.mxu0 0.0
  %1063 = vmatmul.mubr.f32.gmra.mrb[0].mxu0 %v996
  %v1064 = vpop.f32.mrb[0].mxu0
  %v1065 = vadd.f32 0.0, %v1064
  %v1066 = vpop.f32.mrb[0].mxu0
  %1067 = vdwg.mxu0
  %v1068 = vadd.f32 %v178, %v1065
  %v1069 = vxor.u32 %v1068, 2147483648
  %v1070 = vmul.f32 %v1069, 1.442695
  %v1071 = vpow.pop %v1070
  %v1072 = vadd.f32 %v1071, 1.0
  %v1073 = vrcp.pop %v1072
  %v1074 = vmul.f32 1.0, %v1073
  %v1075 = vadd.f32 %v1065, %v272
  %1077 = vrot.lane.b32.xlu0 %v1075, 64
  %v1078 = vpop.permute.xlu0 %1077
  %v1080 = vmul.f32 %v1074, %v1078
  %1082 = vrot.lane.b32.xlu0 %v1080, 64
  %v1083 = vpop.permute.xlu0 %1082
  %v1085 = vadd.f32 %v178, %v1083
  %v1086 = vtanh.pop %v1085
  %v1087 = vsub.f32 1.0, %v1074
  %1089 = vrot.lane.b32.xlu0 %v1086, 96
  %v1090 = vpop.permute.xlu0 %1089
  %v1092 = vmul.f32 %v1087, %v1090
  %v1093 = vmul.f32 %v1074, %v986
  %v1094 = vadd.f32 %v1092, %v1093
  %vm1095 = vcmp.gt.s32.totalorder %v31, 7
  %v1096 = vsel %vm1095, 1, 0
  %1097 = vset.pattern.permute.xlu0 0
  %1098 = vperm.xlu0 %1097, %v1096
  %v1099 = vpop.permute.xlu0 %1098
  %vm1100 = vcmp.eq.s32.totalorder %v1099, 1
  %v1101 = vsel %vm1100, %v1094, 0.0
  %1103 = vrot.lane.b32.xlu0 %v1101, 96
  %v1104 = vpop.permute.xlu0 %1103
  %1106 = vst.msk [vmem:[#allocation2 + $0x38] sm:$0xff] %vm51, %v1104
  %v1107 = vld [vmem:[#allocation2] sm:$0xff]
  %v1108 = vld [vmem:[#allocation2 + $0x8] sm:$0xff]
  %v1109 = vld [vmem:[#allocation2 + $0x10] sm:$0xff]
  %v1110 = vld [vmem:[#allocation2 + $0x18] sm:$0xff]
  %v1111 = vld [vmem:[#allocation2 + $0x20] sm:$0xff]
  %v1112 = vld [vmem:[#allocation2 + $0x28] sm:$0xff]
  %v1113 = vld [vmem:[#allocation2 + $0x30] sm:$0xff]
  %v1114 = vld [vmem:[#allocation2 + $0x38] sm:$0xff]
  %s1115 = scalar_lea.vmem %s2, 32
  %v1116 = vld [vmem:[%s1115] sm:$0xff]
  %v1117 = vld [vmem:[%s1115 + $0x8] sm:$0xff]
  %v1118 = vld [vmem:[%s1115 + $0x10] sm:$0xff]
  %v1119 = vld [vmem:[%s1115 + $0x18] sm:$0xff]
  %s1120 = scalar_lea.vmem %s4, 1
  %v1121 = vld [vmem:[%s1120] sm:$0x1]
  %v1123 = vlaneseq
  %v1124 = vshrl.u32 %v1123, 7
  %v1125 = vsub.s32 0, %v1124
  %v1126 = vrot.slane %v1121, %v1125
  %v1129 = vsel %vm51, %v1107, 0
  %v1132 = vsel %vm51, %v1108, 0
  %v1135 = vsel %vm51, %v1109, 0
  %v1138 = vsel %vm51, %v1110, 0
  %v1141 = vsel %vm51, %v1111, 0
  %v1144 = vsel %vm51, %v1112, 0
  %v1147 = vsel %vm51, %v1113, 0
  %v1150 = vsel %vm51, %v1114, 0
  %1152 = vmatprep.subr.mxu0 0.0
  %1153 = vmatpush1.msra.mxu0 %v1116
  %1154 = vmatprep.subr.mxu0 0.0
  %1155 = vmatpush1.msra.mxu0 %v1117
  %1156 = vmatprep.subr.mxu0 0.0
  %1157 = vmatpush1.msra.mxu0 %v1118
  %1158 = vmatprep.subr.mxu0 0.0
  %1159 = vmatpush1.msra.mxu0 %v1119
  %1160 = vmatprep.subr.mxu0 0.0
  %1161 = vmatpush1.msra.mxu0 0.0
  %1162 = vmatprep.subr.mxu0 0.0
  %1163 = vmatpush1.msra.mxu0 0.0
  %1164 = vmatprep.subr.mxu0 0.0
  %1165 = vmatpush1.msra.mxu0 0.0
  %1166 = vmatprep.subr.mxu0 0.0
  %1167 = vmatpush1.msra.mxu0 0.0
  %1168 = vmatprep.subr.mxu0 0.0
  %1169 = vmatpush1.msra.mxu0 0.0
  %1170 = vmatprep.subr.mxu0 0.0
  %1171 = vmatpush1.msra.mxu0 0.0
  %1172 = vmatprep.subr.mxu0 0.0
  %1173 = vmatpush1.msra.mxu0 0.0
  %1174 = vmatprep.subr.mxu0 0.0
  %1175 = vmatpush1.msra.mxu0 0.0
  %1176 = vmatprep.subr.mxu0 0.0
  %1177 = vmatpush1.msra.mxu0 0.0
  %1178 = vmatprep.subr.mxu0 0.0
  %1179 = vmatpush1.msra.mxu0 0.0
  %1180 = vmatprep.subr.mxu0 0.0
  %1181 = vmatpush1.msra.mxu0 0.0
  %1182 = vmatprep.subr.mxu0 0.0
  %1183 = vmatpush1.msra.mxu0 0.0
  %1184 = vmatprep.subr.mxu0 0.0
  %1185 = vmatpush1.msra.mxu0 0.0
  %1186 = vmatprep.subr.mxu0 0.0
  %1187 = vmatpush1.msra.mxu0 0.0
  %1188 = vmatprep.subr.mxu0 0.0
  %1189 = vmatpush1.msra.mxu0 0.0
  %1190 = vmatprep.subr.mxu0 0.0
  %1191 = vmatpush1.msra.mxu0 0.0
  %1192 = vmatprep.subr.mxu0 0.0
  %1193 = vmatpush1.msra.mxu0 0.0
  %1194 = vmatprep.subr.mxu0 0.0
  %1195 = vmatpush1.msra.mxu0 0.0
  %1196 = vmatprep.subr.mxu0 0.0
  %1197 = vmatpush1.msra.mxu0 0.0
  %1198 = vmatprep.subr.mxu0 0.0
  %1199 = vmatpush1.msra.mxu0 0.0
  %1200 = vmatprep.subr.mxu0 0.0
  %1201 = vmatpush1.msra.mxu0 0.0
  %1202 = vmatprep.subr.mxu0 0.0
  %1203 = vmatpush1.msra.mxu0 0.0
  %1204 = vmatprep.subr.mxu0 0.0
  %1205 = vmatpush1.msra.mxu0 0.0
  %1206 = vmatprep.subr.mxu0 0.0
  %1207 = vmatpush1.msra.mxu0 0.0
  %1208 = vmatprep.subr.mxu0 0.0
  %1209 = vmatpush1.msra.mxu0 0.0
  %1210 = vmatprep.subr.mxu0 0.0
  %1211 = vmatpush1.msra.mxu0 0.0
  %1212 = vmatprep.subr.mxu0 0.0
  %1213 = vmatpush1.msra.mxu0 0.0
  %1214 = vmatprep.subr.mxu0 0.0
  %1215 = vmatpush1.msra.mxu0 0.0
  %1216 = vmatprep.mubr.f32.mxu0 0.0
  %1217 = vmatmul.mubr.f32.gmra.mrb[0].mxu0 %v1129
  %v1218 = vpop.f32.mrb[0].mxu0
  %v1219 = vadd.f32 %v1126, %v1218
  %v1220 = vpop.f32.mrb[0].mxu0
  %1221 = vmatprep.mubr.f32.mxu0 0.0
  %1222 = vmatmul.mubr.f32.gmra.mrb[0].mxu0 %v1132
  %v1223 = vpop.f32.mrb[0].mxu0
  %v1224 = vadd.f32 %v1126, %v1223
  %v1225 = vpop.f32.mrb[0].mxu0
  %1226 = vmatprep.mubr.f32.mxu0 0.0
  %1227 = vmatmul.mubr.f32.gmra.mrb[0].mxu0 %v1135
  %v1228 = vpop.f32.mrb[0].mxu0
  %v1229 = vadd.f32 %v1126, %v1228
  %v1230 = vpop.f32.mrb[0].mxu0
  %1231 = vmatprep.mubr.f32.mxu0 0.0
  %1232 = vmatmul.mubr.f32.gmra.mrb[0].mxu0 %v1138
  %v1233 = vpop.f32.mrb[0].mxu0
  %v1234 = vadd.f32 %v1126, %v1233
  %v1235 = vpop.f32.mrb[0].mxu0
  %1236 = vmatprep.mubr.f32.mxu0 0.0
  %1237 = vmatmul.mubr.f32.gmra.mrb[0].mxu0 %v1141
  %v1238 = vpop.f32.mrb[0].mxu0
  %v1239 = vadd.f32 %v1126, %v1238
  %v1240 = vpop.f32.mrb[0].mxu0
  %1241 = vmatprep.mubr.f32.mxu0 0.0
  %1242 = vmatmul.mubr.f32.gmra.mrb[0].mxu0 %v1144
  %v1243 = vpop.f32.mrb[0].mxu0
  %v1244 = vadd.f32 %v1126, %v1243
  %v1245 = vpop.f32.mrb[0].mxu0
  %1246 = vmatprep.mubr.f32.mxu0 0.0
  %1247 = vmatmul.mubr.f32.gmra.mrb[0].mxu0 %v1147
  %v1248 = vpop.f32.mrb[0].mxu0
  %v1249 = vadd.f32 %v1126, %v1248
  %v1250 = vpop.f32.mrb[0].mxu0
  %1251 = vmatprep.mubr.f32.mxu0 0.0
  %1252 = vmatmul.mubr.f32.gmra.mrb[0].mxu0 %v1150
  %v1253 = vpop.f32.mrb[0].mxu0
  %v1254 = vadd.f32 %v1126, %v1253
  %v1255 = vpop.f32.mrb[0].mxu0
  %1256 = vdwg.mxu0
  %s1257 = scalar_lea.vmem %s3, 32
  %v1258 = vld [vmem:[%s1257] sm:$0xff]
  %v1259 = vld [vmem:[%s1257 + $0x8] sm:$0xff]
  %v1260 = vld [vmem:[%s1257 + $0x10] sm:$0xff]
  %v1261 = vld [vmem:[%s1257 + $0x18] sm:$0xff]
  %s1262 = scalar_lea.vmem %s5, 1
  %v1263 = vld [vmem:[%s1262] sm:$0x1]
  %v1265 = vlaneseq
  %v1266 = vshrl.u32 %v1265, 7
  %v1267 = vsub.s32 0, %v1266
  %v1268 = vrot.slane %v1263, %v1267
  %1269 = vmatprep.subr.mxu0 0.0
  %1270 = vmatpush1.msra.mxu0 %v1258
  %1271 = vmatprep.subr.mxu0 0.0
  %1272 = vmatpush1.msra.mxu0 %v1259
  %1273 = vmatprep.subr.mxu0 0.0
  %1274 = vmatpush1.msra.mxu0 %v1260
  %1275 = vmatprep.subr.mxu0 0.0
  %1276 = vmatpush1.msra.mxu0 %v1261
  %1277 = vmatprep.subr.mxu0 0.0
  %1278 = vmatpush1.msra.mxu0 0.0
  %1279 = vmatprep.subr.mxu0 0.0
  %1280 = vmatpush1.msra.mxu0 0.0
  %1281 = vmatprep.subr.mxu0 0.0
  %1282 = vmatpush1.msra.mxu0 0.0
  %1283 = vmatprep.subr.mxu0 0.0
  %1284 = vmatpush1.msra.mxu0 0.0
  %1285 = vmatprep.subr.mxu0 0.0
  %1286 = vmatpush1.msra.mxu0 0.0
  %1287 = vmatprep.subr.mxu0 0.0
  %1288 = vmatpush1.msra.mxu0 0.0
  %1289 = vmatprep.subr.mxu0 0.0
  %1290 = vmatpush1.msra.mxu0 0.0
  %1291 = vmatprep.subr.mxu0 0.0
  %1292 = vmatpush1.msra.mxu0 0.0
  %1293 = vmatprep.subr.mxu0 0.0
  %1294 = vmatpush1.msra.mxu0 0.0
  %1295 = vmatprep.subr.mxu0 0.0
  %1296 = vmatpush1.msra.mxu0 0.0
  %1297 = vmatprep.subr.mxu0 0.0
  %1298 = vmatpush1.msra.mxu0 0.0
  %1299 = vmatprep.subr.mxu0 0.0
  %1300 = vmatpush1.msra.mxu0 0.0
  %1301 = vmatprep.subr.mxu0 0.0
  %1302 = vmatpush1.msra.mxu0 0.0
  %1303 = vmatprep.subr.mxu0 0.0
  %1304 = vmatpush1.msra.mxu0 0.0
  %1305 = vmatprep.subr.mxu0 0.0
  %1306 = vmatpush1.msra.mxu0 0.0
  %1307 = vmatprep.subr.mxu0 0.0
  %1308 = vmatpush1.msra.mxu0 0.0
  %1309 = vmatprep.subr.mxu0 0.0
  %1310 = vmatpush1.msra.mxu0 0.0
  %1311 = vmatprep.subr.mxu0 0.0
  %1312 = vmatpush1.msra.mxu0 0.0
  %1313 = vmatprep.subr.mxu0 0.0
  %1314 = vmatpush1.msra.mxu0 0.0
  %1315 = vmatprep.subr.mxu0 0.0
  %1316 = vmatpush1.msra.mxu0 0.0
  %1317 = vmatprep.subr.mxu0 0.0
  %1318 = vmatpush1.msra.mxu0 0.0
  %1319 = vmatprep.subr.mxu0 0.0
  %1320 = vmatpush1.msra.mxu0 0.0
  %1321 = vmatprep.subr.mxu0 0.0
  %1322 = vmatpush1.msra.mxu0 0.0
  %1323 = vmatprep.subr.mxu0 0.0
  %1324 = vmatpush1.msra.mxu0 0.0
  %1325 = vmatprep.subr.mxu0 0.0
  %1326 = vmatpush1.msra.mxu0 0.0
  %1327 = vmatprep.subr.mxu0 0.0
  %1328 = vmatpush1.msra.mxu0 0.0
  %1329 = vmatprep.subr.mxu0 0.0
  %1330 = vmatpush1.msra.mxu0 0.0
  %1331 = vmatprep.subr.mxu0 0.0
  %1332 = vmatpush1.msra.mxu0 0.0
  %1333 = vmatprep.mubr.f32.mxu0 0.0
  %1334 = vmatmul.mubr.f32.gmra.mrb[0].mxu0 %v192
  %v1335 = vpop.f32.mrb[0].mxu0
  %v1336 = vadd.f32 0.0, %v1335
  %v1337 = vpop.f32.mrb[0].mxu0
  %1338 = vdwg.mxu0
  %v1339 = vadd.f32 %v1219, %v1336
  %v1340 = vxor.u32 %v1339, 2147483648
  %v1341 = vmul.f32 %v1340, 1.442695
  %v1342 = vpow.pop %v1341
  %v1343 = vadd.f32 %v1342, 1.0
  %v1344 = vrcp.pop %v1343
  %v1345 = vmul.f32 1.0, %v1344
  %1346 = vrot.lane.b32.xlu0 %v1268, 64
  %v1347 = vpop.permute.xlu0 %1346
  %v1349 = vadd.f32 %v1336, %v1347
  %1351 = vrot.lane.b32.xlu0 %v1349, 64
  %v1352 = vpop.permute.xlu0 %1351
  %v1354 = vmul.f32 %v1345, %v1352
  %1356 = vrot.lane.b32.xlu0 %v1354, 64
  %v1357 = vpop.permute.xlu0 %1356
  %v1359 = vadd.f32 %v1219, %v1357
  %v1360 = vtanh.pop %v1359
  %v1361 = vsub.f32 1.0, %v1345
  %1363 = vrot.lane.b32.xlu0 %v1360, 96
  %v1364 = vpop.permute.xlu0 %1363
  %v1366 = vmul.f32 %v1361, %v1364
  %v1367 = vmul.f32 %v1345, 0.0
  %v1368 = vadd.f32 %v1366, %v1367
  %v1369 = vsel %vm299, %v1368, 0.0
  %1371 = vrot.lane.b32.xlu0 %v1369, 96
  %v1372 = vpop.permute.xlu0 %1371
  %1374 = vst.msk [vmem:[#allocation2] sm:$0xff] %vm51, %v1372
  %v1375 = vsel %vm51, %v1372, 0
  %1377 = vmatprep.subr.mxu0 0.0
  %1378 = vmatpush1.msra.mxu0 %v1258
  %1379 = vmatprep.subr.mxu0 0.0
  %1380 = vmatpush1.msra.mxu0 %v1259
  %1381 = vmatprep.subr.mxu0 0.0
  %1382 = vmatpush1.msra.mxu0 %v1260
  %1383 = vmatprep.subr.mxu0 0.0
  %1384 = vmatpush1.msra.mxu0 %v1261
  %1385 = vmatprep.subr.mxu0 0.0
  %1386 = vmatpush1.msra.mxu0 0.0
  %1387 = vmatprep.subr.mxu0 0.0
  %1388 = vmatpush1.msra.mxu0 0.0
  %1389 = vmatprep.subr.mxu0 0.0
  %1390 = vmatpush1.msra.mxu0 0.0
  %1391 = vmatprep.subr.mxu0 0.0
  %1392 = vmatpush1.msra.mxu0 0.0
  %1393 = vmatprep.subr.mxu0 0.0
  %1394 = vmatpush1.msra.mxu0 0.0
  %1395 = vmatprep.subr.mxu0 0.0
  %1396 = vmatpush1.msra.mxu0 0.0
  %1397 = vmatprep.subr.mxu0 0.0
  %1398 = vmatpush1.msra.mxu0 0.0
  %1399 = vmatprep.subr.mxu0 0.0
  %1400 = vmatpush1.msra.mxu0 0.0
  %1401 = vmatprep.subr.mxu0 0.0
  %1402 = vmatpush1.msra.mxu0 0.0
  %1403 = vmatprep.subr.mxu0 0.0
  %1404 = vmatpush1.msra.mxu0 0.0
  %1405 = vmatprep.subr.mxu0 0.0
  %1406 = vmatpush1.msra.mxu0 0.0
  %1407 = vmatprep.subr.mxu0 0.0
  %1408 = vmatpush1.msra.mxu0 0.0
  %1409 = vmatprep.subr.mxu0 0.0
  %1410 = vmatpush1.msra.mxu0 0.0
  %1411 = vmatprep.subr.mxu0 0.0
  %1412 = vmatpush1.msra.mxu0 0.0
  %1413 = vmatprep.subr.mxu0 0.0
  %1414 = vmatpush1.msra.mxu0 0.0
  %1415 = vmatprep.subr.mxu0 0.0
  %1416 = vmatpush1.msra.mxu0 0.0
  %1417 = vmatprep.subr.mxu0 0.0
  %1418 = vmatpush1.msra.mxu0 0.0
  %1419 = vmatprep.subr.mxu0 0.0
  %1420 = vmatpush1.msra.mxu0 0.0
  %1421 = vmatprep.subr.mxu0 0.0
  %1422 = vmatpush1.msra.mxu0 0.0
  %1423 = vmatprep.subr.mxu0 0.0
  %1424 = vmatpush1.msra.mxu0 0.0
  %1425 = vmatprep.subr.mxu0 0.0
  %1426 = vmatpush1.msra.mxu0 0.0
  %1427 = vmatprep.subr.mxu0 0.0
  %1428 = vmatpush1.msra.mxu0 0.0
  %1429 = vmatprep.subr.mxu0 0.0
  %1430 = vmatpush1.msra.mxu0 0.0
  %1431 = vmatprep.subr.mxu0 0.0
  %1432 = vmatpush1.msra.mxu0 0.0
  %1433 = vmatprep.subr.mxu0 0.0
  %1434 = vmatpush1.msra.mxu0 0.0
  %1435 = vmatprep.subr.mxu0 0.0
  %1436 = vmatpush1.msra.mxu0 0.0
  %1437 = vmatprep.subr.mxu0 0.0
  %1438 = vmatpush1.msra.mxu0 0.0
  %1439 = vmatprep.subr.mxu0 0.0
  %1440 = vmatpush1.msra.mxu0 0.0
  %1441 = vmatprep.mubr.f32.mxu0 0.0
  %1442 = vmatmul.mubr.f32.gmra.mrb[0].mxu0 %v1375
  %v1443 = vpop.f32.mrb[0].mxu0
  %v1444 = vadd.f32 0.0, %v1443
  %v1445 = vpop.f32.mrb[0].mxu0
  %1446 = vdwg.mxu0
  %v1447 = vadd.f32 %v1224, %v1444
  %v1448 = vxor.u32 %v1447, 2147483648
  %v1449 = vmul.f32 %v1448, 1.442695
  %v1450 = vpow.pop %v1449
  %v1451 = vadd.f32 %v1450, 1.0
  %v1452 = vrcp.pop %v1451
  %v1453 = vmul.f32 1.0, %v1452
  %v1454 = vadd.f32 %v1444, %v1347
  %1456 = vrot.lane.b32.xlu0 %v1454, 64
  %v1457 = vpop.permute.xlu0 %1456
  %v1459 = vmul.f32 %v1453, %v1457
  %1461 = vrot.lane.b32.xlu0 %v1459, 64
  %v1462 = vpop.permute.xlu0 %1461
  %v1464 = vadd.f32 %v1224, %v1462
  %v1465 = vtanh.pop %v1464
  %v1466 = vsub.f32 1.0, %v1453
  %1468 = vrot.lane.b32.xlu0 %v1465, 96
  %v1469 = vpop.permute.xlu0 %1468
  %v1471 = vmul.f32 %v1466, %v1469
  %v1472 = vmul.f32 %v1453, %v1369
  %v1473 = vadd.f32 %v1471, %v1472
  %v1474 = vsel %vm410, %v1473, %v1369
  %v1475 = vsel %vm410, %v1473, 0.0
  %1477 = vrot.lane.b32.xlu0 %v1475, 96
  %v1478 = vpop.permute.xlu0 %1477
  %1480 = vst.msk [vmem:[#allocation2 + $0x8] sm:$0xff] %vm51, %v1478
  %1482 = vrot.lane.b32.xlu0 %v1474, 96
  %v1483 = vpop.permute.xlu0 %1482
  %v1484 = vsel %vm51, %v1483, 0
  %1486 = vmatprep.subr.mxu0 0.0
  %1487 = vmatpush1.msra.mxu0 %v1258
  %1488 = vmatprep.subr.mxu0 0.0
  %1489 = vmatpush1.msra.mxu0 %v1259
  %1490 = vmatprep.subr.mxu0 0.0
  %1491 = vmatpush1.msra.mxu0 %v1260
  %1492 = vmatprep.subr.mxu0 0.0
  %1493 = vmatpush1.msra.mxu0 %v1261
  %1494 = vmatprep.subr.mxu0 0.0
  %1495 = vmatpush1.msra.mxu0 0.0
  %1496 = vmatprep.subr.mxu0 0.0
  %1497 = vmatpush1.msra.mxu0 0.0
  %1498 = vmatprep.subr.mxu0 0.0
  %1499 = vmatpush1.msra.mxu0 0.0
  %1500 = vmatprep.subr.mxu0 0.0
  %1501 = vmatpush1.msra.mxu0 0.0
  %1502 = vmatprep.subr.mxu0 0.0
  %1503 = vmatpush1.msra.mxu0 0.0
  %1504 = vmatprep.subr.mxu0 0.0
  %1505 = vmatpush1.msra.mxu0 0.0
  %1506 = vmatprep.subr.mxu0 0.0
  %1507 = vmatpush1.msra.mxu0 0.0
  %1508 = vmatprep.subr.mxu0 0.0
  %1509 = vmatpush1.msra.mxu0 0.0
  %1510 = vmatprep.subr.mxu0 0.0
  %1511 = vmatpush1.msra.mxu0 0.0
  %1512 = vmatprep.subr.mxu0 0.0
  %1513 = vmatpush1.msra.mxu0 0.0
  %1514 = vmatprep.subr.mxu0 0.0
  %1515 = vmatpush1.msra.mxu0 0.0
  %1516 = vmatprep.subr.mxu0 0.0
  %1517 = vmatpush1.msra.mxu0 0.0
  %1518 = vmatprep.subr.mxu0 0.0
  %1519 = vmatpush1.msra.mxu0 0.0
  %1520 = vmatprep.subr.mxu0 0.0
  %1521 = vmatpush1.msra.mxu0 0.0
  %1522 = vmatprep.subr.mxu0 0.0
  %1523 = vmatpush1.msra.mxu0 0.0
  %1524 = vmatprep.subr.mxu0 0.0
  %1525 = vmatpush1.msra.mxu0 0.0
  %1526 = vmatprep.subr.mxu0 0.0
  %1527 = vmatpush1.msra.mxu0 0.0
  %1528 = vmatprep.subr.mxu0 0.0
  %1529 = vmatpush1.msra.mxu0 0.0
  %1530 = vmatprep.subr.mxu0 0.0
  %1531 = vmatpush1.msra.mxu0 0.0
  %1532 = vmatprep.subr.mxu0 0.0
  %1533 = vmatpush1.msra.mxu0 0.0
  %1534 = vmatprep.subr.mxu0 0.0
  %1535 = vmatpush1.msra.mxu0 0.0
  %1536 = vmatprep.subr.mxu0 0.0
  %1537 = vmatpush1.msra.mxu0 0.0
  %1538 = vmatprep.subr.mxu0 0.0
  %1539 = vmatpush1.msra.mxu0 0.0
  %1540 = vmatprep.subr.mxu0 0.0
  %1541 = vmatpush1.msra.mxu0 0.0
  %1542 = vmatprep.subr.mxu0 0.0
  %1543 = vmatpush1.msra.mxu0 0.0
  %1544 = vmatprep.subr.mxu0 0.0
  %1545 = vmatpush1.msra.mxu0 0.0
  %1546 = vmatprep.subr.mxu0 0.0
  %1547 = vmatpush1.msra.mxu0 0.0
  %1548 = vmatprep.subr.mxu0 0.0
  %1549 = vmatpush1.msra.mxu0 0.0
  %1550 = vmatprep.mubr.f32.mxu0 0.0
  %1551 = vmatmul.mubr.f32.gmra.mrb[0].mxu0 %v1484
  %v1552 = vpop.f32.mrb[0].mxu0
  %v1553 = vadd.f32 0.0, %v1552
  %v1554 = vpop.f32.mrb[0].mxu0
  %1555 = vdwg.mxu0
  %v1556 = vadd.f32 %v1229, %v1553
  %v1557 = vxor.u32 %v1556, 2147483648
  %v1558 = vmul.f32 %v1557, 1.442695
  %v1559 = vpow.pop %v1558
  %v1560 = vadd.f32 %v1559, 1.0
  %v1561 = vrcp.pop %v1560
  %v1562 = vmul.f32 1.0, %v1561
  %v1563 = vadd.f32 %v1553, %v1347
  %1565 = vrot.lane.b32.xlu0 %v1563, 64
  %v1566 = vpop.permute.xlu0 %1565
  %v1568 = vmul.f32 %v1562, %v1566
  %1570 = vrot.lane.b32.xlu0 %v1568, 64
  %v1571 = vpop.permute.xlu0 %1570
  %v1573 = vadd.f32 %v1229, %v1571
  %v1574 = vtanh.pop %v1573
  %v1575 = vsub.f32 1.0, %v1562
  %1577 = vrot.lane.b32.xlu0 %v1574, 96
  %v1578 = vpop.permute.xlu0 %1577
  %v1580 = vmul.f32 %v1575, %v1578
  %v1581 = vmul.f32 %v1562, %v1474
  %v1582 = vadd.f32 %v1580, %v1581
  %v1583 = vsel %vm525, %v1582, %v1474
  %v1584 = vsel %vm525, %v1582, 0.0
  %1586 = vrot.lane.b32.xlu0 %v1584, 96
  %v1587 = vpop.permute.xlu0 %1586
  %1589 = vst.msk [vmem:[#allocation2 + $0x10] sm:$0xff] %vm51, %v1587
  %1591 = vrot.lane.b32.xlu0 %v1583, 96
  %v1592 = vpop.permute.xlu0 %1591
  %v1593 = vsel %vm51, %v1592, 0
  %1595 = vmatprep.subr.mxu0 0.0
  %1596 = vmatpush1.msra.mxu0 %v1258
  %1597 = vmatprep.subr.mxu0 0.0
  %1598 = vmatpush1.msra.mxu0 %v1259
  %1599 = vmatprep.subr.mxu0 0.0
  %1600 = vmatpush1.msra.mxu0 %v1260
  %1601 = vmatprep.subr.mxu0 0.0
  %1602 = vmatpush1.msra.mxu0 %v1261
  %1603 = vmatprep.subr.mxu0 0.0
  %1604 = vmatpush1.msra.mxu0 0.0
  %1605 = vmatprep.subr.mxu0 0.0
  %1606 = vmatpush1.msra.mxu0 0.0
  %1607 = vmatprep.subr.mxu0 0.0
  %1608 = vmatpush1.msra.mxu0 0.0
  %1609 = vmatprep.subr.mxu0 0.0
  %1610 = vmatpush1.msra.mxu0 0.0
  %1611 = vmatprep.subr.mxu0 0.0
  %1612 = vmatpush1.msra.mxu0 0.0
  %1613 = vmatprep.subr.mxu0 0.0
  %1614 = vmatpush1.msra.mxu0 0.0
  %1615 = vmatprep.subr.mxu0 0.0
  %1616 = vmatpush1.msra.mxu0 0.0
  %1617 = vmatprep.subr.mxu0 0.0
  %1618 = vmatpush1.msra.mxu0 0.0
  %1619 = vmatprep.subr.mxu0 0.0
  %1620 = vmatpush1.msra.mxu0 0.0
  %1621 = vmatprep.subr.mxu0 0.0
  %1622 = vmatpush1.msra.mxu0 0.0
  %1623 = vmatprep.subr.mxu0 0.0
  %1624 = vmatpush1.msra.mxu0 0.0
  %1625 = vmatprep.subr.mxu0 0.0
  %1626 = vmatpush1.msra.mxu0 0.0
  %1627 = vmatprep.subr.mxu0 0.0
  %1628 = vmatpush1.msra.mxu0 0.0
  %1629 = vmatprep.subr.mxu0 0.0
  %1630 = vmatpush1.msra.mxu0 0.0
  %1631 = vmatprep.subr.mxu0 0.0
  %1632 = vmatpush1.msra.mxu0 0.0
  %1633 = vmatprep.subr.mxu0 0.0
  %1634 = vmatpush1.msra.mxu0 0.0
  %1635 = vmatprep.subr.mxu0 0.0
  %1636 = vmatpush1.msra.mxu0 0.0
  %1637 = vmatprep.subr.mxu0 0.0
  %1638 = vmatpush1.msra.mxu0 0.0
  %1639 = vmatprep.subr.mxu0 0.0
  %1640 = vmatpush1.msra.mxu0 0.0
  %1641 = vmatprep.subr.mxu0 0.0
  %1642 = vmatpush1.msra.mxu0 0.0
  %1643 = vmatprep.subr.mxu0 0.0
  %1644 = vmatpush1.msra.mxu0 0.0
  %1645 = vmatprep.subr.mxu0 0.0
  %1646 = vmatpush1.msra.mxu0 0.0
  %1647 = vmatprep.subr.mxu0 0.0
  %1648 = vmatpush1.msra.mxu0 0.0
  %1649 = vmatprep.subr.mxu0 0.0
  %1650 = vmatpush1.msra.mxu0 0.0
  %1651 = vmatprep.subr.mxu0 0.0
  %1652 = vmatpush1.msra.mxu0 0.0
  %1653 = vmatprep.subr.mxu0 0.0
  %1654 = vmatpush1.msra.mxu0 0.0
  %1655 = vmatprep.subr.mxu0 0.0
  %1656 = vmatpush1.msra.mxu0 0.0
  %1657 = vmatprep.subr.mxu0 0.0
  %1658 = vmatpush1.msra.mxu0 0.0
  %1659 = vmatprep.mubr.f32.mxu0 0.0
  %1660 = vmatmul.mubr.f32.gmra.mrb[0].mxu0 %v1593
  %v1661 = vpop.f32.mrb[0].mxu0
  %v1662 = vadd.f32 0.0, %v1661
  %v1663 = vpop.f32.mrb[0].mxu0
  %1664 = vdwg.mxu0
  %v1665 = vadd.f32 %v1234, %v1662
  %v1666 = vxor.u32 %v1665, 2147483648
  %v1667 = vmul.f32 %v1666, 1.442695
  %v1668 = vpow.pop %v1667
  %v1669 = vadd.f32 %v1668, 1.0
  %v1670 = vrcp.pop %v1669
  %v1671 = vmul.f32 1.0, %v1670
  %v1672 = vadd.f32 %v1662, %v1347
  %1674 = vrot.lane.b32.xlu0 %v1672, 64
  %v1675 = vpop.permute.xlu0 %1674
  %v1677 = vmul.f32 %v1671, %v1675
  %1679 = vrot.lane.b32.xlu0 %v1677, 64
  %v1680 = vpop.permute.xlu0 %1679
  %v1682 = vadd.f32 %v1234, %v1680
  %v1683 = vtanh.pop %v1682
  %v1684 = vsub.f32 1.0, %v1671
  %1686 = vrot.lane.b32.xlu0 %v1683, 96
  %v1687 = vpop.permute.xlu0 %1686
  %v1689 = vmul.f32 %v1684, %v1687
  %v1690 = vmul.f32 %v1671, %v1583
  %v1691 = vadd.f32 %v1689, %v1690
  %v1692 = vsel %vm640, %v1691, %v1583
  %v1693 = vsel %vm640, %v1691, 0.0
  %1695 = vrot.lane.b32.xlu0 %v1693, 96
  %v1696 = vpop.permute.xlu0 %1695
  %1698 = vst.msk [vmem:[#allocation2 + $0x18] sm:$0xff] %vm51, %v1696
  %1700 = vrot.lane.b32.xlu0 %v1692, 96
  %v1701 = vpop.permute.xlu0 %1700
  %v1702 = vsel %vm51, %v1701, 0
  %1704 = vmatprep.subr.mxu0 0.0
  %1705 = vmatpush1.msra.mxu0 %v1258
  %1706 = vmatprep.subr.mxu0 0.0
  %1707 = vmatpush1.msra.mxu0 %v1259
  %1708 = vmatprep.subr.mxu0 0.0
  %1709 = vmatpush1.msra.mxu0 %v1260
  %1710 = vmatprep.subr.mxu0 0.0
  %1711 = vmatpush1.msra.mxu0 %v1261
  %1712 = vmatprep.subr.mxu0 0.0
  %1713 = vmatpush1.msra.mxu0 0.0
  %1714 = vmatprep.subr.mxu0 0.0
  %1715 = vmatpush1.msra.mxu0 0.0
  %1716 = vmatprep.subr.mxu0 0.0
  %1717 = vmatpush1.msra.mxu0 0.0
  %1718 = vmatprep.subr.mxu0 0.0
  %1719 = vmatpush1.msra.mxu0 0.0
  %1720 = vmatprep.subr.mxu0 0.0
  %1721 = vmatpush1.msra.mxu0 0.0
  %1722 = vmatprep.subr.mxu0 0.0
  %1723 = vmatpush1.msra.mxu0 0.0
  %1724 = vmatprep.subr.mxu0 0.0
  %1725 = vmatpush1.msra.mxu0 0.0
  %1726 = vmatprep.subr.mxu0 0.0
  %1727 = vmatpush1.msra.mxu0 0.0
  %1728 = vmatprep.subr.mxu0 0.0
  %1729 = vmatpush1.msra.mxu0 0.0
  %1730 = vmatprep.subr.mxu0 0.0
  %1731 = vmatpush1.msra.mxu0 0.0
  %1732 = vmatprep.subr.mxu0 0.0
  %1733 = vmatpush1.msra.mxu0 0.0
  %1734 = vmatprep.subr.mxu0 0.0
  %1735 = vmatpush1.msra.mxu0 0.0
  %1736 = vmatprep.subr.mxu0 0.0
  %1737 = vmatpush1.msra.mxu0 0.0
  %1738 = vmatprep.subr.mxu0 0.0
  %1739 = vmatpush1.msra.mxu0 0.0
  %1740 = vmatprep.subr.mxu0 0.0
  %1741 = vmatpush1.msra.mxu0 0.0
  %1742 = vmatprep.subr.mxu0 0.0
  %1743 = vmatpush1.msra.mxu0 0.0
  %1744 = vmatprep.subr.mxu0 0.0
  %1745 = vmatpush1.msra.mxu0 0.0
  %1746 = vmatprep.subr.mxu0 0.0
  %1747 = vmatpush1.msra.mxu0 0.0
  %1748 = vmatprep.subr.mxu0 0.0
  %1749 = vmatpush1.msra.mxu0 0.0
  %1750 = vmatprep.subr.mxu0 0.0
  %1751 = vmatpush1.msra.mxu0 0.0
  %1752 = vmatprep.subr.mxu0 0.0
  %1753 = vmatpush1.msra.mxu0 0.0
  %1754 = vmatprep.subr.mxu0 0.0
  %1755 = vmatpush1.msra.mxu0 0.0
  %1756 = vmatprep.subr.mxu0 0.0
  %1757 = vmatpush1.msra.mxu0 0.0
  %1758 = vmatprep.subr.mxu0 0.0
  %1759 = vmatpush1.msra.mxu0 0.0
  %1760 = vmatprep.subr.mxu0 0.0
  %1761 = vmatpush1.msra.mxu0 0.0
  %1762 = vmatprep.subr.mxu0 0.0
  %1763 = vmatpush1.msra.mxu0 0.0
  %1764 = vmatprep.subr.mxu0 0.0
  %1765 = vmatpush1.msra.mxu0 0.0
  %1766 = vmatprep.subr.mxu0 0.0
  %1767 = vmatpush1.msra.mxu0 0.0
  %1768 = vmatprep.mubr.f32.mxu0 0.0
  %1769 = vmatmul.mubr.f32.gmra.mrb[0].mxu0 %v1702
  %v1770 = vpop.f32.mrb[0].mxu0
  %v1771 = vadd.f32 0.0, %v1770
  %v1772 = vpop.f32.mrb[0].mxu0
  %1773 = vdwg.mxu0
  %v1774 = vadd.f32 %v1239, %v1771
  %v1775 = vxor.u32 %v1774, 2147483648
  %v1776 = vmul.f32 %v1775, 1.442695
  %v1777 = vpow.pop %v1776
  %v1778 = vadd.f32 %v1777, 1.0
  %v1779 = vrcp.pop %v1778
  %v1780 = vmul.f32 1.0, %v1779
  %v1781 = vadd.f32 %v1771, %v1347
  %1783 = vrot.lane.b32.xlu0 %v1781, 64
  %v1784 = vpop.permute.xlu0 %1783
  %v1786 = vmul.f32 %v1780, %v1784
  %1788 = vrot.lane.b32.xlu0 %v1786, 64
  %v1789 = vpop.permute.xlu0 %1788
  %v1791 = vadd.f32 %v1239, %v1789
  %v1792 = vtanh.pop %v1791
  %v1793 = vsub.f32 1.0, %v1780
  %1795 = vrot.lane.b32.xlu0 %v1792, 96
  %v1796 = vpop.permute.xlu0 %1795
  %v1798 = vmul.f32 %v1793, %v1796
  %v1799 = vmul.f32 %v1780, %v1692
  %v1800 = vadd.f32 %v1798, %v1799
  %v1801 = vsel %vm755, %v1800, %v1692
  %v1802 = vsel %vm755, %v1800, 0.0
  %1804 = vrot.lane.b32.xlu0 %v1802, 96
  %v1805 = vpop.permute.xlu0 %1804
  %1807 = vst.msk [vmem:[#allocation2 + $0x20] sm:$0xff] %vm51, %v1805
  %1809 = vrot.lane.b32.xlu0 %v1801, 96
  %v1810 = vpop.permute.xlu0 %1809
  %v1811 = vsel %vm51, %v1810, 0
  %1813 = vmatprep.subr.mxu0 0.0
  %1814 = vmatpush1.msra.mxu0 %v1258
  %1815 = vmatprep.subr.mxu0 0.0
  %1816 = vmatpush1.msra.mxu0 %v1259
  %1817 = vmatprep.subr.mxu0 0.0
  %1818 = vmatpush1.msra.mxu0 %v1260
  %1819 = vmatprep.subr.mxu0 0.0
  %1820 = vmatpush1.msra.mxu0 %v1261
  %1821 = vmatprep.subr.mxu0 0.0
  %1822 = vmatpush1.msra.mxu0 0.0
  %1823 = vmatprep.subr.mxu0 0.0
  %1824 = vmatpush1.msra.mxu0 0.0
  %1825 = vmatprep.subr.mxu0 0.0
  %1826 = vmatpush1.msra.mxu0 0.0
  %1827 = vmatprep.subr.mxu0 0.0
  %1828 = vmatpush1.msra.mxu0 0.0
  %1829 = vmatprep.subr.mxu0 0.0
  %1830 = vmatpush1.msra.mxu0 0.0
  %1831 = vmatprep.subr.mxu0 0.0
  %1832 = vmatpush1.msra.mxu0 0.0
  %1833 = vmatprep.subr.mxu0 0.0
  %1834 = vmatpush1.msra.mxu0 0.0
  %1835 = vmatprep.subr.mxu0 0.0
  %1836 = vmatpush1.msra.mxu0 0.0
  %1837 = vmatprep.subr.mxu0 0.0
  %1838 = vmatpush1.msra.mxu0 0.0
  %1839 = vmatprep.subr.mxu0 0.0
  %1840 = vmatpush1.msra.mxu0 0.0
  %1841 = vmatprep.subr.mxu0 0.0
  %1842 = vmatpush1.msra.mxu0 0.0
  %1843 = vmatprep.subr.mxu0 0.0
  %1844 = vmatpush1.msra.mxu0 0.0
  %1845 = vmatprep.subr.mxu0 0.0
  %1846 = vmatpush1.msra.mxu0 0.0
  %1847 = vmatprep.subr.mxu0 0.0
  %1848 = vmatpush1.msra.mxu0 0.0
  %1849 = vmatprep.subr.mxu0 0.0
  %1850 = vmatpush1.msra.mxu0 0.0
  %1851 = vmatprep.subr.mxu0 0.0
  %1852 = vmatpush1.msra.mxu0 0.0
  %1853 = vmatprep.subr.mxu0 0.0
  %1854 = vmatpush1.msra.mxu0 0.0
  %1855 = vmatprep.subr.mxu0 0.0
  %1856 = vmatpush1.msra.mxu0 0.0
  %1857 = vmatprep.subr.mxu0 0.0
  %1858 = vmatpush1.msra.mxu0 0.0
  %1859 = vmatprep.subr.mxu0 0.0
  %1860 = vmatpush1.msra.mxu0 0.0
  %1861 = vmatprep.subr.mxu0 0.0
  %1862 = vmatpush1.msra.mxu0 0.0
  %1863 = vmatprep.subr.mxu0 0.0
  %1864 = vmatpush1.msra.mxu0 0.0
  %1865 = vmatprep.subr.mxu0 0.0
  %1866 = vmatpush1.msra.mxu0 0.0
  %1867 = vmatprep.subr.mxu0 0.0
  %1868 = vmatpush1.msra.mxu0 0.0
  %1869 = vmatprep.subr.mxu0 0.0
  %1870 = vmatpush1.msra.mxu0 0.0
  %1871 = vmatprep.subr.mxu0 0.0
  %1872 = vmatpush1.msra.mxu0 0.0
  %1873 = vmatprep.subr.mxu0 0.0
  %1874 = vmatpush1.msra.mxu0 0.0
  %1875 = vmatprep.subr.mxu0 0.0
  %1876 = vmatpush1.msra.mxu0 0.0
  %1877 = vmatprep.mubr.f32.mxu0 0.0
  %1878 = vmatmul.mubr.f32.gmra.mrb[0].mxu0 %v1811
  %v1879 = vpop.f32.mrb[0].mxu0
  %v1880 = vadd.f32 0.0, %v1879
  %v1881 = vpop.f32.mrb[0].mxu0
  %1882 = vdwg.mxu0
  %v1883 = vadd.f32 %v1244, %v1880
  %v1884 = vxor.u32 %v1883, 2147483648
  %v1885 = vmul.f32 %v1884, 1.442695
  %v1886 = vpow.pop %v1885
  %v1887 = vadd.f32 %v1886, 1.0
  %v1888 = vrcp.pop %v1887
  %v1889 = vmul.f32 1.0, %v1888
  %v1890 = vadd.f32 %v1880, %v1347
  %1892 = vrot.lane.b32.xlu0 %v1890, 64
  %v1893 = vpop.permute.xlu0 %1892
  %v1895 = vmul.f32 %v1889, %v1893
  %1897 = vrot.lane.b32.xlu0 %v1895, 64
  %v1898 = vpop.permute.xlu0 %1897
  %v1900 = vadd.f32 %v1244, %v1898
  %v1901 = vtanh.pop %v1900
  %v1902 = vsub.f32 1.0, %v1889
  %1904 = vrot.lane.b32.xlu0 %v1901, 96
  %v1905 = vpop.permute.xlu0 %1904
  %v1907 = vmul.f32 %v1902, %v1905
  %v1908 = vmul.f32 %v1889, %v1801
  %v1909 = vadd.f32 %v1907, %v1908
  %v1910 = vsel %vm870, %v1909, %v1801
  %v1911 = vsel %vm870, %v1909, 0.0
  %1913 = vrot.lane.b32.xlu0 %v1911, 96
  %v1914 = vpop.permute.xlu0 %1913
  %1916 = vst.msk [vmem:[#allocation2 + $0x28] sm:$0xff] %vm51, %v1914
  %1918 = vrot.lane.b32.xlu0 %v1910, 96
  %v1919 = vpop.permute.xlu0 %1918
  %v1920 = vsel %vm51, %v1919, 0
  %1922 = vmatprep.subr.mxu0 0.0
  %1923 = vmatpush1.msra.mxu0 %v1258
  %1924 = vmatprep.subr.mxu0 0.0
  %1925 = vmatpush1.msra.mxu0 %v1259
  %1926 = vmatprep.subr.mxu0 0.0
  %1927 = vmatpush1.msra.mxu0 %v1260
  %1928 = vmatprep.subr.mxu0 0.0
  %1929 = vmatpush1.msra.mxu0 %v1261
  %1930 = vmatprep.subr.mxu0 0.0
  %1931 = vmatpush1.msra.mxu0 0.0
  %1932 = vmatprep.subr.mxu0 0.0
  %1933 = vmatpush1.msra.mxu0 0.0
  %1934 = vmatprep.subr.mxu0 0.0
  %1935 = vmatpush1.msra.mxu0 0.0
  %1936 = vmatprep.subr.mxu0 0.0
  %1937 = vmatpush1.msra.mxu0 0.0
  %1938 = vmatprep.subr.mxu0 0.0
  %1939 = vmatpush1.msra.mxu0 0.0
  %1940 = vmatprep.subr.mxu0 0.0
  %1941 = vmatpush1.msra.mxu0 0.0
  %1942 = vmatprep.subr.mxu0 0.0
  %1943 = vmatpush1.msra.mxu0 0.0
  %1944 = vmatprep.subr.mxu0 0.0
  %1945 = vmatpush1.msra.mxu0 0.0
  %1946 = vmatprep.subr.mxu0 0.0
  %1947 = vmatpush1.msra.mxu0 0.0
  %1948 = vmatprep.subr.mxu0 0.0
  %1949 = vmatpush1.msra.mxu0 0.0
  %1950 = vmatprep.subr.mxu0 0.0
  %1951 = vmatpush1.msra.mxu0 0.0
  %1952 = vmatprep.subr.mxu0 0.0
  %1953 = vmatpush1.msra.mxu0 0.0
  %1954 = vmatprep.subr.mxu0 0.0
  %1955 = vmatpush1.msra.mxu0 0.0
  %1956 = vmatprep.subr.mxu0 0.0
  %1957 = vmatpush1.msra.mxu0 0.0
  %1958 = vmatprep.subr.mxu0 0.0
  %1959 = vmatpush1.msra.mxu0 0.0
  %1960 = vmatprep.subr.mxu0 0.0
  %1961 = vmatpush1.msra.mxu0 0.0
  %1962 = vmatprep.subr.mxu0 0.0
  %1963 = vmatpush1.msra.mxu0 0.0
  %1964 = vmatprep.subr.mxu0 0.0
  %1965 = vmatpush1.msra.mxu0 0.0
  %1966 = vmatprep.subr.mxu0 0.0
  %1967 = vmatpush1.msra.mxu0 0.0
  %1968 = vmatprep.subr.mxu0 0.0
  %1969 = vmatpush1.msra.mxu0 0.0
  %1970 = vmatprep.subr.mxu0 0.0
  %1971 = vmatpush1.msra.mxu0 0.0
  %1972 = vmatprep.subr.mxu0 0.0
  %1973 = vmatpush1.msra.mxu0 0.0
  %1974 = vmatprep.subr.mxu0 0.0
  %1975 = vmatpush1.msra.mxu0 0.0
  %1976 = vmatprep.subr.mxu0 0.0
  %1977 = vmatpush1.msra.mxu0 0.0
  %1978 = vmatprep.subr.mxu0 0.0
  %1979 = vmatpush1.msra.mxu0 0.0
  %1980 = vmatprep.subr.mxu0 0.0
  %1981 = vmatpush1.msra.mxu0 0.0
  %1982 = vmatprep.subr.mxu0 0.0
  %1983 = vmatpush1.msra.mxu0 0.0
  %1984 = vmatprep.subr.mxu0 0.0
  %1985 = vmatpush1.msra.mxu0 0.0
  %1986 = vmatprep.mubr.f32.mxu0 0.0
  %1987 = vmatmul.mubr.f32.gmra.mrb[0].mxu0 %v1920
  %v1988 = vpop.f32.mrb[0].mxu0
  %v1989 = vadd.f32 0.0, %v1988
  %v1990 = vpop.f32.mrb[0].mxu0
  %1991 = vdwg.mxu0
  %v1992 = vadd.f32 %v1249, %v1989
  %v1993 = vxor.u32 %v1992, 2147483648
  %v1994 = vmul.f32 %v1993, 1.442695
  %v1995 = vpow.pop %v1994
  %v1996 = vadd.f32 %v1995, 1.0
  %v1997 = vrcp.pop %v1996
  %v1998 = vmul.f32 1.0, %v1997
  %v1999 = vadd.f32 %v1989, %v1347
  %2001 = vrot.lane.b32.xlu0 %v1999, 64
  %v2002 = vpop.permute.xlu0 %2001
  %v2004 = vmul.f32 %v1998, %v2002
  %2006 = vrot.lane.b32.xlu0 %v2004, 64
  %v2007 = vpop.permute.xlu0 %2006
  %v2009 = vadd.f32 %v1249, %v2007
  %v2010 = vtanh.pop %v2009
  %v2011 = vsub.f32 1.0, %v1998
  %2013 = vrot.lane.b32.xlu0 %v2010, 96
  %v2014 = vpop.permute.xlu0 %2013
  %v2016 = vmul.f32 %v2011, %v2014
  %v2017 = vmul.f32 %v1998, %v1910
  %v2018 = vadd.f32 %v2016, %v2017
  %v2019 = vsel %vm985, %v2018, %v1910
  %v2020 = vsel %vm985, %v2018, 0.0
  %2022 = vrot.lane.b32.xlu0 %v2020, 96
  %v2023 = vpop.permute.xlu0 %2022
  %2025 = vst.msk [vmem:[#allocation2 + $0x30] sm:$0xff] %vm51, %v2023
  %2027 = vrot.lane.b32.xlu0 %v2019, 96
  %v2028 = vpop.permute.xlu0 %2027
  %v2029 = vsel %vm51, %v2028, 0
  %2031 = vmatprep.subr.mxu0 0.0
  %2032 = vmatpush1.msra.mxu0 %v1258
  %2033 = vmatprep.subr.mxu0 0.0
  %2034 = vmatpush1.msra.mxu0 %v1259
  %2035 = vmatprep.subr.mxu0 0.0
  %2036 = vmatpush1.msra.mxu0 %v1260
  %2037 = vmatprep.subr.mxu0 0.0
  %2038 = vmatpush1.msra.mxu0 %v1261
  %2039 = vmatprep.subr.mxu0 0.0
  %2040 = vmatpush1.msra.mxu0 0.0
  %2041 = vmatprep.subr.mxu0 0.0
  %2042 = vmatpush1.msra.mxu0 0.0
  %2043 = vmatprep.subr.mxu0 0.0
  %2044 = vmatpush1.msra.mxu0 0.0
  %2045 = vmatprep.subr.mxu0 0.0
  %2046 = vmatpush1.msra.mxu0 0.0
  %2047 = vmatprep.subr.mxu0 0.0
  %2048 = vmatpush1.msra.mxu0 0.0
  %2049 = vmatprep.subr.mxu0 0.0
  %2050 = vmatpush1.msra.mxu0 0.0
  %2051 = vmatprep.subr.mxu0 0.0
  %2052 = vmatpush1.msra.mxu0 0.0
  %2053 = vmatprep.subr.mxu0 0.0
  %2054 = vmatpush1.msra.mxu0 0.0
  %2055 = vmatprep.subr.mxu0 0.0
  %2056 = vmatpush1.msra.mxu0 0.0
  %2057 = vmatprep.subr.mxu0 0.0
  %2058 = vmatpush1.msra.mxu0 0.0
  %2059 = vmatprep.subr.mxu0 0.0
  %2060 = vmatpush1.msra.mxu0 0.0
  %2061 = vmatprep.subr.mxu0 0.0
  %2062 = vmatpush1.msra.mxu0 0.0
  %2063 = vmatprep.subr.mxu0 0.0
  %2064 = vmatpush1.msra.mxu0 0.0
  %2065 = vmatprep.subr.mxu0 0.0
  %2066 = vmatpush1.msra.mxu0 0.0
  %2067 = vmatprep.subr.mxu0 0.0
  %2068 = vmatpush1.msra.mxu0 0.0
  %2069 = vmatprep.subr.mxu0 0.0
  %2070 = vmatpush1.msra.mxu0 0.0
  %2071 = vmatprep.subr.mxu0 0.0
  %2072 = vmatpush1.msra.mxu0 0.0
  %2073 = vmatprep.subr.mxu0 0.0
  %2074 = vmatpush1.msra.mxu0 0.0
  %2075 = vmatprep.subr.mxu0 0.0
  %2076 = vmatpush1.msra.mxu0 0.0
  %2077 = vmatprep.subr.mxu0 0.0
  %2078 = vmatpush1.msra.mxu0 0.0
  %2079 = vmatprep.subr.mxu0 0.0
  %2080 = vmatpush1.msra.mxu0 0.0
  %2081 = vmatprep.subr.mxu0 0.0
  %2082 = vmatpush1.msra.mxu0 0.0
  %2083 = vmatprep.subr.mxu0 0.0
  %2084 = vmatpush1.msra.mxu0 0.0
  %2085 = vmatprep.subr.mxu0 0.0
  %2086 = vmatpush1.msra.mxu0 0.0
  %2087 = vmatprep.subr.mxu0 0.0
  %2088 = vmatpush1.msra.mxu0 0.0
  %2089 = vmatprep.subr.mxu0 0.0
  %2090 = vmatpush1.msra.mxu0 0.0
  %2091 = vmatprep.subr.mxu0 0.0
  %2092 = vmatpush1.msra.mxu0 0.0
  %2093 = vmatprep.subr.mxu0 0.0
  %2094 = vmatpush1.msra.mxu0 0.0
  %2095 = vmatprep.mubr.f32.mxu0 0.0
  %2096 = vmatmul.mubr.f32.gmra.mrb[0].mxu0 %v2029
  %v2097 = vpop.f32.mrb[0].mxu0
  %v2098 = vadd.f32 0.0, %v2097
  %v2099 = vpop.f32.mrb[0].mxu0
  %2100 = vdwg.mxu0
  %v2101 = vadd.f32 %v1254, %v2098
  %v2102 = vxor.u32 %v2101, 2147483648
  %v2103 = vmul.f32 %v2102, 1.442695
  %v2104 = vpow.pop %v2103
  %v2105 = vadd.f32 %v2104, 1.0
  %v2106 = vrcp.pop %v2105
  %v2107 = vmul.f32 1.0, %v2106
  %v2108 = vadd.f32 %v2098, %v1347
  %2110 = vrot.lane.b32.xlu0 %v2108, 64
  %v2111 = vpop.permute.xlu0 %2110
  %v2113 = vmul.f32 %v2107, %v2111
  %2115 = vrot.lane.b32.xlu0 %v2113, 64
  %v2116 = vpop.permute.xlu0 %2115
  %v2118 = vadd.f32 %v1254, %v2116
  %v2119 = vtanh.pop %v2118
  %v2120 = vsub.f32 1.0, %v2107
  %2122 = vrot.lane.b32.xlu0 %v2119, 96
  %v2123 = vpop.permute.xlu0 %2122
  %v2125 = vmul.f32 %v2120, %v2123
  %v2126 = vmul.f32 %v2107, %v2019
  %v2127 = vadd.f32 %v2125, %v2126
  %v2128 = vsel %vm1100, %v2127, 0.0
  %2130 = vrot.lane.b32.xlu0 %v2128, 96
  %v2131 = vpop.permute.xlu0 %2130
  %2133 = vst.msk [vmem:[#allocation2 + $0x38] sm:$0xff] %vm51, %v2131
  %v2134 = vld [vmem:[#allocation2] sm:$0xff]
  %v2135 = vld [vmem:[#allocation2 + $0x8] sm:$0xff]
  %v2136 = vld [vmem:[#allocation2 + $0x10] sm:$0xff]
  %v2137 = vld [vmem:[#allocation2 + $0x18] sm:$0xff]
  %v2138 = vld [vmem:[#allocation2 + $0x20] sm:$0xff]
  %v2139 = vld [vmem:[#allocation2 + $0x28] sm:$0xff]
  %v2140 = vld [vmem:[#allocation2 + $0x30] sm:$0xff]
  %v2141 = vld [vmem:[#allocation2 + $0x38] sm:$0xff]
  %v2142 = vld [vmem:[%s6] sm:$0xff]
  %v2143 = vld [vmem:[%s6 + $0x8] sm:$0xff]
  %v2144 = vld [vmem:[%s6 + $0x10] sm:$0xff]
  %v2145 = vld [vmem:[%s6 + $0x18] sm:$0xff]
  %v2146 = vld [vmem:[#allocation3] sm:$0x1]
  %v2148 = vlaneseq
  %v2149 = vshrl.u32 %v2148, 7
  %v2150 = vsub.s32 0, %v2149
  %v2151 = vrot.slane %v2146, %v2150
  %v2154 = vsel %vm51, %v2134, 0
  %v2157 = vsel %vm51, %v2135, 0
  %v2160 = vsel %vm51, %v2136, 0
  %v2163 = vsel %vm51, %v2137, 0
  %v2166 = vsel %vm51, %v2138, 0
  %v2169 = vsel %vm51, %v2139, 0
  %v2172 = vsel %vm51, %v2140, 0
  %v2175 = vsel %vm51, %v2141, 0
  %2177 = vmatprep.subr.mxu0 0.0
  %2178 = vmatpush1.msra.mxu0 %v2142
  %2179 = vmatprep.subr.mxu0 0.0
  %2180 = vmatpush1.msra.mxu0 %v2143
  %2181 = vmatprep.subr.mxu0 0.0
  %2182 = vmatpush1.msra.mxu0 %v2144
  %2183 = vmatprep.subr.mxu0 0.0
  %2184 = vmatpush1.msra.mxu0 %v2145
  %2185 = vmatprep.subr.mxu0 0.0
  %2186 = vmatpush1.msra.mxu0 0.0
  %2187 = vmatprep.subr.mxu0 0.0
  %2188 = vmatpush1.msra.mxu0 0.0
  %2189 = vmatprep.subr.mxu0 0.0
  %2190 = vmatpush1.msra.mxu0 0.0
  %2191 = vmatprep.subr.mxu0 0.0
  %2192 = vmatpush1.msra.mxu0 0.0
  %2193 = vmatprep.subr.mxu0 0.0
  %2194 = vmatpush1.msra.mxu0 0.0
  %2195 = vmatprep.subr.mxu0 0.0
  %2196 = vmatpush1.msra.mxu0 0.0
  %2197 = vmatprep.subr.mxu0 0.0
  %2198 = vmatpush1.msra.mxu0 0.0
  %2199 = vmatprep.subr.mxu0 0.0
  %2200 = vmatpush1.msra.mxu0 0.0
  %2201 = vmatprep.subr.mxu0 0.0
  %2202 = vmatpush1.msra.mxu0 0.0
  %2203 = vmatprep.subr.mxu0 0.0
  %2204 = vmatpush1.msra.mxu0 0.0
  %2205 = vmatprep.subr.mxu0 0.0
  %2206 = vmatpush1.msra.mxu0 0.0
  %2207 = vmatprep.subr.mxu0 0.0
  %2208 = vmatpush1.msra.mxu0 0.0
  %2209 = vmatprep.subr.mxu0 0.0
  %2210 = vmatpush1.msra.mxu0 0.0
  %2211 = vmatprep.subr.mxu0 0.0
  %2212 = vmatpush1.msra.mxu0 0.0
  %2213 = vmatprep.subr.mxu0 0.0
  %2214 = vmatpush1.msra.mxu0 0.0
  %2215 = vmatprep.subr.mxu0 0.0
  %2216 = vmatpush1.msra.mxu0 0.0
  %2217 = vmatprep.subr.mxu0 0.0
  %2218 = vmatpush1.msra.mxu0 0.0
  %2219 = vmatprep.subr.mxu0 0.0
  %2220 = vmatpush1.msra.mxu0 0.0
  %2221 = vmatprep.subr.mxu0 0.0
  %2222 = vmatpush1.msra.mxu0 0.0
  %2223 = vmatprep.subr.mxu0 0.0
  %2224 = vmatpush1.msra.mxu0 0.0
  %2225 = vmatprep.subr.mxu0 0.0
  %2226 = vmatpush1.msra.mxu0 0.0
  %2227 = vmatprep.subr.mxu0 0.0
  %2228 = vmatpush1.msra.mxu0 0.0
  %2229 = vmatprep.subr.mxu0 0.0
  %2230 = vmatpush1.msra.mxu0 0.0
  %2231 = vmatprep.subr.mxu0 0.0
  %2232 = vmatpush1.msra.mxu0 0.0
  %2233 = vmatprep.subr.mxu0 0.0
  %2234 = vmatpush1.msra.mxu0 0.0
  %2235 = vmatprep.subr.mxu0 0.0
  %2236 = vmatpush1.msra.mxu0 0.0
  %2237 = vmatprep.subr.mxu0 0.0
  %2238 = vmatpush1.msra.mxu0 0.0
  %2239 = vmatprep.subr.mxu0 0.0
  %2240 = vmatpush1.msra.mxu0 0.0
  %2241 = vmatprep.mubr.f32.mxu0 0.0
  %2242 = vmatmul.mubr.f32.gmra.mrb[0].mxu0 %v2154
  %v2243 = vpop.f32.mrb[0].mxu0
  %v2244 = vadd.f32 %v2151, %v2243
  %v2245 = vpop.f32.mrb[0].mxu0
  %2246 = vmatprep.mubr.f32.mxu0 0.0
  %2247 = vmatmul.mubr.f32.gmra.mrb[0].mxu0 %v2157
  %v2248 = vpop.f32.mrb[0].mxu0
  %v2249 = vadd.f32 %v2151, %v2248
  %v2250 = vpop.f32.mrb[0].mxu0
  %2251 = vmatprep.mubr.f32.mxu0 0.0
  %2252 = vmatmul.mubr.f32.gmra.mrb[0].mxu0 %v2160
  %v2253 = vpop.f32.mrb[0].mxu0
  %v2254 = vadd.f32 %v2151, %v2253
  %v2255 = vpop.f32.mrb[0].mxu0
  %2256 = vmatprep.mubr.f32.mxu0 0.0
  %2257 = vmatmul.mubr.f32.gmra.mrb[0].mxu0 %v2163
  %v2258 = vpop.f32.mrb[0].mxu0
  %v2259 = vadd.f32 %v2151, %v2258
  %v2260 = vpop.f32.mrb[0].mxu0
  %2261 = vmatprep.mubr.f32.mxu0 0.0
  %2262 = vmatmul.mubr.f32.gmra.mrb[0].mxu0 %v2166
  %v2263 = vpop.f32.mrb[0].mxu0
  %v2264 = vadd.f32 %v2151, %v2263
  %v2265 = vpop.f32.mrb[0].mxu0
  %2266 = vmatprep.mubr.f32.mxu0 0.0
  %2267 = vmatmul.mubr.f32.gmra.mrb[0].mxu0 %v2169
  %v2268 = vpop.f32.mrb[0].mxu0
  %v2269 = vadd.f32 %v2151, %v2268
  %v2270 = vpop.f32.mrb[0].mxu0
  %2271 = vmatprep.mubr.f32.mxu0 0.0
  %2272 = vmatmul.mubr.f32.gmra.mrb[0].mxu0 %v2172
  %v2273 = vpop.f32.mrb[0].mxu0
  %v2274 = vadd.f32 %v2151, %v2273
  %v2275 = vpop.f32.mrb[0].mxu0
  %2276 = vmatprep.mubr.f32.mxu0 0.0
  %2277 = vmatmul.mubr.f32.gmra.mrb[0].mxu0 %v2175
  %v2278 = vpop.f32.mrb[0].mxu0
  %v2279 = vadd.f32 %v2151, %v2278
  %v2280 = vpop.f32.mrb[0].mxu0
  %2281 = vdwg.mxu0
  %vm2282 = vcmask 7168
  %2283 = vst.msk [vmem:[%s8] sm:$0xff] %vm2282, %v2244
  %2284 = vst.msk [vmem:[%s8 + $0x8] sm:$0xff] %vm2282, %v2249
  %2285 = vst.msk [vmem:[%s8 + $0x10] sm:$0xff] %vm2282, %v2254
  %2286 = vst.msk [vmem:[%s8 + $0x18] sm:$0xff] %vm2282, %v2259
  %2287 = vst.msk [vmem:[%s8 + $0x20] sm:$0xff] %vm2282, %v2264
  %2288 = vst.msk [vmem:[%s8 + $0x28] sm:$0xff] %vm2282, %v2269
  %2289 = vst.msk [vmem:[%s8 + $0x30] sm:$0xff] %vm2282, %v2274
  %2290 = vst.msk [vmem:[%s8 + $0x38] sm:$0xff] %vm2282, %v2279
  // Predicated region
  $region34: #{tpu_custom_call.1} parent=0 // pred_check
    _
  $region35: #{tpu_custom_call.1} parent=0 // pred_check_branch
    %2292 = sbr.rel (0) target = $region37
  $region36: #{tpu_custom_call.1} parent=0 // pred_region
    _
  $region37: #{tpu_custom_call.1} parent=0 // pred_fallthru
    _
  // Predicated region
  $region38: #{tpu_custom_call.1} parent=0 // pred_check
    _
  $region39: #{tpu_custom_call.1} parent=0 // pred_check_branch
    %2294 = sbr.rel (0) target = $region41
  $region40: #{tpu_custom_call.1} parent=0 // pred_region
    _
  $region41: #{tpu_custom_call.1} parent=0 // pred_fallthru
    _

</llo_original>
